<compile_context>
chip_gen: v7x
topology: tpu7x:2x2x1
jax: 0.10.0
libtpu: 0.0.40
codegen_flags: <defaults>
</compile_context>

<pallas_src>
import functools

import jax
import jax.numpy as jnp
from jax.experimental import pallas as pl
from jax.experimental.pallas import tpu as pltpu


def _attn_kernel(x_ref, wqkv_ref, wp_ref, bp_ref, o_ref, *,
                 bblk, seq, num_heads, head_dim, scale):
    C = num_heads * head_dim

    x = x_ref[...]                                      # (bblk*seq, dim), bf16

    # Fused QKV projection: one lane-dense MXU pass, f32 accumulation.
    qkv = jnp.dot(x, wqkv_ref[...],
                  preferred_element_type=jnp.float32)   # (bblk*seq, 3C) f32

    # Static lane slices of the fused result; scale folded into Q here
    # (cheaper than scaling the (H, N, NK) score tensor).
    q = qkv[:, 0 * C:1 * C] * scale
    k = qkv[:, 1 * C:2 * C]
    v = qkv[:, 2 * C:3 * C]

    # Split the row axis back into (batch, seq); lane axis untouched (no
    # relayout), then cast to bf16 for the attention matmuls.
    qb = q.reshape(bblk, seq, C).astype(jnp.bfloat16)
    kb = k.reshape(bblk, seq, C).astype(jnp.bfloat16)
    vb = v.reshape(bblk, seq, C).astype(jnp.bfloat16)

    # Per-head attention: static lane slices, single-batch-dim einsums
    # (avoids the (N, H, d) transpose that would shred the lane layout).
    head_outs = []
    for h in range(num_heads):
        lo = h * head_dim
        hi = lo + head_dim
        qh = qb[:, :, lo:hi]                            # (bblk, seq, d)
        kh = kb[:, :, lo:hi]
        vh = vb[:, :, lo:hi]

        s = jnp.einsum('bnd,bkd->bnk', qh, kh,
                       preferred_element_type=jnp.float32)   # (bblk, seq, seq)

        m = jnp.max(s, axis=-1, keepdims=True)
        p = jnp.exp(s - m)
        denom = jnp.sum(p, axis=-1, keepdims=True)
        p = p * pl.reciprocal(denom, approx=True)       # EUP vrcp, near-free

        oh = jnp.einsum('bnk,bkd->bnd', p.astype(jnp.bfloat16), vh,
                        preferred_element_type=jnp.float32)  # (bblk, seq, d)
        head_outs.append(oh)

    attn_out = jnp.concatenate(head_outs, axis=-1)      # (bblk, seq, C) f32
    attn_out = attn_out.reshape(bblk * seq, C).astype(jnp.bfloat16)

    # Output projection (with bias), f32 accumulation, lane-dense store.
    y = jnp.dot(attn_out, wp_ref[...],
                preferred_element_type=jnp.float32) + bp_ref[...]
    o_ref[...] = y.astype(o_ref.dtype)


def _pick_bblk(B, N):
    """Largest bblk | B with roughly <= 256 rows per step, honouring the
    (8,128) sublane rule whenever the grid has more than one step."""
    target = max(1, 256 // max(N, 1))
    for bblk in range(min(B, target), 0, -1):
        if B % bblk:
            continue
        if bblk == B or (bblk * N) % 8 == 0:
            return bblk
    return B    # grid of 1; block equals full array -> always legal


def attention(x, wqkv, wproj, bproj, *, num_heads, qk_scale=None):
    """x: (B, N, dim).
    wqkv: (dim, 3*dim)  (pre-transposed vs torch.nn.Linear.weight, qkv_bias=False)
    wproj: (dim, dim), bproj: (dim,).
    Returns (B, N, dim)."""
    B, N, dim = x.shape
    C3 = wqkv.shape[1]
    C = C3 // 3
    head_dim = C // num_heads
    scale = qk_scale if qk_scale is not None else head_dim ** (-0.5)

    bblk = _pick_bblk(B, N)
    rows = bblk * N

    # bf16 in HBM: halves DMA bytes and feeds the native-bf16 MXU.
    xf = x.reshape(B * N, dim).astype(jnp.bfloat16)
    wqkv_b = wqkv.astype(jnp.bfloat16)
    wproj_b = wproj.astype(jnp.bfloat16)
    bproj_b = bproj.reshape(1, C).astype(jnp.float32)

    kernel = functools.partial(
        _attn_kernel, bblk=bblk, seq=N,
        num_heads=num_heads, head_dim=head_dim, scale=scale)

    def run(use_buffered_weights):
        # Weights never change across the grid -> single buffer saves VMEM
        # (mostly relevant for v7x's 64 MiB VMEM at real weight sizes).
        wkw = ({"pipeline_mode": pl.Buffered(1)}
               if use_buffered_weights else {})
        return pl.pallas_call(
            kernel,
            out_shape=jax.ShapeDtypeStruct((B * N, C), x.dtype),
            grid_spec=pltpu.PrefetchScalarGridSpec(
                num_scalar_prefetch=0,
                grid=(B // bblk,),
                in_specs=[
                    pl.BlockSpec((rows, dim), lambda i: (i, 0)),          # x rows
                    pl.BlockSpec((dim, C3), lambda i: (0, 0), **wkw),     # Wqkv
                    pl.BlockSpec((C, C), lambda i: (0, 0), **wkw),        # Wproj
                    pl.BlockSpec((1, C), lambda i: (0, 0), **wkw),        # bproj
                ],
                out_specs=pl.BlockSpec((rows, C), lambda i: (i, 0)),
            ),
            compiler_params=pltpu.CompilerParams(
                dimension_semantics=("parallel",)),
        )(xf, wqkv_b, wproj_b, bproj_b)

    try:
        out = run(True)
    except Exception:
        # Fallback for builds where BlockSpec.pipeline_mode is unavailable.
        out = run(False)

    return out.reshape(B, N, C)


def _reference(x, wqkv, wproj, bproj, *, num_heads, qk_scale=None):
    B, N, dim = x.shape
    C = wqkv.shape[1] // 3
    hd = C // num_heads
    scale = qk_scale if qk_scale is not None else hd ** (-0.5)
    qkv = (x @ wqkv).reshape(B, N, 3, num_heads, hd).transpose(2, 0, 3, 1, 4)
    q, k, v = qkv[0], qkv[1], qkv[2]
    attn = (q @ jnp.swapaxes(k, -2, -1)) * scale
    attn = jax.nn.softmax(attn, axis=-1)
    out = (attn @ v).transpose(0, 2, 1, 3).reshape(B, N, C)
    return out @ wproj + bproj


if __name__ == "__main__":
    # Small shapes consistent with the module's forward: x is (B, N, dim).
    B, N, dim, num_heads = 2, 8, 32, 8

    key = jax.random.PRNGKey(0)
    kx, kw, kp, kb = jax.random.split(key, 4)

    x = jax.random.normal(kx, (B, N, dim), dtype=jnp.float32)

    # Deterministic parameter init (shapes implied by the module's __init__).
    s_in = 1.0 / (dim ** 0.5)
    wqkv = jax.random.uniform(kw, (dim, 3 * dim), jnp.float32, -s_in, s_in)
    wproj = jax.random.uniform(kp, (dim, dim), jnp.float32, -s_in, s_in)
    bproj = jax.random.uniform(kb, (dim,), jnp.float32, -s_in, s_in)

    out = attention(x, wqkv, wproj, bproj, num_heads=num_heads)
    out = jax.block_until_ready(out)

    ref = _reference(x, wqkv, wproj, bproj, num_heads=num_heads)
    assert out.shape == (B, N, dim)
    # bf16 MXU operands + approx reciprocal -> loosened tolerance vs f32 ref.
    assert jnp.allclose(out, ref, atol=3e-2, rtol=3e-2), "mismatch vs reference"

    print("KERNEL_OK")
</pallas_src>

<mosaic_0001>
module attributes {stable_mosaic.version = 11 : i64} {
  func.func @_attn_kernel(%arg0: i32, %arg1: memref<16x32xbf16, #tpu.memory_space<vmem>>, %arg2: memref<32x96xbf16, #tpu.memory_space<vmem>>, %arg3: memref<32x32xbf16, #tpu.memory_space<vmem>>, %arg4: memref<1x32xf32, #tpu.memory_space<vmem>>, %arg5: memref<16x32xf32, #tpu.memory_space<vmem>>) attributes {dimension_semantics = [#tpu.dimension_semantics<parallel>], iteration_bounds = array<i64: 1>, scalar_prefetch = 0 : i64, scratch_operands = 0 : i64, tpu.core_type = #tpu.core_type<tc>, window_params = [{transform_indices = @transform_0, window_bounds = array<i64: 16, 32>}, {pipeline_mode = #tpu.pipeline_mode<synchronous>, transform_indices = @transform_1, window_bounds = array<i64: 32, 96>}, {pipeline_mode = #tpu.pipeline_mode<synchronous>, transform_indices = @transform_2, window_bounds = array<i64: 32, 32>}, {pipeline_mode = #tpu.pipeline_mode<synchronous>, transform_indices = @transform_3, window_bounds = array<i64: 1, 32>}, {transform_indices = @transform_4, window_bounds = array<i64: 16, 32>}]} {
    %c0 = arith.constant 0 : index
    %c0_0 = arith.constant 0 : index
    %0 = vector.load %arg1[%c0, %c0_0] : memref<16x32xbf16, #tpu.memory_space<vmem>>, vector<16x32xbf16>
    %c0_1 = arith.constant 0 : index
    %c0_2 = arith.constant 0 : index
    %1 = vector.load %arg2[%c0_1, %c0_2] : memref<32x96xbf16, #tpu.memory_space<vmem>>, vector<32x96xbf16>
    %cst = arith.constant dense<0.000000e+00> : vector<16x96xf32>
    %2 = tpu.matmul %0, %1, %cst {dimension_numbers = #tpu.dot_dimension_numbers<[1], [0], [0], [1], [0, 0, 1, 1], [], []>} : vector<16x32xbf16>, vector<32x96xbf16>, vector<16x96xf32> -> vector<16x96xf32>
    %3 = vector.extract_strided_slice %2 {offsets = [0, 0], sizes = [16, 32], strides = [1, 1]} : vector<16x96xf32> to vector<16x32xf32>
    %cst_3 = arith.constant 5.000000e-01 : f32
    %4 = vector.broadcast %cst_3 : f32 to vector<16x32xf32>
    %5 = arith.mulf %3, %4 : vector<16x32xf32>
    %6 = vector.extract_strided_slice %2 {offsets = [0, 32], sizes = [16, 32], strides = [1, 1]} : vector<16x96xf32> to vector<16x32xf32>
    %7 = vector.extract_strided_slice %2 {offsets = [0, 64], sizes = [16, 32], strides = [1, 1]} : vector<16x96xf32> to vector<16x32xf32>
    %8 = vector.shape_cast %5 : vector<16x32xf32> to vector<2x8x32xf32>
    %9 = arith.truncf %8 : vector<2x8x32xf32> to vector<2x8x32xbf16>
    %10 = vector.shape_cast %6 : vector<16x32xf32> to vector<2x8x32xf32>
    %11 = arith.truncf %10 : vector<2x8x32xf32> to vector<2x8x32xbf16>
    %12 = vector.shape_cast %7 : vector<16x32xf32> to vector<2x8x32xf32>
    %13 = arith.truncf %12 : vector<2x8x32xf32> to vector<2x8x32xbf16>
    %14 = vector.extract_strided_slice %9 {offsets = [0, 0, 0], sizes = [2, 8, 4], strides = [1, 1, 1]} : vector<2x8x32xbf16> to vector<2x8x4xbf16>
    %15 = vector.extract_strided_slice %11 {offsets = [0, 0, 0], sizes = [2, 8, 4], strides = [1, 1, 1]} : vector<2x8x32xbf16> to vector<2x8x4xbf16>
    %16 = vector.extract_strided_slice %13 {offsets = [0, 0, 0], sizes = [2, 8, 4], strides = [1, 1, 1]} : vector<2x8x32xbf16> to vector<2x8x4xbf16>
    "tpu.trace_start"() <{level = 10 : i32, message = "bnd,bkd->bnk"}> : () -> ()
    %cst_4 = arith.constant dense<0.000000e+00> : vector<2x8x8xf32>
    %17 = tpu.matmul %14, %15, %cst_4 {dimension_numbers = #tpu.dot_dimension_numbers<[2], [2], [1], [1], [0, 0, 0, 1, 1, 1], [0], [0]>} : vector<2x8x4xbf16>, vector<2x8x4xbf16>, vector<2x8x8xf32> -> vector<2x8x8xf32>
    "tpu.trace_stop"() : () -> ()
    %cst_5 = arith.constant dense<0xFF800000> : vector<2x8xf32>
    %18 = vector.multi_reduction <maximumf>, %17, %cst_5 [2] : vector<2x8x8xf32> to vector<2x8xf32>
    %19 = vector.shape_cast %18 : vector<2x8xf32> to vector<2x8x1xf32>
    %20 = vector.broadcast %19 : vector<2x8x1xf32> to vector<2x8x8xf32>
    %21 = arith.subf %17, %20 : vector<2x8x8xf32>
    %22 = math.exp %21 : vector<2x8x8xf32>
    %cst_6 = arith.constant dense<0.000000e+00> : vector<2x8xf32>
    %23 = vector.multi_reduction <add>, %22, %cst_6 [2] : vector<2x8x8xf32> to vector<2x8xf32>
    %24 = vector.shape_cast %23 : vector<2x8xf32> to vector<2x8x1xf32>
    %25 = tpu.reciprocal %24 {approx = true} : vector<2x8x1xf32> -> vector<2x8x1xf32>
    %26 = vector.broadcast %25 : vector<2x8x1xf32> to vector<2x8x8xf32>
    %27 = arith.mulf %22, %26 : vector<2x8x8xf32>
    %28 = arith.truncf %27 : vector<2x8x8xf32> to vector<2x8x8xbf16>
    "tpu.trace_start"() <{level = 10 : i32, message = "bnk,bkd->bnd"}> : () -> ()
    %cst_7 = arith.constant dense<0.000000e+00> : vector<2x8x4xf32>
    %29 = tpu.matmul %28, %16, %cst_7 {dimension_numbers = #tpu.dot_dimension_numbers<[2], [1], [1], [2], [0, 0, 0, 1, 1, 2], [0], [0]>} : vector<2x8x8xbf16>, vector<2x8x4xbf16>, vector<2x8x4xf32> -> vector<2x8x4xf32>
    "tpu.trace_stop"() : () -> ()
    %30 = vector.extract_strided_slice %9 {offsets = [0, 0, 4], sizes = [2, 8, 4], strides = [1, 1, 1]} : vector<2x8x32xbf16> to vector<2x8x4xbf16>
    %31 = vector.extract_strided_slice %11 {offsets = [0, 0, 4], sizes = [2, 8, 4], strides = [1, 1, 1]} : vector<2x8x32xbf16> to vector<2x8x4xbf16>
    %32 = vector.extract_strided_slice %13 {offsets = [0, 0, 4], sizes = [2, 8, 4], strides = [1, 1, 1]} : vector<2x8x32xbf16> to vector<2x8x4xbf16>
    "tpu.trace_start"() <{level = 10 : i32, message = "bnd,bkd->bnk"}> : () -> ()
    %cst_8 = arith.constant dense<0.000000e+00> : vector<2x8x8xf32>
    %33 = tpu.matmul %30, %31, %cst_8 {dimension_numbers = #tpu.dot_dimension_numbers<[2], [2], [1], [1], [0, 0, 0, 1, 1, 1], [0], [0]>} : vector<2x8x4xbf16>, vector<2x8x4xbf16>, vector<2x8x8xf32> -> vector<2x8x8xf32>
    "tpu.trace_stop"() : () -> ()
    %cst_9 = arith.constant dense<0xFF800000> : vector<2x8xf32>
    %34 = vector.multi_reduction <maximumf>, %33, %cst_9 [2] : vector<2x8x8xf32> to vector<2x8xf32>
    %35 = vector.shape_cast %34 : vector<2x8xf32> to vector<2x8x1xf32>
    %36 = vector.broadcast %35 : vector<2x8x1xf32> to vector<2x8x8xf32>
    %37 = arith.subf %33, %36 : vector<2x8x8xf32>
    %38 = math.exp %37 : vector<2x8x8xf32>
    %cst_10 = arith.constant dense<0.000000e+00> : vector<2x8xf32>
    %39 = vector.multi_reduction <add>, %38, %cst_10 [2] : vector<2x8x8xf32> to vector<2x8xf32>
    %40 = vector.shape_cast %39 : vector<2x8xf32> to vector<2x8x1xf32>
    %41 = tpu.reciprocal %40 {approx = true} : vector<2x8x1xf32> -> vector<2x8x1xf32>
    %42 = vector.broadcast %41 : vector<2x8x1xf32> to vector<2x8x8xf32>
    %43 = arith.mulf %38, %42 : vector<2x8x8xf32>
    %44 = arith.truncf %43 : vector<2x8x8xf32> to vector<2x8x8xbf16>
    "tpu.trace_start"() <{level = 10 : i32, message = "bnk,bkd->bnd"}> : () -> ()
    %cst_11 = arith.constant dense<0.000000e+00> : vector<2x8x4xf32>
    %45 = tpu.matmul %44, %32, %cst_11 {dimension_numbers = #tpu.dot_dimension_numbers<[2], [1], [1], [2], [0, 0, 0, 1, 1, 2], [0], [0]>} : vector<2x8x8xbf16>, vector<2x8x4xbf16>, vector<2x8x4xf32> -> vector<2x8x4xf32>
    "tpu.trace_stop"() : () -> ()
    %46 = vector.extract_strided_slice %9 {offsets = [0, 0, 8], sizes = [2, 8, 4], strides = [1, 1, 1]} : vector<2x8x32xbf16> to vector<2x8x4xbf16>
    %47 = vector.extract_strided_slice %11 {offsets = [0, 0, 8], sizes = [2, 8, 4], strides = [1, 1, 1]} : vector<2x8x32xbf16> to vector<2x8x4xbf16>
    %48 = vector.extract_strided_slice %13 {offsets = [0, 0, 8], sizes = [2, 8, 4], strides = [1, 1, 1]} : vector<2x8x32xbf16> to vector<2x8x4xbf16>
    "tpu.trace_start"() <{level = 10 : i32, message = "bnd,bkd->bnk"}> : () -> ()
    %cst_12 = arith.constant dense<0.000000e+00> : vector<2x8x8xf32>
    %49 = tpu.matmul %46, %47, %cst_12 {dimension_numbers = #tpu.dot_dimension_numbers<[2], [2], [1], [1], [0, 0, 0, 1, 1, 1], [0], [0]>} : vector<2x8x4xbf16>, vector<2x8x4xbf16>, vector<2x8x8xf32> -> vector<2x8x8xf32>
    "tpu.trace_stop"() : () -> ()
    %cst_13 = arith.constant dense<0xFF800000> : vector<2x8xf32>
    %50 = vector.multi_reduction <maximumf>, %49, %cst_13 [2] : vector<2x8x8xf32> to vector<2x8xf32>
    %51 = vector.shape_cast %50 : vector<2x8xf32> to vector<2x8x1xf32>
    %52 = vector.broadcast %51 : vector<2x8x1xf32> to vector<2x8x8xf32>
    %53 = arith.subf %49, %52 : vector<2x8x8xf32>
    %54 = math.exp %53 : vector<2x8x8xf32>
    %cst_14 = arith.constant dense<0.000000e+00> : vector<2x8xf32>
    %55 = vector.multi_reduction <add>, %54, %cst_14 [2] : vector<2x8x8xf32> to vector<2x8xf32>
    %56 = vector.shape_cast %55 : vector<2x8xf32> to vector<2x8x1xf32>
    %57 = tpu.reciprocal %56 {approx = true} : vector<2x8x1xf32> -> vector<2x8x1xf32>
    %58 = vector.broadcast %57 : vector<2x8x1xf32> to vector<2x8x8xf32>
    %59 = arith.mulf %54, %58 : vector<2x8x8xf32>
    %60 = arith.truncf %59 : vector<2x8x8xf32> to vector<2x8x8xbf16>
    "tpu.trace_start"() <{level = 10 : i32, message = "bnk,bkd->bnd"}> : () -> ()
    %cst_15 = arith.constant dense<0.000000e+00> : vector<2x8x4xf32>
    %61 = tpu.matmul %60, %48, %cst_15 {dimension_numbers = #tpu.dot_dimension_numbers<[2], [1], [1], [2], [0, 0, 0, 1, 1, 2], [0], [0]>} : vector<2x8x8xbf16>, vector<2x8x4xbf16>, vector<2x8x4xf32> -> vector<2x8x4xf32>
    "tpu.trace_stop"() : () -> ()
    %62 = vector.extract_strided_slice %9 {offsets = [0, 0, 12], sizes = [2, 8, 4], strides = [1, 1, 1]} : vector<2x8x32xbf16> to vector<2x8x4xbf16>
    %63 = vector.extract_strided_slice %11 {offsets = [0, 0, 12], sizes = [2, 8, 4], strides = [1, 1, 1]} : vector<2x8x32xbf16> to vector<2x8x4xbf16>
    %64 = vector.extract_strided_slice %13 {offsets = [0, 0, 12], sizes = [2, 8, 4], strides = [1, 1, 1]} : vector<2x8x32xbf16> to vector<2x8x4xbf16>
    "tpu.trace_start"() <{level = 10 : i32, message = "bnd,bkd->bnk"}> : () -> ()
    %cst_16 = arith.constant dense<0.000000e+00> : vector<2x8x8xf32>
    %65 = tpu.matmul %62, %63, %cst_16 {dimension_numbers = #tpu.dot_dimension_numbers<[2], [2], [1], [1], [0, 0, 0, 1, 1, 1], [0], [0]>} : vector<2x8x4xbf16>, vector<2x8x4xbf16>, vector<2x8x8xf32> -> vector<2x8x8xf32>
    "tpu.trace_stop"() : () -> ()
    %cst_17 = arith.constant dense<0xFF800000> : vector<2x8xf32>
    %66 = vector.multi_reduction <maximumf>, %65, %cst_17 [2] : vector<2x8x8xf32> to vector<2x8xf32>
    %67 = vector.shape_cast %66 : vector<2x8xf32> to vector<2x8x1xf32>
    %68 = vector.broadcast %67 : vector<2x8x1xf32> to vector<2x8x8xf32>
    %69 = arith.subf %65, %68 : vector<2x8x8xf32>
    %70 = math.exp %69 : vector<2x8x8xf32>
    %cst_18 = arith.constant dense<0.000000e+00> : vector<2x8xf32>
    %71 = vector.multi_reduction <add>, %70, %cst_18 [2] : vector<2x8x8xf32> to vector<2x8xf32>
    %72 = vector.shape_cast %71 : vector<2x8xf32> to vector<2x8x1xf32>
    %73 = tpu.reciprocal %72 {approx = true} : vector<2x8x1xf32> -> vector<2x8x1xf32>
    %74 = vector.broadcast %73 : vector<2x8x1xf32> to vector<2x8x8xf32>
    %75 = arith.mulf %70, %74 : vector<2x8x8xf32>
    %76 = arith.truncf %75 : vector<2x8x8xf32> to vector<2x8x8xbf16>
    "tpu.trace_start"() <{level = 10 : i32, message = "bnk,bkd->bnd"}> : () -> ()
    %cst_19 = arith.constant dense<0.000000e+00> : vector<2x8x4xf32>
    %77 = tpu.matmul %76, %64, %cst_19 {dimension_numbers = #tpu.dot_dimension_numbers<[2], [1], [1], [2], [0, 0, 0, 1, 1, 2], [0], [0]>} : vector<2x8x8xbf16>, vector<2x8x4xbf16>, vector<2x8x4xf32> -> vector<2x8x4xf32>
    "tpu.trace_stop"() : () -> ()
    %78 = vector.extract_strided_slice %9 {offsets = [0, 0, 16], sizes = [2, 8, 4], strides = [1, 1, 1]} : vector<2x8x32xbf16> to vector<2x8x4xbf16>
    %79 = vector.extract_strided_slice %11 {offsets = [0, 0, 16], sizes = [2, 8, 4], strides = [1, 1, 1]} : vector<2x8x32xbf16> to vector<2x8x4xbf16>
    %80 = vector.extract_strided_slice %13 {offsets = [0, 0, 16], sizes = [2, 8, 4], strides = [1, 1, 1]} : vector<2x8x32xbf16> to vector<2x8x4xbf16>
    "tpu.trace_start"() <{level = 10 : i32, message = "bnd,bkd->bnk"}> : () -> ()
    %cst_20 = arith.constant dense<0.000000e+00> : vector<2x8x8xf32>
    %81 = tpu.matmul %78, %79, %cst_20 {dimension_numbers = #tpu.dot_dimension_numbers<[2], [2], [1], [1], [0, 0, 0, 1, 1, 1], [0], [0]>} : vector<2x8x4xbf16>, vector<2x8x4xbf16>, vector<2x8x8xf32> -> vector<2x8x8xf32>
    "tpu.trace_stop"() : () -> ()
    %cst_21 = arith.constant dense<0xFF800000> : vector<2x8xf32>
    %82 = vector.multi_reduction <maximumf>, %81, %cst_21 [2] : vector<2x8x8xf32> to vector<2x8xf32>
    %83 = vector.shape_cast %82 : vector<2x8xf32> to vector<2x8x1xf32>
    %84 = vector.broadcast %83 : vector<2x8x1xf32> to vector<2x8x8xf32>
    %85 = arith.subf %81, %84 : vector<2x8x8xf32>
    %86 = math.exp %85 : vector<2x8x8xf32>
    %cst_22 = arith.constant dense<0.000000e+00> : vector<2x8xf32>
    %87 = vector.multi_reduction <add>, %86, %cst_22 [2] : vector<2x8x8xf32> to vector<2x8xf32>
    %88 = vector.shape_cast %87 : vector<2x8xf32> to vector<2x8x1xf32>
    %89 = tpu.reciprocal %88 {approx = true} : vector<2x8x1xf32> -> vector<2x8x1xf32>
    %90 = vector.broadcast %89 : vector<2x8x1xf32> to vector<2x8x8xf32>
    %91 = arith.mulf %86, %90 : vector<2x8x8xf32>
    %92 = arith.truncf %91 : vector<2x8x8xf32> to vector<2x8x8xbf16>
    "tpu.trace_start"() <{level = 10 : i32, message = "bnk,bkd->bnd"}> : () -> ()
    %cst_23 = arith.constant dense<0.000000e+00> : vector<2x8x4xf32>
    %93 = tpu.matmul %92, %80, %cst_23 {dimension_numbers = #tpu.dot_dimension_numbers<[2], [1], [1], [2], [0, 0, 0, 1, 1, 2], [0], [0]>} : vector<2x8x8xbf16>, vector<2x8x4xbf16>, vector<2x8x4xf32> -> vector<2x8x4xf32>
    "tpu.trace_stop"() : () -> ()
    %94 = vector.extract_strided_slice %9 {offsets = [0, 0, 20], sizes = [2, 8, 4], strides = [1, 1, 1]} : vector<2x8x32xbf16> to vector<2x8x4xbf16>
    %95 = vector.extract_strided_slice %11 {offsets = [0, 0, 20], sizes = [2, 8, 4], strides = [1, 1, 1]} : vector<2x8x32xbf16> to vector<2x8x4xbf16>
    %96 = vector.extract_strided_slice %13 {offsets = [0, 0, 20], sizes = [2, 8, 4], strides = [1, 1, 1]} : vector<2x8x32xbf16> to vector<2x8x4xbf16>
    "tpu.trace_start"() <{level = 10 : i32, message = "bnd,bkd->bnk"}> : () -> ()
    %cst_24 = arith.constant dense<0.000000e+00> : vector<2x8x8xf32>
    %97 = tpu.matmul %94, %95, %cst_24 {dimension_numbers = #tpu.dot_dimension_numbers<[2], [2], [1], [1], [0, 0, 0, 1, 1, 1], [0], [0]>} : vector<2x8x4xbf16>, vector<2x8x4xbf16>, vector<2x8x8xf32> -> vector<2x8x8xf32>
    "tpu.trace_stop"() : () -> ()
    %cst_25 = arith.constant dense<0xFF800000> : vector<2x8xf32>
    %98 = vector.multi_reduction <maximumf>, %97, %cst_25 [2] : vector<2x8x8xf32> to vector<2x8xf32>
    %99 = vector.shape_cast %98 : vector<2x8xf32> to vector<2x8x1xf32>
    %100 = vector.broadcast %99 : vector<2x8x1xf32> to vector<2x8x8xf32>
    %101 = arith.subf %97, %100 : vector<2x8x8xf32>
    %102 = math.exp %101 : vector<2x8x8xf32>
    %cst_26 = arith.constant dense<0.000000e+00> : vector<2x8xf32>
    %103 = vector.multi_reduction <add>, %102, %cst_26 [2] : vector<2x8x8xf32> to vector<2x8xf32>
    %104 = vector.shape_cast %103 : vector<2x8xf32> to vector<2x8x1xf32>
    %105 = tpu.reciprocal %104 {approx = true} : vector<2x8x1xf32> -> vector<2x8x1xf32>
    %106 = vector.broadcast %105 : vector<2x8x1xf32> to vector<2x8x8xf32>
    %107 = arith.mulf %102, %106 : vector<2x8x8xf32>
    %108 = arith.truncf %107 : vector<2x8x8xf32> to vector<2x8x8xbf16>
    "tpu.trace_start"() <{level = 10 : i32, message = "bnk,bkd->bnd"}> : () -> ()
    %cst_27 = arith.constant dense<0.000000e+00> : vector<2x8x4xf32>
    %109 = tpu.matmul %108, %96, %cst_27 {dimension_numbers = #tpu.dot_dimension_numbers<[2], [1], [1], [2], [0, 0, 0, 1, 1, 2], [0], [0]>} : vector<2x8x8xbf16>, vector<2x8x4xbf16>, vector<2x8x4xf32> -> vector<2x8x4xf32>
    "tpu.trace_stop"() : () -> ()
    %110 = vector.extract_strided_slice %9 {offsets = [0, 0, 24], sizes = [2, 8, 4], strides = [1, 1, 1]} : vector<2x8x32xbf16> to vector<2x8x4xbf16>
    %111 = vector.extract_strided_slice %11 {offsets = [0, 0, 24], sizes = [2, 8, 4], strides = [1, 1, 1]} : vector<2x8x32xbf16> to vector<2x8x4xbf16>
    %112 = vector.extract_strided_slice %13 {offsets = [0, 0, 24], sizes = [2, 8, 4], strides = [1, 1, 1]} : vector<2x8x32xbf16> to vector<2x8x4xbf16>
    "tpu.trace_start"() <{level = 10 : i32, message = "bnd,bkd->bnk"}> : () -> ()
    %cst_28 = arith.constant dense<0.000000e+00> : vector<2x8x8xf32>
    %113 = tpu.matmul %110, %111, %cst_28 {dimension_numbers = #tpu.dot_dimension_numbers<[2], [2], [1], [1], [0, 0, 0, 1, 1, 1], [0], [0]>} : vector<2x8x4xbf16>, vector<2x8x4xbf16>, vector<2x8x8xf32> -> vector<2x8x8xf32>
    "tpu.trace_stop"() : () -> ()
    %cst_29 = arith.constant dense<0xFF800000> : vector<2x8xf32>
    %114 = vector.multi_reduction <maximumf>, %113, %cst_29 [2] : vector<2x8x8xf32> to vector<2x8xf32>
    %115 = vector.shape_cast %114 : vector<2x8xf32> to vector<2x8x1xf32>
    %116 = vector.broadcast %115 : vector<2x8x1xf32> to vector<2x8x8xf32>
    %117 = arith.subf %113, %116 : vector<2x8x8xf32>
    %118 = math.exp %117 : vector<2x8x8xf32>
    %cst_30 = arith.constant dense<0.000000e+00> : vector<2x8xf32>
    %119 = vector.multi_reduction <add>, %118, %cst_30 [2] : vector<2x8x8xf32> to vector<2x8xf32>
    %120 = vector.shape_cast %119 : vector<2x8xf32> to vector<2x8x1xf32>
    %121 = tpu.reciprocal %120 {approx = true} : vector<2x8x1xf32> -> vector<2x8x1xf32>
    %122 = vector.broadcast %121 : vector<2x8x1xf32> to vector<2x8x8xf32>
    %123 = arith.mulf %118, %122 : vector<2x8x8xf32>
    %124 = arith.truncf %123 : vector<2x8x8xf32> to vector<2x8x8xbf16>
    "tpu.trace_start"() <{level = 10 : i32, message = "bnk,bkd->bnd"}> : () -> ()
    %cst_31 = arith.constant dense<0.000000e+00> : vector<2x8x4xf32>
    %125 = tpu.matmul %124, %112, %cst_31 {dimension_numbers = #tpu.dot_dimension_numbers<[2], [1], [1], [2], [0, 0, 0, 1, 1, 2], [0], [0]>} : vector<2x8x8xbf16>, vector<2x8x4xbf16>, vector<2x8x4xf32> -> vector<2x8x4xf32>
    "tpu.trace_stop"() : () -> ()
    %126 = vector.extract_strided_slice %9 {offsets = [0, 0, 28], sizes = [2, 8, 4], strides = [1, 1, 1]} : vector<2x8x32xbf16> to vector<2x8x4xbf16>
    %127 = vector.extract_strided_slice %11 {offsets = [0, 0, 28], sizes = [2, 8, 4], strides = [1, 1, 1]} : vector<2x8x32xbf16> to vector<2x8x4xbf16>
    %128 = vector.extract_strided_slice %13 {offsets = [0, 0, 28], sizes = [2, 8, 4], strides = [1, 1, 1]} : vector<2x8x32xbf16> to vector<2x8x4xbf16>
    "tpu.trace_start"() <{level = 10 : i32, message = "bnd,bkd->bnk"}> : () -> ()
    %cst_32 = arith.constant dense<0.000000e+00> : vector<2x8x8xf32>
    %129 = tpu.matmul %126, %127, %cst_32 {dimension_numbers = #tpu.dot_dimension_numbers<[2], [2], [1], [1], [0, 0, 0, 1, 1, 1], [0], [0]>} : vector<2x8x4xbf16>, vector<2x8x4xbf16>, vector<2x8x8xf32> -> vector<2x8x8xf32>
    "tpu.trace_stop"() : () -> ()
    %cst_33 = arith.constant dense<0xFF800000> : vector<2x8xf32>
    %130 = vector.multi_reduction <maximumf>, %129, %cst_33 [2] : vector<2x8x8xf32> to vector<2x8xf32>
    %131 = vector.shape_cast %130 : vector<2x8xf32> to vector<2x8x1xf32>
    %132 = vector.broadcast %131 : vector<2x8x1xf32> to vector<2x8x8xf32>
    %133 = arith.subf %129, %132 : vector<2x8x8xf32>
    %134 = math.exp %133 : vector<2x8x8xf32>
    %cst_34 = arith.constant dense<0.000000e+00> : vector<2x8xf32>
    %135 = vector.multi_reduction <add>, %134, %cst_34 [2] : vector<2x8x8xf32> to vector<2x8xf32>
    %136 = vector.shape_cast %135 : vector<2x8xf32> to vector<2x8x1xf32>
    %137 = tpu.reciprocal %136 {approx = true} : vector<2x8x1xf32> -> vector<2x8x1xf32>
    %138 = vector.broadcast %137 : vector<2x8x1xf32> to vector<2x8x8xf32>
    %139 = arith.mulf %134, %138 : vector<2x8x8xf32>
    %140 = arith.truncf %139 : vector<2x8x8xf32> to vector<2x8x8xbf16>
    "tpu.trace_start"() <{level = 10 : i32, message = "bnk,bkd->bnd"}> : () -> ()
    %cst_35 = arith.constant dense<0.000000e+00> : vector<2x8x4xf32>
    %141 = tpu.matmul %140, %128, %cst_35 {dimension_numbers = #tpu.dot_dimension_numbers<[2], [1], [1], [2], [0, 0, 0, 1, 1, 2], [0], [0]>} : vector<2x8x8xbf16>, vector<2x8x4xbf16>, vector<2x8x4xf32> -> vector<2x8x4xf32>
    "tpu.trace_stop"() : () -> ()
    %142 = tpu.concatenate %29, %45, %61, %77, %93, %109, %125, %141 in 2 : vector<2x8x4xf32>, vector<2x8x4xf32>, vector<2x8x4xf32>, vector<2x8x4xf32>, vector<2x8x4xf32>, vector<2x8x4xf32>, vector<2x8x4xf32>, vector<2x8x4xf32> -> vector<2x8x32xf32>
    %143 = vector.shape_cast %142 : vector<2x8x32xf32> to vector<16x32xf32>
    %144 = arith.truncf %143 : vector<16x32xf32> to vector<16x32xbf16>
    %c0_36 = arith.constant 0 : index
    %c0_37 = arith.constant 0 : index
    %145 = vector.load %arg3[%c0_36, %c0_37] : memref<32x32xbf16, #tpu.memory_space<vmem>>, vector<32x32xbf16>
    %cst_38 = arith.constant dense<0.000000e+00> : vector<16x32xf32>
    %146 = tpu.matmul %144, %145, %cst_38 {dimension_numbers = #tpu.dot_dimension_numbers<[1], [0], [0], [1], [0, 0, 1, 1], [], []>} : vector<16x32xbf16>, vector<32x32xbf16>, vector<16x32xf32> -> vector<16x32xf32>
    %c0_39 = arith.constant 0 : index
    %c0_40 = arith.constant 0 : index
    %147 = vector.load %arg4[%c0_39, %c0_40] : memref<1x32xf32, #tpu.memory_space<vmem>>, vector<1x32xf32>
    %148 = vector.broadcast %147 : vector<1x32xf32> to vector<16x32xf32>
    %149 = arith.addf %146, %148 : vector<16x32xf32>
    %c0_41 = arith.constant 0 : index
    %c0_42 = arith.constant 0 : index
    %150 = vector.load %arg5[%c0_41, %c0_42] : memref<16x32xf32, #tpu.memory_space<vmem>>, vector<16x32xf32>
    tpu.vector_store %arg5[%c0_41, %c0_42], %149 {strides = array<i32>} : memref<16x32xf32, #tpu.memory_space<vmem>>, vector<16x32xf32>,
    return
  }
  func.func @transform_0(%arg0: i32) -> (i32, i32) {
    %c0_i32 = arith.constant 0 : i32
    %c0_i32_0 = arith.constant 0 : i32
    return %arg0, %c0_i32 : i32, i32
  }
  func.func @transform_1(%arg0: i32) -> (i32, i32) {
    %c0_i32 = arith.constant 0 : i32
    %c0_i32_0 = arith.constant 0 : i32
    %c0_i32_1 = arith.constant 0 : i32
    return %c0_i32, %c0_i32_0 : i32, i32
  }
  func.func @transform_2(%arg0: i32) -> (i32, i32) {
    %c0_i32 = arith.constant 0 : i32
    %c0_i32_0 = arith.constant 0 : i32
    %c0_i32_1 = arith.constant 0 : i32
    return %c0_i32, %c0_i32_0 : i32, i32
  }
  func.func @transform_3(%arg0: i32) -> (i32, i32) {
    %c0_i32 = arith.constant 0 : i32
    %c0_i32_0 = arith.constant 0 : i32
    %c0_i32_1 = arith.constant 0 : i32
    return %c0_i32, %c0_i32_0 : i32, i32
  }
  func.func @transform_4(%arg0: i32) -> (i32, i32) {
    %c0_i32 = arith.constant 0 : i32
    %c0_i32_0 = arith.constant 0 : i32
    return %arg0, %c0_i32 : i32, i32
  }
}

module attributes {stable_mosaic.version = 11 : i64} {
  func.func @_attn_kernel(%arg0: i32, %arg1: memref<16x32xbf16, #tpu.memory_space<vmem>>, %arg2: memref<32x96xbf16, #tpu.memory_space<vmem>>, %arg3: memref<32x32xbf16, #tpu.memory_space<vmem>>, %arg4: memref<1x32xf32, #tpu.memory_space<vmem>>, %arg5: memref<16x32xf32, #tpu.memory_space<vmem>>) attributes {dimension_semantics = [#tpu.dimension_semantics<parallel>], iteration_bounds = array<i64: 1>, scalar_prefetch = 0 : i64, scratch_operands = 0 : i64, tpu.core_type = #tpu.core_type<tc>, window_params = [{transform_indices = @transform_0, window_bounds = array<i64: 16, 32>}, {pipeline_mode = #tpu.pipeline_mode<synchronous>, transform_indices = @transform_1, window_bounds = array<i64: 32, 96>}, {pipeline_mode = #tpu.pipeline_mode<synchronous>, transform_indices = @transform_2, window_bounds = array<i64: 32, 32>}, {pipeline_mode = #tpu.pipeline_mode<synchronous>, transform_indices = @transform_3, window_bounds = array<i64: 1, 32>}, {transform_indices = @transform_4, window_bounds = array<i64: 16, 32>}]} {
    %c0 = arith.constant 0 : index
    %c0_0 = arith.constant 0 : index
    %0 = vector.load %arg1[%c0, %c0_0] : memref<16x32xbf16, #tpu.memory_space<vmem>>, vector<16x32xbf16>
    %c0_1 = arith.constant 0 : index
    %c0_2 = arith.constant 0 : index
    %1 = vector.load %arg2[%c0_1, %c0_2] : memref<32x96xbf16, #tpu.memory_space<vmem>>, vector<32x96xbf16>
    %cst = arith.constant dense<0.000000e+00> : vector<16x96xf32>
    %2 = tpu.matmul %0, %1, %cst {dimension_numbers = #tpu.dot_dimension_numbers<[1], [0], [0], [1], [0, 0, 1, 1], [], []>} : vector<16x32xbf16>, vector<32x96xbf16>, vector<16x96xf32> -> vector<16x96xf32>
    %3 = vector.extract_strided_slice %2 {offsets = [0, 0], sizes = [16, 32], strides = [1, 1]} : vector<16x96xf32> to vector<16x32xf32>
    %cst_3 = arith.constant 5.000000e-01 : f32
    %4 = vector.broadcast %cst_3 : f32 to vector<16x32xf32>
    %5 = arith.mulf %3, %4 : vector<16x32xf32>
    %6 = vector.extract_strided_slice %2 {offsets = [0, 32], sizes = [16, 32], strides = [1, 1]} : vector<16x96xf32> to vector<16x32xf32>
    %7 = vector.extract_strided_slice %2 {offsets = [0, 64], sizes = [16, 32], strides = [1, 1]} : vector<16x96xf32> to vector<16x32xf32>
    %8 = vector.shape_cast %5 : vector<16x32xf32> to vector<2x8x32xf32>
    %9 = arith.truncf %8 : vector<2x8x32xf32> to vector<2x8x32xbf16>
    %10 = vector.shape_cast %6 : vector<16x32xf32> to vector<2x8x32xf32>
    %11 = arith.truncf %10 : vector<2x8x32xf32> to vector<2x8x32xbf16>
    %12 = vector.shape_cast %7 : vector<16x32xf32> to vector<2x8x32xf32>
    %13 = arith.truncf %12 : vector<2x8x32xf32> to vector<2x8x32xbf16>
    %14 = vector.extract_strided_slice %9 {offsets = [0, 0, 0], sizes = [2, 8, 4], strides = [1, 1, 1]} : vector<2x8x32xbf16> to vector<2x8x4xbf16>
    %15 = vector.extract_strided_slice %11 {offsets = [0, 0, 0], sizes = [2, 8, 4], strides = [1, 1, 1]} : vector<2x8x32xbf16> to vector<2x8x4xbf16>
    %16 = vector.extract_strided_slice %13 {offsets = [0, 0, 0], sizes = [2, 8, 4], strides = [1, 1, 1]} : vector<2x8x32xbf16> to vector<2x8x4xbf16>
    "tpu.trace_start"() <{level = 10 : i32, message = "bnd,bkd->bnk"}> : () -> ()
    %cst_4 = arith.constant dense<0.000000e+00> : vector<2x8x8xf32>
    %17 = tpu.matmul %14, %15, %cst_4 {dimension_numbers = #tpu.dot_dimension_numbers<[2], [2], [1], [1], [0, 0, 0, 1, 1, 1], [0], [0]>} : vector<2x8x4xbf16>, vector<2x8x4xbf16>, vector<2x8x8xf32> -> vector<2x8x8xf32>
    "tpu.trace_stop"() : () -> ()
    %cst_5 = arith.constant dense<0xFF800000> : vector<2x8xf32>
    %18 = vector.multi_reduction <maximumf>, %17, %cst_5 [2] : vector<2x8x8xf32> to vector<2x8xf32>
    %19 = vector.shape_cast %18 : vector<2x8xf32> to vector<2x8x1xf32>
    %20 = vector.broadcast %19 : vector<2x8x1xf32> to vector<2x8x8xf32>
    %21 = arith.subf %17, %20 : vector<2x8x8xf32>
    %22 = math.exp %21 : vector<2x8x8xf32>
    %cst_6 = arith.constant dense<0.000000e+00> : vector<2x8xf32>
    %23 = vector.multi_reduction <add>, %22, %cst_6 [2] : vector<2x8x8xf32> to vector<2x8xf32>
    %24 = vector.shape_cast %23 : vector<2x8xf32> to vector<2x8x1xf32>
    %25 = tpu.reciprocal %24 {approx = true} : vector<2x8x1xf32> -> vector<2x8x1xf32>
    %26 = vector.broadcast %25 : vector<2x8x1xf32> to vector<2x8x8xf32>
    %27 = arith.mulf %22, %26 : vector<2x8x8xf32>
    %28 = arith.truncf %27 : vector<2x8x8xf32> to vector<2x8x8xbf16>
    "tpu.trace_start"() <{level = 10 : i32, message = "bnk,bkd->bnd"}> : () -> ()
    %cst_7 = arith.constant dense<0.000000e+00> : vector<2x8x4xf32>
    %29 = tpu.matmul %28, %16, %cst_7 {dimension_numbers = #tpu.dot_dimension_numbers<[2], [1], [1], [2], [0, 0, 0, 1, 1, 2], [0], [0]>} : vector<2x8x8xbf16>, vector<2x8x4xbf16>, vector<2x8x4xf32> -> vector<2x8x4xf32>
    "tpu.trace_stop"() : () -> ()
    %30 = vector.extract_strided_slice %9 {offsets = [0, 0, 4], sizes = [2, 8, 4], strides = [1, 1, 1]} : vector<2x8x32xbf16> to vector<2x8x4xbf16>
    %31 = vector.extract_strided_slice %11 {offsets = [0, 0, 4], sizes = [2, 8, 4], strides = [1, 1, 1]} : vector<2x8x32xbf16> to vector<2x8x4xbf16>
    %32 = vector.extract_strided_slice %13 {offsets = [0, 0, 4], sizes = [2, 8, 4], strides = [1, 1, 1]} : vector<2x8x32xbf16> to vector<2x8x4xbf16>
    "tpu.trace_start"() <{level = 10 : i32, message = "bnd,bkd->bnk"}> : () -> ()
    %cst_8 = arith.constant dense<0.000000e+00> : vector<2x8x8xf32>
    %33 = tpu.matmul %30, %31, %cst_8 {dimension_numbers = #tpu.dot_dimension_numbers<[2], [2], [1], [1], [0, 0, 0, 1, 1, 1], [0], [0]>} : vector<2x8x4xbf16>, vector<2x8x4xbf16>, vector<2x8x8xf32> -> vector<2x8x8xf32>
    "tpu.trace_stop"() : () -> ()
    %cst_9 = arith.constant dense<0xFF800000> : vector<2x8xf32>
    %34 = vector.multi_reduction <maximumf>, %33, %cst_9 [2] : vector<2x8x8xf32> to vector<2x8xf32>
    %35 = vector.shape_cast %34 : vector<2x8xf32> to vector<2x8x1xf32>
    %36 = vector.broadcast %35 : vector<2x8x1xf32> to vector<2x8x8xf32>
    %37 = arith.subf %33, %36 : vector<2x8x8xf32>
    %38 = math.exp %37 : vector<2x8x8xf32>
    %cst_10 = arith.constant dense<0.000000e+00> : vector<2x8xf32>
    %39 = vector.multi_reduction <add>, %38, %cst_10 [2] : vector<2x8x8xf32> to vector<2x8xf32>
    %40 = vector.shape_cast %39 : vector<2x8xf32> to vector<2x8x1xf32>
    %41 = tpu.reciprocal %40 {approx = true} : vector<2x8x1xf32> -> vector<2x8x1xf32>
    %42 = vector.broadcast %41 : vector<2x8x1xf32> to vector<2x8x8xf32>
    %43 = arith.mulf %38, %42 : vector<2x8x8xf32>
    %44 = arith.truncf %43 : vector<2x8x8xf32> to vector<2x8x8xbf16>
    "tpu.trace_start"() <{level = 10 : i32, message = "bnk,bkd->bnd"}> : () -> ()
    %cst_11 = arith.constant dense<0.000000e+00> : vector<2x8x4xf32>
    %45 = tpu.matmul %44, %32, %cst_11 {dimension_numbers = #tpu.dot_dimension_numbers<[2], [1], [1], [2], [0, 0, 0, 1, 1, 2], [0], [0]>} : vector<2x8x8xbf16>, vector<2x8x4xbf16>, vector<2x8x4xf32> -> vector<2x8x4xf32>
    "tpu.trace_stop"() : () -> ()
    %46 = vector.extract_strided_slice %9 {offsets = [0, 0, 8], sizes = [2, 8, 4], strides = [1, 1, 1]} : vector<2x8x32xbf16> to vector<2x8x4xbf16>
    %47 = vector.extract_strided_slice %11 {offsets = [0, 0, 8], sizes = [2, 8, 4], strides = [1, 1, 1]} : vector<2x8x32xbf16> to vector<2x8x4xbf16>
    %48 = vector.extract_strided_slice %13 {offsets = [0, 0, 8], sizes = [2, 8, 4], strides = [1, 1, 1]} : vector<2x8x32xbf16> to vector<2x8x4xbf16>
    "tpu.trace_start"() <{level = 10 : i32, message = "bnd,bkd->bnk"}> : () -> ()
    %cst_12 = arith.constant dense<0.000000e+00> : vector<2x8x8xf32>
    %49 = tpu.matmul %46, %47, %cst_12 {dimension_numbers = #tpu.dot_dimension_numbers<[2], [2], [1], [1], [0, 0, 0, 1, 1, 1], [0], [0]>} : vector<2x8x4xbf16>, vector<2x8x4xbf16>, vector<2x8x8xf32> -> vector<2x8x8xf32>
    "tpu.trace_stop"() : () -> ()
    %cst_13 = arith.constant dense<0xFF800000> : vector<2x8xf32>
    %50 = vector.multi_reduction <maximumf>, %49, %cst_13 [2] : vector<2x8x8xf32> to vector<2x8xf32>
    %51 = vector.shape_cast %50 : vector<2x8xf32> to vector<2x8x1xf32>
    %52 = vector.broadcast %51 : vector<2x8x1xf32> to vector<2x8x8xf32>
    %53 = arith.subf %49, %52 : vector<2x8x8xf32>
    %54 = math.exp %53 : vector<2x8x8xf32>
    %cst_14 = arith.constant dense<0.000000e+00> : vector<2x8xf32>
    %55 = vector.multi_reduction <add>, %54, %cst_14 [2] : vector<2x8x8xf32> to vector<2x8xf32>
    %56 = vector.shape_cast %55 : vector<2x8xf32> to vector<2x8x1xf32>
    %57 = tpu.reciprocal %56 {approx = true} : vector<2x8x1xf32> -> vector<2x8x1xf32>
    %58 = vector.broadcast %57 : vector<2x8x1xf32> to vector<2x8x8xf32>
    %59 = arith.mulf %54, %58 : vector<2x8x8xf32>
    %60 = arith.truncf %59 : vector<2x8x8xf32> to vector<2x8x8xbf16>
    "tpu.trace_start"() <{level = 10 : i32, message = "bnk,bkd->bnd"}> : () -> ()
    %cst_15 = arith.constant dense<0.000000e+00> : vector<2x8x4xf32>
    %61 = tpu.matmul %60, %48, %cst_15 {dimension_numbers = #tpu.dot_dimension_numbers<[2], [1], [1], [2], [0, 0, 0, 1, 1, 2], [0], [0]>} : vector<2x8x8xbf16>, vector<2x8x4xbf16>, vector<2x8x4xf32> -> vector<2x8x4xf32>
    "tpu.trace_stop"() : () -> ()
    %62 = vector.extract_strided_slice %9 {offsets = [0, 0, 12], sizes = [2, 8, 4], strides = [1, 1, 1]} : vector<2x8x32xbf16> to vector<2x8x4xbf16>
    %63 = vector.extract_strided_slice %11 {offsets = [0, 0, 12], sizes = [2, 8, 4], strides = [1, 1, 1]} : vector<2x8x32xbf16> to vector<2x8x4xbf16>
    %64 = vector.extract_strided_slice %13 {offsets = [0, 0, 12], sizes = [2, 8, 4], strides = [1, 1, 1]} : vector<2x8x32xbf16> to vector<2x8x4xbf16>
    "tpu.trace_start"() <{level = 10 : i32, message = "bnd,bkd->bnk"}> : () -> ()
    %cst_16 = arith.constant dense<0.000000e+00> : vector<2x8x8xf32>
    %65 = tpu.matmul %62, %63, %cst_16 {dimension_numbers = #tpu.dot_dimension_numbers<[2], [2], [1], [1], [0, 0, 0, 1, 1, 1], [0], [0]>} : vector<2x8x4xbf16>, vector<2x8x4xbf16>, vector<2x8x8xf32> -> vector<2x8x8xf32>
    "tpu.trace_stop"() : () -> ()
    %cst_17 = arith.constant dense<0xFF800000> : vector<2x8xf32>
    %66 = vector.multi_reduction <maximumf>, %65, %cst_17 [2] : vector<2x8x8xf32> to vector<2x8xf32>
    %67 = vector.shape_cast %66 : vector<2x8xf32> to vector<2x8x1xf32>
    %68 = vector.broadcast %67 : vector<2x8x1xf32> to vector<2x8x8xf32>
    %69 = arith.subf %65, %68 : vector<2x8x8xf32>
    %70 = math.exp %69 : vector<2x8x8xf32>
    %cst_18 = arith.constant dense<0.000000e+00> : vector<2x8xf32>
    %71 = vector.multi_reduction <add>, %70, %cst_18 [2] : vector<2x8x8xf32> to vector<2x8xf32>
    %72 = vector.shape_cast %71 : vector<2x8xf32> to vector<2x8x1xf32>
    %73 = tpu.reciprocal %72 {approx = true} : vector<2x8x1xf32> -> vector<2x8x1xf32>
    %74 = vector.broadcast %73 : vector<2x8x1xf32> to vector<2x8x8xf32>
    %75 = arith.mulf %70, %74 : vector<2x8x8xf32>
    %76 = arith.truncf %75 : vector<2x8x8xf32> to vector<2x8x8xbf16>
    "tpu.trace_start"() <{level = 10 : i32, message = "bnk,bkd->bnd"}> : () -> ()
    %cst_19 = arith.constant dense<0.000000e+00> : vector<2x8x4xf32>
    %77 = tpu.matmul %76, %64, %cst_19 {dimension_numbers = #tpu.dot_dimension_numbers<[2], [1], [1], [2], [0, 0, 0, 1, 1, 2], [0], [0]>} : vector<2x8x8xbf16>, vector<2x8x4xbf16>, vector<2x8x4xf32> -> vector<2x8x4xf32>
    "tpu.trace_stop"() : () -> ()
    %78 = vector.extract_strided_slice %9 {offsets = [0, 0, 16], sizes = [2, 8, 4], strides = [1, 1, 1]} : vector<2x8x32xbf16> to vector<2x8x4xbf16>
    %79 = vector.extract_strided_slice %11 {offsets = [0, 0, 16], sizes = [2, 8, 4], strides = [1, 1, 1]} : vector<2x8x32xbf16> to vector<2x8x4xbf16>
    %80 = vector.extract_strided_slice %13 {offsets = [0, 0, 16], sizes = [2, 8, 4], strides = [1, 1, 1]} : vector<2x8x32xbf16> to vector<2x8x4xbf16>
    "tpu.trace_start"() <{level = 10 : i32, message = "bnd,bkd->bnk"}> : () -> ()
    %cst_20 = arith.constant dense<0.000000e+00> : vector<2x8x8xf32>
    %81 = tpu.matmul %78, %79, %cst_20 {dimension_numbers = #tpu.dot_dimension_numbers<[2], [2], [1], [1], [0, 0, 0, 1, 1, 1], [0], [0]>} : vector<2x8x4xbf16>, vector<2x8x4xbf16>, vector<2x8x8xf32> -> vector<2x8x8xf32>
    "tpu.trace_stop"() : () -> ()
    %cst_21 = arith.constant dense<0xFF800000> : vector<2x8xf32>
    %82 = vector.multi_reduction <maximumf>, %81, %cst_21 [2] : vector<2x8x8xf32> to vector<2x8xf32>
    %83 = vector.shape_cast %82 : vector<2x8xf32> to vector<2x8x1xf32>
    %84 = vector.broadcast %83 : vector<2x8x1xf32> to vector<2x8x8xf32>
    %85 = arith.subf %81, %84 : vector<2x8x8xf32>
    %86 = math.exp %85 : vector<2x8x8xf32>
    %cst_22 = arith.constant dense<0.000000e+00> : vector<2x8xf32>
    %87 = vector.multi_reduction <add>, %86, %cst_22 [2] : vector<2x8x8xf32> to vector<2x8xf32>
    %88 = vector.shape_cast %87 : vector<2x8xf32> to vector<2x8x1xf32>
    %89 = tpu.reciprocal %88 {approx = true} : vector<2x8x1xf32> -> vector<2x8x1xf32>
    %90 = vector.broadcast %89 : vector<2x8x1xf32> to vector<2x8x8xf32>
    %91 = arith.mulf %86, %90 : vector<2x8x8xf32>
    %92 = arith.truncf %91 : vector<2x8x8xf32> to vector<2x8x8xbf16>
    "tpu.trace_start"() <{level = 10 : i32, message = "bnk,bkd->bnd"}> : () -> ()
    %cst_23 = arith.constant dense<0.000000e+00> : vector<2x8x4xf32>
    %93 = tpu.matmul %92, %80, %cst_23 {dimension_numbers = #tpu.dot_dimension_numbers<[2], [1], [1], [2], [0, 0, 0, 1, 1, 2], [0], [0]>} : vector<2x8x8xbf16>, vector<2x8x4xbf16>, vector<2x8x4xf32> -> vector<2x8x4xf32>
    "tpu.trace_stop"() : () -> ()
    %94 = vector.extract_strided_slice %9 {offsets = [0, 0, 20], sizes = [2, 8, 4], strides = [1, 1, 1]} : vector<2x8x32xbf16> to vector<2x8x4xbf16>
    %95 = vector.extract_strided_slice %11 {offsets = [0, 0, 20], sizes = [2, 8, 4], strides = [1, 1, 1]} : vector<2x8x32xbf16> to vector<2x8x4xbf16>
    %96 = vector.extract_strided_slice %13 {offsets = [0, 0, 20], sizes = [2, 8, 4], strides = [1, 1, 1]} : vector<2x8x32xbf16> to vector<2x8x4xbf16>
    "tpu.trace_start"() <{level = 10 : i32, message = "bnd,bkd->bnk"}> : () -> ()
    %cst_24 = arith.constant dense<0.000000e+00> : vector<2x8x8xf32>
    %97 = tpu.matmul %94, %95, %cst_24 {dimension_numbers = #tpu.dot_dimension_numbers<[2], [2], [1], [1], [0, 0, 0, 1, 1, 1], [0], [0]>} : vector<2x8x4xbf16>, vector<2x8x4xbf16>, vector<2x8x8xf32> -> vector<2x8x8xf32>
    "tpu.trace_stop"() : () -> ()
    %cst_25 = arith.constant dense<0xFF800000> : vector<2x8xf32>
    %98 = vector.multi_reduction <maximumf>, %97, %cst_25 [2] : vector<2x8x8xf32> to vector<2x8xf32>
    %99 = vector.shape_cast %98 : vector<2x8xf32> to vector<2x8x1xf32>
    %100 = vector.broadcast %99 : vector<2x8x1xf32> to vector<2x8x8xf32>
    %101 = arith.subf %97, %100 : vector<2x8x8xf32>
    %102 = math.exp %101 : vector<2x8x8xf32>
    %cst_26 = arith.constant dense<0.000000e+00> : vector<2x8xf32>
    %103 = vector.multi_reduction <add>, %102, %cst_26 [2] : vector<2x8x8xf32> to vector<2x8xf32>
    %104 = vector.shape_cast %103 : vector<2x8xf32> to vector<2x8x1xf32>
    %105 = tpu.reciprocal %104 {approx = true} : vector<2x8x1xf32> -> vector<2x8x1xf32>
    %106 = vector.broadcast %105 : vector<2x8x1xf32> to vector<2x8x8xf32>
    %107 = arith.mulf %102, %106 : vector<2x8x8xf32>
    %108 = arith.truncf %107 : vector<2x8x8xf32> to vector<2x8x8xbf16>
    "tpu.trace_start"() <{level = 10 : i32, message = "bnk,bkd->bnd"}> : () -> ()
    %cst_27 = arith.constant dense<0.000000e+00> : vector<2x8x4xf32>
    %109 = tpu.matmul %108, %96, %cst_27 {dimension_numbers = #tpu.dot_dimension_numbers<[2], [1], [1], [2], [0, 0, 0, 1, 1, 2], [0], [0]>} : vector<2x8x8xbf16>, vector<2x8x4xbf16>, vector<2x8x4xf32> -> vector<2x8x4xf32>
    "tpu.trace_stop"() : () -> ()
    %110 = vector.extract_strided_slice %9 {offsets = [0, 0, 24], sizes = [2, 8, 4], strides = [1, 1, 1]} : vector<2x8x32xbf16> to vector<2x8x4xbf16>
    %111 = vector.extract_strided_slice %11 {offsets = [0, 0, 24], sizes = [2, 8, 4], strides = [1, 1, 1]} : vector<2x8x32xbf16> to vector<2x8x4xbf16>
    %112 = vector.extract_strided_slice %13 {offsets = [0, 0, 24], sizes = [2, 8, 4], strides = [1, 1, 1]} : vector<2x8x32xbf16> to vector<2x8x4xbf16>
    "tpu.trace_start"() <{level = 10 : i32, message = "bnd,bkd->bnk"}> : () -> ()
    %cst_28 = arith.constant dense<0.000000e+00> : vector<2x8x8xf32>
    %113 = tpu.matmul %110, %111, %cst_28 {dimension_numbers = #tpu.dot_dimension_numbers<[2], [2], [1], [1], [0, 0, 0, 1, 1, 1], [0], [0]>} : vector<2x8x4xbf16>, vector<2x8x4xbf16>, vector<2x8x8xf32> -> vector<2x8x8xf32>
    "tpu.trace_stop"() : () -> ()
    %cst_29 = arith.constant dense<0xFF800000> : vector<2x8xf32>
    %114 = vector.multi_reduction <maximumf>, %113, %cst_29 [2] : vector<2x8x8xf32> to vector<2x8xf32>
    %115 = vector.shape_cast %114 : vector<2x8xf32> to vector<2x8x1xf32>
    %116 = vector.broadcast %115 : vector<2x8x1xf32> to vector<2x8x8xf32>
    %117 = arith.subf %113, %116 : vector<2x8x8xf32>
    %118 = math.exp %117 : vector<2x8x8xf32>
    %cst_30 = arith.constant dense<0.000000e+00> : vector<2x8xf32>
    %119 = vector.multi_reduction <add>, %118, %cst_30 [2] : vector<2x8x8xf32> to vector<2x8xf32>
    %120 = vector.shape_cast %119 : vector<2x8xf32> to vector<2x8x1xf32>
    %121 = tpu.reciprocal %120 {approx = true} : vector<2x8x1xf32> -> vector<2x8x1xf32>
    %122 = vector.broadcast %121 : vector<2x8x1xf32> to vector<2x8x8xf32>
    %123 = arith.mulf %118, %122 : vector<2x8x8xf32>
    %124 = arith.truncf %123 : vector<2x8x8xf32> to vector<2x8x8xbf16>
    "tpu.trace_start"() <{level = 10 : i32, message = "bnk,bkd->bnd"}> : () -> ()
    %cst_31 = arith.constant dense<0.000000e+00> : vector<2x8x4xf32>
    %125 = tpu.matmul %124, %112, %cst_31 {dimension_numbers = #tpu.dot_dimension_numbers<[2], [1], [1], [2], [0, 0, 0, 1, 1, 2], [0], [0]>} : vector<2x8x8xbf16>, vector<2x8x4xbf16>, vector<2x8x4xf32> -> vector<2x8x4xf32>
    "tpu.trace_stop"() : () -> ()
    %126 = vector.extract_strided_slice %9 {offsets = [0, 0, 28], sizes = [2, 8, 4], strides = [1, 1, 1]} : vector<2x8x32xbf16> to vector<2x8x4xbf16>
    %127 = vector.extract_strided_slice %11 {offsets = [0, 0, 28], sizes = [2, 8, 4], strides = [1, 1, 1]} : vector<2x8x32xbf16> to vector<2x8x4xbf16>
    %128 = vector.extract_strided_slice %13 {offsets = [0, 0, 28], sizes = [2, 8, 4], strides = [1, 1, 1]} : vector<2x8x32xbf16> to vector<2x8x4xbf16>
    "tpu.trace_start"() <{level = 10 : i32, message = "bnd,bkd->bnk"}> : () -> ()
    %cst_32 = arith.constant dense<0.000000e+00> : vector<2x8x8xf32>
    %129 = tpu.matmul %126, %127, %cst_32 {dimension_numbers = #tpu.dot_dimension_numbers<[2], [2], [1], [1], [0, 0, 0, 1, 1, 1], [0], [0]>} : vector<2x8x4xbf16>, vector<2x8x4xbf16>, vector<2x8x8xf32> -> vector<2x8x8xf32>
    "tpu.trace_stop"() : () -> ()
    %cst_33 = arith.constant dense<0xFF800000> : vector<2x8xf32>
    %130 = vector.multi_reduction <maximumf>, %129, %cst_33 [2] : vector<2x8x8xf32> to vector<2x8xf32>
    %131 = vector.shape_cast %130 : vector<2x8xf32> to vector<2x8x1xf32>
    %132 = vector.broadcast %131 : vector<2x8x1xf32> to vector<2x8x8xf32>
    %133 = arith.subf %129, %132 : vector<2x8x8xf32>
    %134 = math.exp %133 : vector<2x8x8xf32>
    %cst_34 = arith.constant dense<0.000000e+00> : vector<2x8xf32>
    %135 = vector.multi_reduction <add>, %134, %cst_34 [2] : vector<2x8x8xf32> to vector<2x8xf32>
    %136 = vector.shape_cast %135 : vector<2x8xf32> to vector<2x8x1xf32>
    %137 = tpu.reciprocal %136 {approx = true} : vector<2x8x1xf32> -> vector<2x8x1xf32>
    %138 = vector.broadcast %137 : vector<2x8x1xf32> to vector<2x8x8xf32>
    %139 = arith.mulf %134, %138 : vector<2x8x8xf32>
    %140 = arith.truncf %139 : vector<2x8x8xf32> to vector<2x8x8xbf16>
    "tpu.trace_start"() <{level = 10 : i32, message = "bnk,bkd->bnd"}> : () -> ()
    %cst_35 = arith.constant dense<0.000000e+00> : vector<2x8x4xf32>
    %141 = tpu.matmul %140, %128, %cst_35 {dimension_numbers = #tpu.dot_dimension_numbers<[2], [1], [1], [2], [0, 0, 0, 1, 1, 2], [0], [0]>} : vector<2x8x8xbf16>, vector<2x8x4xbf16>, vector<2x8x4xf32> -> vector<2x8x4xf32>
    "tpu.trace_stop"() : () -> ()
    %142 = tpu.concatenate %29, %45, %61, %77, %93, %109, %125, %141 in 2 : vector<2x8x4xf32>, vector<2x8x4xf32>, vector<2x8x4xf32>, vector<2x8x4xf32>, vector<2x8x4xf32>, vector<2x8x4xf32>, vector<2x8x4xf32>, vector<2x8x4xf32> -> vector<2x8x32xf32>
    %143 = vector.shape_cast %142 : vector<2x8x32xf32> to vector<16x32xf32>
    %144 = arith.truncf %143 : vector<16x32xf32> to vector<16x32xbf16>
    %c0_36 = arith.constant 0 : index
    %c0_37 = arith.constant 0 : index
    %145 = vector.load %arg3[%c0_36, %c0_37] : memref<32x32xbf16, #tpu.memory_space<vmem>>, vector<32x32xbf16>
    %cst_38 = arith.constant dense<0.000000e+00> : vector<16x32xf32>
    %146 = tpu.matmul %144, %145, %cst_38 {dimension_numbers = #tpu.dot_dimension_numbers<[1], [0], [0], [1], [0, 0, 1, 1], [], []>} : vector<16x32xbf16>, vector<32x32xbf16>, vector<16x32xf32> -> vector<16x32xf32>
    %c0_39 = arith.constant 0 : index
    %c0_40 = arith.constant 0 : index
    %147 = vector.load %arg4[%c0_39, %c0_40] : memref<1x32xf32, #tpu.memory_space<vmem>>, vector<1x32xf32>
    %148 = vector.broadcast %147 : vector<1x32xf32> to vector<16x32xf32>
    %149 = arith.addf %146, %148 : vector<16x32xf32>
    %c0_41 = arith.constant 0 : index
    %c0_42 = arith.constant 0 : index
    %150 = vector.load %arg5[%c0_41, %c0_42] : memref<16x32xf32, #tpu.memory_space<vmem>>, vector<16x32xf32>
    tpu.vector_store %arg5[%c0_41, %c0_42], %149 {strides = array<i32>} : memref<16x32xf32, #tpu.memory_space<vmem>>, vector<16x32xf32>,
    return
  }
  func.func @transform_0(%arg0: i32) -> (i32, i32) {
    %c0_i32 = arith.constant 0 : i32
    %c0_i32_0 = arith.constant 0 : i32
    return %arg0, %c0_i32 : i32, i32
  }
  func.func @transform_1(%arg0: i32) -> (i32, i32) {
    %c0_i32 = arith.constant 0 : i32
    %c0_i32_0 = arith.constant 0 : i32
    %c0_i32_1 = arith.constant 0 : i32
    return %c0_i32, %c0_i32_0 : i32, i32
  }
  func.func @transform_2(%arg0: i32) -> (i32, i32) {
    %c0_i32 = arith.constant 0 : i32
    %c0_i32_0 = arith.constant 0 : i32
    %c0_i32_1 = arith.constant 0 : i32
    return %c0_i32, %c0_i32_0 : i32, i32
  }
  func.func @transform_3(%arg0: i32) -> (i32, i32) {
    %c0_i32 = arith.constant 0 : i32
    %c0_i32_0 = arith.constant 0 : i32
    %c0_i32_1 = arith.constant 0 : i32
    return %c0_i32, %c0_i32_0 : i32, i32
  }
  func.func @transform_4(%arg0: i32) -> (i32, i32) {
    %c0_i32 = arith.constant 0 : i32
    %c0_i32_0 = arith.constant 0 : i32
    return %arg0, %c0_i32 : i32, i32
  }
}

</mosaic_0001>

<llo_original>
// kernel: tpu_custom_call.1
$region0: #{tpu_custom_call.1}
  #allocation0 [shape = 'u32[]', space=smem, size = 0x4, offset = 0x4, fixed_abs, tag = 'smem constant byte address 0x4 - core index']
  #allocation1 [shape = 'u32[144,128]{1,0:T(1,128)}', space=vmem, size = 0x12000, scoped, tag = 'internal scratch']
  %s0 = inlined_call_operand.hbm [shape: bf16[16,32], index: 0, kind: input, shape index: {}]
  %s1 = inlined_call_operand.hbm [shape: bf16[32,96], index: 1, kind: input, shape index: {}]
  %s2 = inlined_call_operand.hbm [shape: bf16[32,32], index: 2, kind: input, shape index: {}]
  %s3 = inlined_call_operand.vmem [shape: f32[1,32], index: 3, kind: input, shape index: {}]
  %s4 = inlined_call_operand.hbm [shape: f32[16,32], index: 4, kind: output, shape index: {}]
  %s5 = sld [smem:[#allocation0]]
  $region38: #{tpu_custom_call.1} parent=0
    _
  %s7 = ssub.s32 1, %s5
  %s8 = scalar_select 0, %s7, %s5
  $region1: #{tpu_custom_call.1} parent=0
    #allocation2 [shape = 'u8[4096]{0}', space=vmem, size = 0x1000, scoped, tag = 'input window, operand 0, single buffered']
    #allocation3 [shape = 's32[1]{0}', space=sflag, size = 0x4, scoped, tag = 'scoped memory for tpu_custom_call.1']
    #allocation4 [shape = 's32[1]{0}', space=sflag, size = 0x4, scoped, tag = 'scoped memory for tpu_custom_call.1']
    #allocation5 [shape = 'u8[8192]{0}', space=vmem, size = 0x2000, scoped, tag = 'input window, operand 1, single buffered']
    #allocation6 [shape = 's32[1]{0}', space=sflag, size = 0x4, scoped, tag = 'scoped memory for tpu_custom_call.1']
    #allocation7 [shape = 'u8[8192]{0}', space=vmem, size = 0x2000, scoped, tag = 'input window, operand 2, single buffered']
    #allocation8 [shape = 'u8[8192]{0}', space=vmem, size = 0x2000, scoped, tag = 'output window, operand 0, single buffered']
    %9 = vsyncpa [#allocation3], 0
    %10 = vsyncpa [#allocation6], 0
    %11 = vsyncpa [#allocation4], 0
    // Predicated region
    $region2: #{tpu_custom_call.1} parent=1 // pred_check
      _
    $region3: #{tpu_custom_call.1} parent=1 // pred_check_branch
      %13 = sbr.rel (0) target = $region5
    $region4: #{tpu_custom_call.1} parent=1 // pred_region
      %s15 = ssub.s32 128, 128
      %16 = vsyncadd [#allocation3], %s15
      %s17 = sshll.u32 [#allocation2], 4
      %s18 = int_to_ptr.vmem [resolvable:$true] %s17
      %23 = dma.hbm_to_vmem [thread:$0]  %s0, 128, %s18, [#allocation3], 64, 64, 4
    $region5: #{tpu_custom_call.1} parent=1 // pred_fallthru
      _
    // Predicated region
    $region6: #{tpu_custom_call.1} parent=1 // pred_check
      _
    $region7: #{tpu_custom_call.1} parent=1 // pred_check_branch
      %25 = sbr.rel (0) target = $region9
    $region8: #{tpu_custom_call.1} parent=1 // pred_region
      %s27 = ssub.s32 256, 256
      %28 = vsyncadd [#allocation6], %s27
      %s29 = sshll.u32 [#allocation5], 4
      %s30 = int_to_ptr.vmem [resolvable:$true] %s29
      %35 = dma.hbm_to_vmem [thread:$0]  %s1, 256, %s30, [#allocation6], 64, 64, 4
    $region9: #{tpu_custom_call.1} parent=1 // pred_fallthru
      _
    // Predicated region
    $region10: #{tpu_custom_call.1} parent=1 // pred_check
      _
    $region11: #{tpu_custom_call.1} parent=1 // pred_check_branch
      %37 = sbr.rel (0) target = $region13
    $region12: #{tpu_custom_call.1} parent=1 // pred_region
      %s39 = ssub.s32 256, 256
      %40 = vsyncadd [#allocation6], %s39
      %s41 = sshll.u32 [#allocation7], 4
      %s42 = int_to_ptr.vmem [resolvable:$true] %s41
      %47 = dma.hbm_to_vmem [thread:$0]  %s2, 256, %s42, [#allocation6], 64, 64, 4
    $region13: #{tpu_custom_call.1} parent=1 // pred_fallthru
      _
    // Predicated region
    $region14: #{tpu_custom_call.1} parent=1 // pred_check
      _
    $region15: #{tpu_custom_call.1} parent=1 // pred_check_branch
      %49 = sbr.rel (0) target = $region17
    $region16: #{tpu_custom_call.1} parent=1 // pred_region
      _
    $region17: #{tpu_custom_call.1} parent=1 // pred_fallthru
      _
    // Predicated region
    $region18: #{tpu_custom_call.1} parent=1 // pred_check
      _
    $region19: #{tpu_custom_call.1} parent=1 // pred_check_branch
      %51 = sbr.rel (0) target = $region21
    $region20: #{tpu_custom_call.1} parent=1 // pred_region
      %52 = dma.done [#allocation3], 128
    $region21: #{tpu_custom_call.1} parent=1 // pred_fallthru
      _
    // Predicated region
    $region22: #{tpu_custom_call.1} parent=1 // pred_check
      _
    $region23: #{tpu_custom_call.1} parent=1 // pred_check_branch
      %54 = sbr.rel (0) target = $region25
    $region24: #{tpu_custom_call.1} parent=1 // pred_region
      %55 = dma.done [#allocation6], 256
    $region25: #{tpu_custom_call.1} parent=1 // pred_fallthru
      _
    // Predicated region
    $region26: #{tpu_custom_call.1} parent=1 // pred_check
      _
    $region27: #{tpu_custom_call.1} parent=1 // pred_check_branch
      %57 = sbr.rel (0) target = $region29
    $region28: #{tpu_custom_call.1} parent=1 // pred_region
      %58 = dma.done [#allocation6], 256
    $region29: #{tpu_custom_call.1} parent=1 // pred_fallthru
      _
    %v60 = vld [vmem:[#allocation2] sm:$0xf]
    %v61 = vld [vmem:[#allocation2 + $0x4] sm:$0xf]
    %v62 = vld [vmem:[#allocation5] sm:$0xf]
    %v63 = vld [vmem:[#allocation5 + $0x4] sm:$0xf]
    %v64 = vld [vmem:[#allocation5 + $0x8] sm:$0xf]
    %v65 = vld [vmem:[#allocation5 + $0xc] sm:$0xf]
    %v68 = vunpack.c.l.b16 %v60
    %v69 = vunpack.c.l.b16 %v61
    %v70 = vpack.c.b16 %v69, %v68
    %v75 = vunpack.c.l.b16 %v62
    %v76 = vunpack.c.l.b16 %v63
    %v77 = vunpack.c.l.b16 %v64
    %v78 = vunpack.c.l.b16 %v65
    %v79 = vpack.c.b16 %v76, %v75
    %v80 = vpack.c.b16 %v78, %v77
    %vm83 = vcmask 261120
    %v85 = vsel %vm83, %v70, 0
    %87 = vmatprep.subr.bf16.mxu0 0
    %88 = vmatpush1.bf16.msra.mxu0 %v79
    %89 = vmatprep.subr.bf16.mxu0 0
    %90 = vmatpush1.bf16.msra.mxu0 %v80
    %91 = vmatprep.subr.bf16.mxu0 0
    %92 = vmatpush1.bf16.msra.mxu0 0
    %93 = vmatprep.subr.bf16.mxu0 0
    %94 = vmatpush1.bf16.msra.mxu0 0
    %95 = vmatprep.subr.bf16.mxu0 0
    %96 = vmatpush1.bf16.msra.mxu0 0
    %97 = vmatprep.subr.bf16.mxu0 0
    %98 = vmatpush1.bf16.msra.mxu0 0
    %99 = vmatprep.subr.bf16.mxu0 0
    %100 = vmatpush1.bf16.msra.mxu0 0
    %101 = vmatprep.subr.bf16.mxu0 0
    %102 = vmatpush1.bf16.msra.mxu0 0
    %103 = vmatprep.subr.bf16.mxu0 0
    %104 = vmatpush1.bf16.msra.mxu0 0
    %105 = vmatprep.subr.bf16.mxu0 0
    %106 = vmatpush1.bf16.msra.mxu0 0
    %107 = vmatprep.subr.bf16.mxu0 0
    %108 = vmatpush1.bf16.msra.mxu0 0
    %109 = vmatprep.subr.bf16.mxu0 0
    %110 = vmatpush1.bf16.msra.mxu0 0
    %111 = vmatprep.subr.bf16.mxu0 0
    %112 = vmatpush1.bf16.msra.mxu0 0
    %113 = vmatprep.subr.bf16.mxu0 0
    %114 = vmatpush1.bf16.msra.mxu0 0
    %115 = vmatprep.subr.bf16.mxu0 0
    %116 = vmatpush1.bf16.msra.mxu0 0
    %117 = vmatprep.subr.bf16.mxu0 0
    %118 = vmatpush1.bf16.msra.mxu0 0
    %119 = vmatprep.mubr.bf16.mxu0 0
    %120 = vmatmul.mubr.bf16.gmra.mrb[0].mxu0 %v85
    %v121 = vpop.f32.mrb[0].mxu0
    %v122 = vadd.f32 0.0, %v121
    %v123 = vpop.f32.mrb[0].mxu0
    %v124 = vpop.f32.mrb[0].mxu0
    %v125 = vadd.f32 0.0, %v124
    %v126 = vpop.f32.mrb[0].mxu0
    %127 = vdwg.mxu0
    %v128 = vmul.f32 %v122, 0.5
    %v129 = vmul.f32 %v125, 0.5
    %v130 = vpack.c.bf16 %v128, %v128
    %v131 = vpack.c.bf16 %v129, %v129
    %v132 = vpack.c.bf16 %v122, %v122
    %v133 = vpack.c.bf16 %v125, %v125
    %135 = vrot.lane.b32.xlu0 %v132, 96
    %v136 = vpop.permute.xlu0 %135
    %vm137 = vcmask 31744
    %v139 = vsel %vm137, %v130, 0
    %v142 = vsel %vm137, %v136, 0
    %144 = vmatprep.subr.bf16.mxu0 0
    %145 = vmatpush1.bf16.xpose.msra.mxu0 %v142
    %146 = vmatprep.subr.bf16.mxu0 0
    %147 = vmatpush1.bf16.xpose.msra.mxu0 0
    %148 = vmatprep.subr.bf16.mxu0 0
    %149 = vmatpush1.bf16.xpose.msra.mxu0 0
    %150 = vmatprep.subr.bf16.mxu0 0
    %151 = vmatpush1.bf16.xpose.msra.mxu0 0
    %152 = vmatprep.subr.bf16.mxu0 0
    %153 = vmatpush1.bf16.xpose.msra.mxu0 0
    %154 = vmatprep.subr.bf16.mxu0 0
    %155 = vmatpush1.bf16.xpose.msra.mxu0 0
    %156 = vmatprep.subr.bf16.mxu0 0
    %157 = vmatpush1.bf16.xpose.msra.mxu0 0
    %158 = vmatprep.subr.bf16.mxu0 0
    %159 = vmatpush1.bf16.xpose.msra.mxu0 0
    %160 = vmatprep.subr.bf16.mxu0 0
    %161 = vmatpush1.bf16.xpose.msra.mxu0 0
    %162 = vmatprep.subr.bf16.mxu0 0
    %163 = vmatpush1.bf16.xpose.msra.mxu0 0
    %164 = vmatprep.subr.bf16.mxu0 0
    %165 = vmatpush1.bf16.xpose.msra.mxu0 0
    %166 = vmatprep.subr.bf16.mxu0 0
    %167 = vmatpush1.bf16.xpose.msra.mxu0 0
    %168 = vmatprep.subr.bf16.mxu0 0
    %169 = vmatpush1.bf16.xpose.msra.mxu0 0
    %170 = vmatprep.subr.bf16.mxu0 0
    %171 = vmatpush1.bf16.xpose.msra.mxu0 0
    %172 = vmatprep.subr.bf16.mxu0 0
    %173 = vmatpush1.bf16.xpose.msra.mxu0 0
    %174 = vmatprep.subr.bf16.mxu0 0
    %175 = vmatpush1.bf16.xpose.msra.mxu0 0
    %176 = vmatprep.mubr.bf16.mxu0 0
    %177 = vmatmul.mubr.bf16.gmra.mrb[0].mxu0 %v139
    %v178 = vpop.f32.mrb[0].mxu0
    %v179 = vadd.f32 0.0, %v178
    %v180 = vpop.f32.mrb[0].mxu0
    %v181 = vpop.f32.mrb[0].mxu0
    %v182 = vpop.f32.mrb[0].mxu0
    %183 = vdwg.mxu0
    %185 = vrot.lane.b32.xlu0 %v133, 96
    %v186 = vpop.permute.xlu0 %185
    %v188 = vsel %vm137, %v131, 0
    %v191 = vsel %vm137, %v186, 0
    %193 = vmatprep.subr.bf16.mxu0 0
    %194 = vmatpush1.bf16.xpose.msra.mxu0 %v191
    %195 = vmatprep.subr.bf16.mxu0 0
    %196 = vmatpush1.bf16.xpose.msra.mxu0 0
    %197 = vmatprep.subr.bf16.mxu0 0
    %198 = vmatpush1.bf16.xpose.msra.mxu0 0
    %199 = vmatprep.subr.bf16.mxu0 0
    %200 = vmatpush1.bf16.xpose.msra.mxu0 0
    %201 = vmatprep.subr.bf16.mxu0 0
    %202 = vmatpush1.bf16.xpose.msra.mxu0 0
    %203 = vmatprep.subr.bf16.mxu0 0
    %204 = vmatpush1.bf16.xpose.msra.mxu0 0
    %205 = vmatprep.subr.bf16.mxu0 0
    %206 = vmatpush1.bf16.xpose.msra.mxu0 0
    %207 = vmatprep.subr.bf16.mxu0 0
    %208 = vmatpush1.bf16.xpose.msra.mxu0 0
    %209 = vmatprep.subr.bf16.mxu0 0
    %210 = vmatpush1.bf16.xpose.msra.mxu0 0
    %211 = vmatprep.subr.bf16.mxu0 0
    %212 = vmatpush1.bf16.xpose.msra.mxu0 0
    %213 = vmatprep.subr.bf16.mxu0 0
    %214 = vmatpush1.bf16.xpose.msra.mxu0 0
    %215 = vmatprep.subr.bf16.mxu0 0
    %216 = vmatpush1.bf16.xpose.msra.mxu0 0
    %217 = vmatprep.subr.bf16.mxu0 0
    %218 = vmatpush1.bf16.xpose.msra.mxu0 0
    %219 = vmatprep.subr.bf16.mxu0 0
    %220 = vmatpush1.bf16.xpose.msra.mxu0 0
    %221 = vmatprep.subr.bf16.mxu0 0
    %222 = vmatpush1.bf16.xpose.msra.mxu0 0
    %223 = vmatprep.subr.bf16.mxu0 0
    %224 = vmatpush1.bf16.xpose.msra.mxu0 0
    %225 = vmatprep.mubr.bf16.mxu0 0
    %226 = vmatmul.mubr.bf16.gmra.mrb[0].mxu0 %v188
    %v227 = vpop.f32.mrb[0].mxu0
    %v228 = vadd.f32 0.0, %v227
    %v229 = vpop.f32.mrb[0].mxu0
    %v230 = vpop.f32.mrb[0].mxu0
    %v231 = vpop.f32.mrb[0].mxu0
    %232 = vdwg.mxu0
    %vm233 = vcmask 64512
    %v234 = vsel %vm233, %v179, -inf
    %235 = vmax.xlane.f32.xlu0 %v234
    %v236 = vpop.xlane.xlu0 %235
    %v237 = vsel %vm233, %v228, -inf
    %238 = vmax.xlane.f32.xlu0 %v237
    %v239 = vpop.xlane.xlu0 %238
    %v240 = vsub.f32 %v179, %v236
    %v241 = vsub.f32 %v228, %v239
    %v242 = vmul.f32 %v240, 1.442695
    %v243 = vpow.pop %v242
    %v244 = vmul.f32 %v241, 1.442695
    %v245 = vpow.pop %v244
    %v246 = vsel %vm233, %v243, 0.0
    %247 = vadd.xlane.f32.xlu0 %v246
    %v248 = vpop.xlane.xlu0 %247
    %v249 = vsel %vm233, %v245, 0.0
    %250 = vadd.xlane.f32.xlu0 %v249
    %v251 = vpop.xlane.xlu0 %250
    %v252 = vrcp.pop %v248
    %v253 = vrcp.pop %v251
    %v254 = vmul.f32 %v243, %v252
    %v255 = vmul.f32 %v245, %v253
    %v256 = vpack.c.bf16 %v254, %v254
    %v257 = vpack.c.bf16 %v255, %v255
    %258 = vrot.lane.b32.xlu0 %v132, 64
    %v259 = vpop.permute.xlu0 %258
    %v261 = vsel %vm233, %v256, 0
    %vm263 = vcmask 1043456
    %v265 = vsel %vm263, %v259, 0
    %267 = vmatprep.subr.bf16.mxu0 0
    %268 = vmatpush1.bf16.msra.mxu0 %v265
    %269 = vmatprep.subr.bf16.mxu0 0
    %270 = vmatpush1.bf16.msra.mxu0 0
    %271 = vmatprep.subr.bf16.mxu0 0
    %272 = vmatpush1.bf16.msra.mxu0 0
    %273 = vmatprep.subr.bf16.mxu0 0
    %274 = vmatpush1.bf16.msra.mxu0 0
    %275 = vmatprep.subr.bf16.mxu0 0
    %276 = vmatpush1.bf16.msra.mxu0 0
    %277 = vmatprep.subr.bf16.mxu0 0
    %278 = vmatpush1.bf16.msra.mxu0 0
    %279 = vmatprep.subr.bf16.mxu0 0
    %280 = vmatpush1.bf16.msra.mxu0 0
    %281 = vmatprep.subr.bf16.mxu0 0
    %282 = vmatpush1.bf16.msra.mxu0 0
    %283 = vmatprep.subr.bf16.mxu0 0
    %284 = vmatpush1.bf16.msra.mxu0 0
    %285 = vmatprep.subr.bf16.mxu0 0
    %286 = vmatpush1.bf16.msra.mxu0 0
    %287 = vmatprep.subr.bf16.mxu0 0
    %288 = vmatpush1.bf16.msra.mxu0 0
    %289 = vmatprep.subr.bf16.mxu0 0
    %290 = vmatpush1.bf16.msra.mxu0 0
    %291 = vmatprep.subr.bf16.mxu0 0
    %292 = vmatpush1.bf16.msra.mxu0 0
    %293 = vmatprep.subr.bf16.mxu0 0
    %294 = vmatpush1.bf16.msra.mxu0 0
    %295 = vmatprep.subr.bf16.mxu0 0
    %296 = vmatpush1.bf16.msra.mxu0 0
    %297 = vmatprep.subr.bf16.mxu0 0
    %298 = vmatpush1.bf16.msra.mxu0 0
    %299 = vmatprep.mubr.bf16.mxu0 0
    %300 = vmatmul.mubr.bf16.gmra.mrb[0].mxu0 %v261
    %v301 = vpop.f32.mrb[0].mxu0
    %v302 = vadd.f32 0.0, %v301
    %v303 = vpop.f32.mrb[0].mxu0
    %v304 = vpop.f32.mrb[0].mxu0
    %v305 = vpop.f32.mrb[0].mxu0
    %306 = vdwg.mxu0
    %307 = vrot.lane.b32.xlu0 %v133, 64
    %v308 = vpop.permute.xlu0 %307
    %v310 = vsel %vm233, %v257, 0
    %v313 = vsel %vm263, %v308, 0
    %315 = vmatprep.subr.bf16.mxu0 0
    %316 = vmatpush1.bf16.msra.mxu0 %v313
    %317 = vmatprep.subr.bf16.mxu0 0
    %318 = vmatpush1.bf16.msra.mxu0 0
    %319 = vmatprep.subr.bf16.mxu0 0
    %320 = vmatpush1.bf16.msra.mxu0 0
    %321 = vmatprep.subr.bf16.mxu0 0
    %322 = vmatpush1.bf16.msra.mxu0 0
    %323 = vmatprep.subr.bf16.mxu0 0
    %324 = vmatpush1.bf16.msra.mxu0 0
    %325 = vmatprep.subr.bf16.mxu0 0
    %326 = vmatpush1.bf16.msra.mxu0 0
    %327 = vmatprep.subr.bf16.mxu0 0
    %328 = vmatpush1.bf16.msra.mxu0 0
    %329 = vmatprep.subr.bf16.mxu0 0
    %330 = vmatpush1.bf16.msra.mxu0 0
    %331 = vmatprep.subr.bf16.mxu0 0
    %332 = vmatpush1.bf16.msra.mxu0 0
    %333 = vmatprep.subr.bf16.mxu0 0
    %334 = vmatpush1.bf16.msra.mxu0 0
    %335 = vmatprep.subr.bf16.mxu0 0
    %336 = vmatpush1.bf16.msra.mxu0 0
    %337 = vmatprep.subr.bf16.mxu0 0
    %338 = vmatpush1.bf16.msra.mxu0 0
    %339 = vmatprep.subr.bf16.mxu0 0
    %340 = vmatpush1.bf16.msra.mxu0 0
    %341 = vmatprep.subr.bf16.mxu0 0
    %342 = vmatpush1.bf16.msra.mxu0 0
    %343 = vmatprep.subr.bf16.mxu0 0
    %344 = vmatpush1.bf16.msra.mxu0 0
    %345 = vmatprep.subr.bf16.mxu0 0
    %346 = vmatpush1.bf16.msra.mxu0 0
    %347 = vmatprep.mubr.bf16.mxu0 0
    %348 = vmatmul.mubr.bf16.gmra.mrb[0].mxu0 %v310
    %v349 = vpop.f32.mrb[0].mxu0
    %v350 = vadd.f32 0.0, %v349
    %v351 = vpop.f32.mrb[0].mxu0
    %v352 = vpop.f32.mrb[0].mxu0
    %v353 = vpop.f32.mrb[0].mxu0
    %354 = vdwg.mxu0
    %356 = vrot.lane.b32.xlu0 %v130, 124
    %v357 = vpop.permute.xlu0 %356
    %358 = vrot.lane.b32.xlu0 %v132, 92
    %v359 = vpop.permute.xlu0 %358
    %v361 = vsel %vm137, %v357, 0
    %v364 = vsel %vm137, %v359, 0
    %366 = vmatprep.subr.bf16.mxu0 0
    %367 = vmatpush1.bf16.xpose.msra.mxu0 %v364
    %368 = vmatprep.subr.bf16.mxu0 0
    %369 = vmatpush1.bf16.xpose.msra.mxu0 0
    %370 = vmatprep.subr.bf16.mxu0 0
    %371 = vmatpush1.bf16.xpose.msra.mxu0 0
    %372 = vmatprep.subr.bf16.mxu0 0
    %373 = vmatpush1.bf16.xpose.msra.mxu0 0
    %374 = vmatprep.subr.bf16.mxu0 0
    %375 = vmatpush1.bf16.xpose.msra.mxu0 0
    %376 = vmatprep.subr.bf16.mxu0 0
    %377 = vmatpush1.bf16.xpose.msra.mxu0 0
    %378 = vmatprep.subr.bf16.mxu0 0
    %379 = vmatpush1.bf16.xpose.msra.mxu0 0
    %380 = vmatprep.subr.bf16.mxu0 0
    %381 = vmatpush1.bf16.xpose.msra.mxu0 0
    %382 = vmatprep.subr.bf16.mxu0 0
    %383 = vmatpush1.bf16.xpose.msra.mxu0 0
    %384 = vmatprep.subr.bf16.mxu0 0
    %385 = vmatpush1.bf16.xpose.msra.mxu0 0
    %386 = vmatprep.subr.bf16.mxu0 0
    %387 = vmatpush1.bf16.xpose.msra.mxu0 0
    %388 = vmatprep.subr.bf16.mxu0 0
    %389 = vmatpush1.bf16.xpose.msra.mxu0 0
    %390 = vmatprep.subr.bf16.mxu0 0
    %391 = vmatpush1.bf16.xpose.msra.mxu0 0
    %392 = vmatprep.subr.bf16.mxu0 0
    %393 = vmatpush1.bf16.xpose.msra.mxu0 0
    %394 = vmatprep.subr.bf16.mxu0 0
    %395 = vmatpush1.bf16.xpose.msra.mxu0 0
    %396 = vmatprep.subr.bf16.mxu0 0
    %397 = vmatpush1.bf16.xpose.msra.mxu0 0
    %398 = vmatprep.mubr.bf16.mxu0 0
    %399 = vmatmul.mubr.bf16.gmra.mrb[0].mxu0 %v361
    %v400 = vpop.f32.mrb[0].mxu0
    %v401 = vadd.f32 0.0, %v400
    %v402 = vpop.f32.mrb[0].mxu0
    %v403 = vpop.f32.mrb[0].mxu0
    %v404 = vpop.f32.mrb[0].mxu0
    %405 = vdwg.mxu0
    %407 = vrot.lane.b32.xlu0 %v131, 124
    %v408 = vpop.permute.xlu0 %407
    %409 = vrot.lane.b32.xlu0 %v133, 92
    %v410 = vpop.permute.xlu0 %409
    %v412 = vsel %vm137, %v408, 0
    %v415 = vsel %vm137, %v410, 0
    %417 = vmatprep.subr.bf16.mxu0 0
    %418 = vmatpush1.bf16.xpose.msra.mxu0 %v415
    %419 = vmatprep.subr.bf16.mxu0 0
    %420 = vmatpush1.bf16.xpose.msra.mxu0 0
    %421 = vmatprep.subr.bf16.mxu0 0
    %422 = vmatpush1.bf16.xpose.msra.mxu0 0
    %423 = vmatprep.subr.bf16.mxu0 0
    %424 = vmatpush1.bf16.xpose.msra.mxu0 0
    %425 = vmatprep.subr.bf16.mxu0 0
    %426 = vmatpush1.bf16.xpose.msra.mxu0 0
    %427 = vmatprep.subr.bf16.mxu0 0
    %428 = vmatpush1.bf16.xpose.msra.mxu0 0
    %429 = vmatprep.subr.bf16.mxu0 0
    %430 = vmatpush1.bf16.xpose.msra.mxu0 0
    %431 = vmatprep.subr.bf16.mxu0 0
    %432 = vmatpush1.bf16.xpose.msra.mxu0 0
    %433 = vmatprep.subr.bf16.mxu0 0
    %434 = vmatpush1.bf16.xpose.msra.mxu0 0
    %435 = vmatprep.subr.bf16.mxu0 0
    %436 = vmatpush1.bf16.xpose.msra.mxu0 0
    %437 = vmatprep.subr.bf16.mxu0 0
    %438 = vmatpush1.bf16.xpose.msra.mxu0 0
    %439 = vmatprep.subr.bf16.mxu0 0
    %440 = vmatpush1.bf16.xpose.msra.mxu0 0
    %441 = vmatprep.subr.bf16.mxu0 0
    %442 = vmatpush1.bf16.xpose.msra.mxu0 0
    %443 = vmatprep.subr.bf16.mxu0 0
    %444 = vmatpush1.bf16.xpose.msra.mxu0 0
    %445 = vmatprep.subr.bf16.mxu0 0
    %446 = vmatpush1.bf16.xpose.msra.mxu0 0
    %447 = vmatprep.subr.bf16.mxu0 0
    %448 = vmatpush1.bf16.xpose.msra.mxu0 0
    %449 = vmatprep.mubr.bf16.mxu0 0
    %450 = vmatmul.mubr.bf16.gmra.mrb[0].mxu0 %v412
    %v451 = vpop.f32.mrb[0].mxu0
    %v452 = vadd.f32 0.0, %v451
    %v453 = vpop.f32.mrb[0].mxu0
    %v454 = vpop.f32.mrb[0].mxu0
    %v455 = vpop.f32.mrb[0].mxu0
    %456 = vdwg.mxu0
    %v457 = vsel %vm233, %v401, -inf
    %458 = vmax.xlane.f32.xlu0 %v457
    %v459 = vpop.xlane.xlu0 %458
    %v460 = vsel %vm233, %v452, -inf
    %461 = vmax.xlane.f32.xlu0 %v460
    %v462 = vpop.xlane.xlu0 %461
    %v463 = vsub.f32 %v401, %v459
    %v464 = vsub.f32 %v452, %v462
    %v465 = vmul.f32 %v463, 1.442695
    %v466 = vpow.pop %v465
    %v467 = vmul.f32 %v464, 1.442695
    %v468 = vpow.pop %v467
    %v469 = vsel %vm233, %v466, 0.0
    %470 = vadd.xlane.f32.xlu0 %v469
    %v471 = vpop.xlane.xlu0 %470
    %v472 = vsel %vm233, %v468, 0.0
    %473 = vadd.xlane.f32.xlu0 %v472
    %v474 = vpop.xlane.xlu0 %473
    %v475 = vrcp.pop %v471
    %v476 = vrcp.pop %v474
    %v477 = vmul.f32 %v466, %v475
    %v478 = vmul.f32 %v468, %v476
    %v479 = vpack.c.bf16 %v477, %v477
    %v480 = vpack.c.bf16 %v478, %v478
    %481 = vrot.lane.b32.xlu0 %v132, 60
    %v482 = vpop.permute.xlu0 %481
    %v484 = vsel %vm233, %v479, 0
    %v487 = vsel %vm263, %v482, 0
    %489 = vmatprep.subr.bf16.mxu0 0
    %490 = vmatpush1.bf16.msra.mxu0 %v487
    %491 = vmatprep.subr.bf16.mxu0 0
    %492 = vmatpush1.bf16.msra.mxu0 0
    %493 = vmatprep.subr.bf16.mxu0 0
    %494 = vmatpush1.bf16.msra.mxu0 0
    %495 = vmatprep.subr.bf16.mxu0 0
    %496 = vmatpush1.bf16.msra.mxu0 0
    %497 = vmatprep.subr.bf16.mxu0 0
    %498 = vmatpush1.bf16.msra.mxu0 0
    %499 = vmatprep.subr.bf16.mxu0 0
    %500 = vmatpush1.bf16.msra.mxu0 0
    %501 = vmatprep.subr.bf16.mxu0 0
    %502 = vmatpush1.bf16.msra.mxu0 0
    %503 = vmatprep.subr.bf16.mxu0 0
    %504 = vmatpush1.bf16.msra.mxu0 0
    %505 = vmatprep.subr.bf16.mxu0 0
    %506 = vmatpush1.bf16.msra.mxu0 0
    %507 = vmatprep.subr.bf16.mxu0 0
    %508 = vmatpush1.bf16.msra.mxu0 0
    %509 = vmatprep.subr.bf16.mxu0 0
    %510 = vmatpush1.bf16.msra.mxu0 0
    %511 = vmatprep.subr.bf16.mxu0 0
    %512 = vmatpush1.bf16.msra.mxu0 0
    %513 = vmatprep.subr.bf16.mxu0 0
    %514 = vmatpush1.bf16.msra.mxu0 0
    %515 = vmatprep.subr.bf16.mxu0 0
    %516 = vmatpush1.bf16.msra.mxu0 0
    %517 = vmatprep.subr.bf16.mxu0 0
    %518 = vmatpush1.bf16.msra.mxu0 0
    %519 = vmatprep.subr.bf16.mxu0 0
    %520 = vmatpush1.bf16.msra.mxu0 0
    %521 = vmatprep.mubr.bf16.mxu0 0
    %522 = vmatmul.mubr.bf16.gmra.mrb[0].mxu0 %v484
    %v523 = vpop.f32.mrb[0].mxu0
    %v524 = vadd.f32 0.0, %v523
    %v525 = vpop.f32.mrb[0].mxu0
    %v526 = vpop.f32.mrb[0].mxu0
    %v527 = vpop.f32.mrb[0].mxu0
    %528 = vdwg.mxu0
    %529 = vrot.lane.b32.xlu0 %v133, 60
    %v530 = vpop.permute.xlu0 %529
    %v532 = vsel %vm233, %v480, 0
    %v535 = vsel %vm263, %v530, 0
    %537 = vmatprep.subr.bf16.mxu0 0
    %538 = vmatpush1.bf16.msra.mxu0 %v535
    %539 = vmatprep.subr.bf16.mxu0 0
    %540 = vmatpush1.bf16.msra.mxu0 0
    %541 = vmatprep.subr.bf16.mxu0 0
    %542 = vmatpush1.bf16.msra.mxu0 0
    %543 = vmatprep.subr.bf16.mxu0 0
    %544 = vmatpush1.bf16.msra.mxu0 0
    %545 = vmatprep.subr.bf16.mxu0 0
    %546 = vmatpush1.bf16.msra.mxu0 0
    %547 = vmatprep.subr.bf16.mxu0 0
    %548 = vmatpush1.bf16.msra.mxu0 0
    %549 = vmatprep.subr.bf16.mxu0 0
    %550 = vmatpush1.bf16.msra.mxu0 0
    %551 = vmatprep.subr.bf16.mxu0 0
    %552 = vmatpush1.bf16.msra.mxu0 0
    %553 = vmatprep.subr.bf16.mxu0 0
    %554 = vmatpush1.bf16.msra.mxu0 0
    %555 = vmatprep.subr.bf16.mxu0 0
    %556 = vmatpush1.bf16.msra.mxu0 0
    %557 = vmatprep.subr.bf16.mxu0 0
    %558 = vmatpush1.bf16.msra.mxu0 0
    %559 = vmatprep.subr.bf16.mxu0 0
    %560 = vmatpush1.bf16.msra.mxu0 0
    %561 = vmatprep.subr.bf16.mxu0 0
    %562 = vmatpush1.bf16.msra.mxu0 0
    %563 = vmatprep.subr.bf16.mxu0 0
    %564 = vmatpush1.bf16.msra.mxu0 0
    %565 = vmatprep.subr.bf16.mxu0 0
    %566 = vmatpush1.bf16.msra.mxu0 0
    %567 = vmatprep.subr.bf16.mxu0 0
    %568 = vmatpush1.bf16.msra.mxu0 0
    %569 = vmatprep.mubr.bf16.mxu0 0
    %570 = vmatmul.mubr.bf16.gmra.mrb[0].mxu0 %v532
    %v571 = vpop.f32.mrb[0].mxu0
    %v572 = vadd.f32 0.0, %v571
    %v573 = vpop.f32.mrb[0].mxu0
    %v574 = vpop.f32.mrb[0].mxu0
    %v575 = vpop.f32.mrb[0].mxu0
    %576 = vdwg.mxu0
    %577 = vrot.lane.b32.xlu0 %v130, 120
    %v578 = vpop.permute.xlu0 %577
    %579 = vrot.lane.b32.xlu0 %v132, 88
    %v580 = vpop.permute.xlu0 %579
    %v582 = vsel %vm137, %v578, 0
    %v585 = vsel %vm137, %v580, 0
    %587 = vmatprep.subr.bf16.mxu0 0
    %588 = vmatpush1.bf16.xpose.msra.mxu0 %v585
    %589 = vmatprep.subr.bf16.mxu0 0
    %590 = vmatpush1.bf16.xpose.msra.mxu0 0
    %591 = vmatprep.subr.bf16.mxu0 0
    %592 = vmatpush1.bf16.xpose.msra.mxu0 0
    %593 = vmatprep.subr.bf16.mxu0 0
    %594 = vmatpush1.bf16.xpose.msra.mxu0 0
    %595 = vmatprep.subr.bf16.mxu0 0
    %596 = vmatpush1.bf16.xpose.msra.mxu0 0
    %597 = vmatprep.subr.bf16.mxu0 0
    %598 = vmatpush1.bf16.xpose.msra.mxu0 0
    %599 = vmatprep.subr.bf16.mxu0 0
    %600 = vmatpush1.bf16.xpose.msra.mxu0 0
    %601 = vmatprep.subr.bf16.mxu0 0
    %602 = vmatpush1.bf16.xpose.msra.mxu0 0
    %603 = vmatprep.subr.bf16.mxu0 0
    %604 = vmatpush1.bf16.xpose.msra.mxu0 0
    %605 = vmatprep.subr.bf16.mxu0 0
    %606 = vmatpush1.bf16.xpose.msra.mxu0 0
    %607 = vmatprep.subr.bf16.mxu0 0
    %608 = vmatpush1.bf16.xpose.msra.mxu0 0
    %609 = vmatprep.subr.bf16.mxu0 0
    %610 = vmatpush1.bf16.xpose.msra.mxu0 0
    %611 = vmatprep.subr.bf16.mxu0 0
    %612 = vmatpush1.bf16.xpose.msra.mxu0 0
    %613 = vmatprep.subr.bf16.mxu0 0
    %614 = vmatpush1.bf16.xpose.msra.mxu0 0
    %615 = vmatprep.subr.bf16.mxu0 0
    %616 = vmatpush1.bf16.xpose.msra.mxu0 0
    %617 = vmatprep.subr.bf16.mxu0 0
    %618 = vmatpush1.bf16.xpose.msra.mxu0 0
    %619 = vmatprep.mubr.bf16.mxu0 0
    %620 = vmatmul.mubr.bf16.gmra.mrb[0].mxu0 %v582
    %v621 = vpop.f32.mrb[0].mxu0
    %v622 = vadd.f32 0.0, %v621
    %v623 = vpop.f32.mrb[0].mxu0
    %v624 = vpop.f32.mrb[0].mxu0
    %v625 = vpop.f32.mrb[0].mxu0
    %626 = vdwg.mxu0
    %627 = vrot.lane.b32.xlu0 %v131, 120
    %v628 = vpop.permute.xlu0 %627
    %629 = vrot.lane.b32.xlu0 %v133, 88
    %v630 = vpop.permute.xlu0 %629
    %v632 = vsel %vm137, %v628, 0
    %v635 = vsel %vm137, %v630, 0
    %637 = vmatprep.subr.bf16.mxu0 0
    %638 = vmatpush1.bf16.xpose.msra.mxu0 %v635
    %639 = vmatprep.subr.bf16.mxu0 0
    %640 = vmatpush1.bf16.xpose.msra.mxu0 0
    %641 = vmatprep.subr.bf16.mxu0 0
    %642 = vmatpush1.bf16.xpose.msra.mxu0 0
    %643 = vmatprep.subr.bf16.mxu0 0
    %644 = vmatpush1.bf16.xpose.msra.mxu0 0
    %645 = vmatprep.subr.bf16.mxu0 0
    %646 = vmatpush1.bf16.xpose.msra.mxu0 0
    %647 = vmatprep.subr.bf16.mxu0 0
    %648 = vmatpush1.bf16.xpose.msra.mxu0 0
    %649 = vmatprep.subr.bf16.mxu0 0
    %650 = vmatpush1.bf16.xpose.msra.mxu0 0
    %651 = vmatprep.subr.bf16.mxu0 0
    %652 = vmatpush1.bf16.xpose.msra.mxu0 0
    %653 = vmatprep.subr.bf16.mxu0 0
    %654 = vmatpush1.bf16.xpose.msra.mxu0 0
    %655 = vmatprep.subr.bf16.mxu0 0
    %656 = vmatpush1.bf16.xpose.msra.mxu0 0
    %657 = vmatprep.subr.bf16.mxu0 0
    %658 = vmatpush1.bf16.xpose.msra.mxu0 0
    %659 = vmatprep.subr.bf16.mxu0 0
    %660 = vmatpush1.bf16.xpose.msra.mxu0 0
    %661 = vmatprep.subr.bf16.mxu0 0
    %662 = vmatpush1.bf16.xpose.msra.mxu0 0
    %663 = vmatprep.subr.bf16.mxu0 0
    %664 = vmatpush1.bf16.xpose.msra.mxu0 0
    %665 = vmatprep.subr.bf16.mxu0 0
    %666 = vmatpush1.bf16.xpose.msra.mxu0 0
    %667 = vmatprep.subr.bf16.mxu0 0
    %668 = vmatpush1.bf16.xpose.msra.mxu0 0
    %669 = vmatprep.mubr.bf16.mxu0 0
    %670 = vmatmul.mubr.bf16.gmra.mrb[0].mxu0 %v632
    %v671 = vpop.f32.mrb[0].mxu0
    %v672 = vadd.f32 0.0, %v671
    %v673 = vpop.f32.mrb[0].mxu0
    %v674 = vpop.f32.mrb[0].mxu0
    %v675 = vpop.f32.mrb[0].mxu0
    %676 = vdwg.mxu0
    %v677 = vsel %vm233, %v622, -inf
    %678 = vmax.xlane.f32.xlu0 %v677
    %v679 = vpop.xlane.xlu0 %678
    %v680 = vsel %vm233, %v672, -inf
    %681 = vmax.xlane.f32.xlu0 %v680
    %v682 = vpop.xlane.xlu0 %681
    %v683 = vsub.f32 %v622, %v679
    %v684 = vsub.f32 %v672, %v682
    %v685 = vmul.f32 %v683, 1.442695
    %v686 = vpow.pop %v685
    %v687 = vmul.f32 %v684, 1.442695
    %v688 = vpow.pop %v687
    %v689 = vsel %vm233, %v686, 0.0
    %690 = vadd.xlane.f32.xlu0 %v689
    %v691 = vpop.xlane.xlu0 %690
    %v692 = vsel %vm233, %v688, 0.0
    %693 = vadd.xlane.f32.xlu0 %v692
    %v694 = vpop.xlane.xlu0 %693
    %v695 = vrcp.pop %v691
    %v696 = vrcp.pop %v694
    %v697 = vmul.f32 %v686, %v695
    %v698 = vmul.f32 %v688, %v696
    %v699 = vpack.c.bf16 %v697, %v697
    %v700 = vpack.c.bf16 %v698, %v698
    %701 = vrot.lane.b32.xlu0 %v132, 56
    %v702 = vpop.permute.xlu0 %701
    %v704 = vsel %vm233, %v699, 0
    %v707 = vsel %vm263, %v702, 0
    %709 = vmatprep.subr.bf16.mxu0 0
    %710 = vmatpush1.bf16.msra.mxu0 %v707
    %711 = vmatprep.subr.bf16.mxu0 0
    %712 = vmatpush1.bf16.msra.mxu0 0
    %713 = vmatprep.subr.bf16.mxu0 0
    %714 = vmatpush1.bf16.msra.mxu0 0
    %715 = vmatprep.subr.bf16.mxu0 0
    %716 = vmatpush1.bf16.msra.mxu0 0
    %717 = vmatprep.subr.bf16.mxu0 0
    %718 = vmatpush1.bf16.msra.mxu0 0
    %719 = vmatprep.subr.bf16.mxu0 0
    %720 = vmatpush1.bf16.msra.mxu0 0
    %721 = vmatprep.subr.bf16.mxu0 0
    %722 = vmatpush1.bf16.msra.mxu0 0
    %723 = vmatprep.subr.bf16.mxu0 0
    %724 = vmatpush1.bf16.msra.mxu0 0
    %725 = vmatprep.subr.bf16.mxu0 0
    %726 = vmatpush1.bf16.msra.mxu0 0
    %727 = vmatprep.subr.bf16.mxu0 0
    %728 = vmatpush1.bf16.msra.mxu0 0
    %729 = vmatprep.subr.bf16.mxu0 0
    %730 = vmatpush1.bf16.msra.mxu0 0
    %731 = vmatprep.subr.bf16.mxu0 0
    %732 = vmatpush1.bf16.msra.mxu0 0
    %733 = vmatprep.subr.bf16.mxu0 0
    %734 = vmatpush1.bf16.msra.mxu0 0
    %735 = vmatprep.subr.bf16.mxu0 0
    %736 = vmatpush1.bf16.msra.mxu0 0
    %737 = vmatprep.subr.bf16.mxu0 0
    %738 = vmatpush1.bf16.msra.mxu0 0
    %739 = vmatprep.subr.bf16.mxu0 0
    %740 = vmatpush1.bf16.msra.mxu0 0
    %741 = vmatprep.mubr.bf16.mxu0 0
    %742 = vmatmul.mubr.bf16.gmra.mrb[0].mxu0 %v704
    %v743 = vpop.f32.mrb[0].mxu0
    %v744 = vadd.f32 0.0, %v743
    %v745 = vpop.f32.mrb[0].mxu0
    %v746 = vpop.f32.mrb[0].mxu0
    %v747 = vpop.f32.mrb[0].mxu0
    %748 = vdwg.mxu0
    %749 = vrot.lane.b32.xlu0 %v133, 56
    %v750 = vpop.permute.xlu0 %749
    %v752 = vsel %vm233, %v700, 0
    %v755 = vsel %vm263, %v750, 0
    %757 = vmatprep.subr.bf16.mxu0 0
    %758 = vmatpush1.bf16.msra.mxu0 %v755
    %759 = vmatprep.subr.bf16.mxu0 0
    %760 = vmatpush1.bf16.msra.mxu0 0
    %761 = vmatprep.subr.bf16.mxu0 0
    %762 = vmatpush1.bf16.msra.mxu0 0
    %763 = vmatprep.subr.bf16.mxu0 0
    %764 = vmatpush1.bf16.msra.mxu0 0
    %765 = vmatprep.subr.bf16.mxu0 0
    %766 = vmatpush1.bf16.msra.mxu0 0
    %767 = vmatprep.subr.bf16.mxu0 0
    %768 = vmatpush1.bf16.msra.mxu0 0
    %769 = vmatprep.subr.bf16.mxu0 0
    %770 = vmatpush1.bf16.msra.mxu0 0
    %771 = vmatprep.subr.bf16.mxu0 0
    %772 = vmatpush1.bf16.msra.mxu0 0
    %773 = vmatprep.subr.bf16.mxu0 0
    %774 = vmatpush1.bf16.msra.mxu0 0
    %775 = vmatprep.subr.bf16.mxu0 0
    %776 = vmatpush1.bf16.msra.mxu0 0
    %777 = vmatprep.subr.bf16.mxu0 0
    %778 = vmatpush1.bf16.msra.mxu0 0
    %779 = vmatprep.subr.bf16.mxu0 0
    %780 = vmatpush1.bf16.msra.mxu0 0
    %781 = vmatprep.subr.bf16.mxu0 0
    %782 = vmatpush1.bf16.msra.mxu0 0
    %783 = vmatprep.subr.bf16.mxu0 0
    %784 = vmatpush1.bf16.msra.mxu0 0
    %785 = vmatprep.subr.bf16.mxu0 0
    %786 = vmatpush1.bf16.msra.mxu0 0
    %787 = vmatprep.subr.bf16.mxu0 0
    %788 = vmatpush1.bf16.msra.mxu0 0
    %789 = vmatprep.mubr.bf16.mxu0 0
    %790 = vmatmul.mubr.bf16.gmra.mrb[0].mxu0 %v752
    %v791 = vpop.f32.mrb[0].mxu0
    %v792 = vadd.f32 0.0, %v791
    %v793 = vpop.f32.mrb[0].mxu0
    %v794 = vpop.f32.mrb[0].mxu0
    %v795 = vpop.f32.mrb[0].mxu0
    %796 = vdwg.mxu0
    %797 = vrot.lane.b32.xlu0 %v130, 116
    %v798 = vpop.permute.xlu0 %797
    %799 = vrot.lane.b32.xlu0 %v132, 84
    %v800 = vpop.permute.xlu0 %799
    %v802 = vsel %vm137, %v798, 0
    %v805 = vsel %vm137, %v800, 0
    %807 = vmatprep.subr.bf16.mxu0 0
    %808 = vmatpush1.bf16.xpose.msra.mxu0 %v805
    %809 = vmatprep.subr.bf16.mxu0 0
    %810 = vmatpush1.bf16.xpose.msra.mxu0 0
    %811 = vmatprep.subr.bf16.mxu0 0
    %812 = vmatpush1.bf16.xpose.msra.mxu0 0
    %813 = vmatprep.subr.bf16.mxu0 0
    %814 = vmatpush1.bf16.xpose.msra.mxu0 0
    %815 = vmatprep.subr.bf16.mxu0 0
    %816 = vmatpush1.bf16.xpose.msra.mxu0 0
    %817 = vmatprep.subr.bf16.mxu0 0
    %818 = vmatpush1.bf16.xpose.msra.mxu0 0
    %819 = vmatprep.subr.bf16.mxu0 0
    %820 = vmatpush1.bf16.xpose.msra.mxu0 0
    %821 = vmatprep.subr.bf16.mxu0 0
    %822 = vmatpush1.bf16.xpose.msra.mxu0 0
    %823 = vmatprep.subr.bf16.mxu0 0
    %824 = vmatpush1.bf16.xpose.msra.mxu0 0
    %825 = vmatprep.subr.bf16.mxu0 0
    %826 = vmatpush1.bf16.xpose.msra.mxu0 0
    %827 = vmatprep.subr.bf16.mxu0 0
    %828 = vmatpush1.bf16.xpose.msra.mxu0 0
    %829 = vmatprep.subr.bf16.mxu0 0
    %830 = vmatpush1.bf16.xpose.msra.mxu0 0
    %831 = vmatprep.subr.bf16.mxu0 0
    %832 = vmatpush1.bf16.xpose.msra.mxu0 0
    %833 = vmatprep.subr.bf16.mxu0 0
    %834 = vmatpush1.bf16.xpose.msra.mxu0 0
    %835 = vmatprep.subr.bf16.mxu0 0
    %836 = vmatpush1.bf16.xpose.msra.mxu0 0
    %837 = vmatprep.subr.bf16.mxu0 0
    %838 = vmatpush1.bf16.xpose.msra.mxu0 0
    %839 = vmatprep.mubr.bf16.mxu0 0
    %840 = vmatmul.mubr.bf16.gmra.mrb[0].mxu0 %v802
    %v841 = vpop.f32.mrb[0].mxu0
    %v842 = vadd.f32 0.0, %v841
    %v843 = vpop.f32.mrb[0].mxu0
    %v844 = vpop.f32.mrb[0].mxu0
    %v845 = vpop.f32.mrb[0].mxu0
    %846 = vdwg.mxu0
    %847 = vrot.lane.b32.xlu0 %v131, 116
    %v848 = vpop.permute.xlu0 %847
    %849 = vrot.lane.b32.xlu0 %v133, 84
    %v850 = vpop.permute.xlu0 %849
    %v852 = vsel %vm137, %v848, 0
    %v855 = vsel %vm137, %v850, 0
    %857 = vmatprep.subr.bf16.mxu0 0
    %858 = vmatpush1.bf16.xpose.msra.mxu0 %v855
    %859 = vmatprep.subr.bf16.mxu0 0
    %860 = vmatpush1.bf16.xpose.msra.mxu0 0
    %861 = vmatprep.subr.bf16.mxu0 0
    %862 = vmatpush1.bf16.xpose.msra.mxu0 0
    %863 = vmatprep.subr.bf16.mxu0 0
    %864 = vmatpush1.bf16.xpose.msra.mxu0 0
    %865 = vmatprep.subr.bf16.mxu0 0
    %866 = vmatpush1.bf16.xpose.msra.mxu0 0
    %867 = vmatprep.subr.bf16.mxu0 0
    %868 = vmatpush1.bf16.xpose.msra.mxu0 0
    %869 = vmatprep.subr.bf16.mxu0 0
    %870 = vmatpush1.bf16.xpose.msra.mxu0 0
    %871 = vmatprep.subr.bf16.mxu0 0
    %872 = vmatpush1.bf16.xpose.msra.mxu0 0
    %873 = vmatprep.subr.bf16.mxu0 0
    %874 = vmatpush1.bf16.xpose.msra.mxu0 0
    %875 = vmatprep.subr.bf16.mxu0 0
    %876 = vmatpush1.bf16.xpose.msra.mxu0 0
    %877 = vmatprep.subr.bf16.mxu0 0
    %878 = vmatpush1.bf16.xpose.msra.mxu0 0
    %879 = vmatprep.subr.bf16.mxu0 0
    %880 = vmatpush1.bf16.xpose.msra.mxu0 0
    %881 = vmatprep.subr.bf16.mxu0 0
    %882 = vmatpush1.bf16.xpose.msra.mxu0 0
    %883 = vmatprep.subr.bf16.mxu0 0
    %884 = vmatpush1.bf16.xpose.msra.mxu0 0
    %885 = vmatprep.subr.bf16.mxu0 0
    %886 = vmatpush1.bf16.xpose.msra.mxu0 0
    %887 = vmatprep.subr.bf16.mxu0 0
    %888 = vmatpush1.bf16.xpose.msra.mxu0 0
    %889 = vmatprep.mubr.bf16.mxu0 0
    %890 = vmatmul.mubr.bf16.gmra.mrb[0].mxu0 %v852
    %v891 = vpop.f32.mrb[0].mxu0
    %v892 = vadd.f32 0.0, %v891
    %v893 = vpop.f32.mrb[0].mxu0
    %v894 = vpop.f32.mrb[0].mxu0
    %v895 = vpop.f32.mrb[0].mxu0
    %896 = vdwg.mxu0
    %v897 = vsel %vm233, %v842, -inf
    %898 = vmax.xlane.f32.xlu0 %v897
    %v899 = vpop.xlane.xlu0 %898
    %v900 = vsel %vm233, %v892, -inf
    %901 = vmax.xlane.f32.xlu0 %v900
    %v902 = vpop.xlane.xlu0 %901
    %v903 = vsub.f32 %v842, %v899
    %v904 = vsub.f32 %v892, %v902
    %v905 = vmul.f32 %v903, 1.442695
    %v906 = vpow.pop %v905
    %v907 = vmul.f32 %v904, 1.442695
    %v908 = vpow.pop %v907
    %v909 = vsel %vm233, %v906, 0.0
    %910 = vadd.xlane.f32.xlu0 %v909
    %v911 = vpop.xlane.xlu0 %910
    %v912 = vsel %vm233, %v908, 0.0
    %913 = vadd.xlane.f32.xlu0 %v912
    %v914 = vpop.xlane.xlu0 %913
    %v915 = vrcp.pop %v911
    %v916 = vrcp.pop %v914
    %v917 = vmul.f32 %v906, %v915
    %v918 = vmul.f32 %v908, %v916
    %v919 = vpack.c.bf16 %v917, %v917
    %v920 = vpack.c.bf16 %v918, %v918
    %921 = vrot.lane.b32.xlu0 %v132, 52
    %v922 = vpop.permute.xlu0 %921
    %v924 = vsel %vm233, %v919, 0
    %v927 = vsel %vm263, %v922, 0
    %929 = vmatprep.subr.bf16.mxu0 0
    %930 = vmatpush1.bf16.msra.mxu0 %v927
    %931 = vmatprep.subr.bf16.mxu0 0
    %932 = vmatpush1.bf16.msra.mxu0 0
    %933 = vmatprep.subr.bf16.mxu0 0
    %934 = vmatpush1.bf16.msra.mxu0 0
    %935 = vmatprep.subr.bf16.mxu0 0
    %936 = vmatpush1.bf16.msra.mxu0 0
    %937 = vmatprep.subr.bf16.mxu0 0
    %938 = vmatpush1.bf16.msra.mxu0 0
    %939 = vmatprep.subr.bf16.mxu0 0
    %940 = vmatpush1.bf16.msra.mxu0 0
    %941 = vmatprep.subr.bf16.mxu0 0
    %942 = vmatpush1.bf16.msra.mxu0 0
    %943 = vmatprep.subr.bf16.mxu0 0
    %944 = vmatpush1.bf16.msra.mxu0 0
    %945 = vmatprep.subr.bf16.mxu0 0
    %946 = vmatpush1.bf16.msra.mxu0 0
    %947 = vmatprep.subr.bf16.mxu0 0
    %948 = vmatpush1.bf16.msra.mxu0 0
    %949 = vmatprep.subr.bf16.mxu0 0
    %950 = vmatpush1.bf16.msra.mxu0 0
    %951 = vmatprep.subr.bf16.mxu0 0
    %952 = vmatpush1.bf16.msra.mxu0 0
    %953 = vmatprep.subr.bf16.mxu0 0
    %954 = vmatpush1.bf16.msra.mxu0 0
    %955 = vmatprep.subr.bf16.mxu0 0
    %956 = vmatpush1.bf16.msra.mxu0 0
    %957 = vmatprep.subr.bf16.mxu0 0
    %958 = vmatpush1.bf16.msra.mxu0 0
    %959 = vmatprep.subr.bf16.mxu0 0
    %960 = vmatpush1.bf16.msra.mxu0 0
    %961 = vmatprep.mubr.bf16.mxu0 0
    %962 = vmatmul.mubr.bf16.gmra.mrb[0].mxu0 %v924
    %v963 = vpop.f32.mrb[0].mxu0
    %v964 = vadd.f32 0.0, %v963
    %v965 = vpop.f32.mrb[0].mxu0
    %v966 = vpop.f32.mrb[0].mxu0
    %v967 = vpop.f32.mrb[0].mxu0
    %968 = vdwg.mxu0
    %969 = vrot.lane.b32.xlu0 %v133, 52
    %v970 = vpop.permute.xlu0 %969
    %v972 = vsel %vm233, %v920, 0
    %v975 = vsel %vm263, %v970, 0
    %977 = vmatprep.subr.bf16.mxu0 0
    %978 = vmatpush1.bf16.msra.mxu0 %v975
    %979 = vmatprep.subr.bf16.mxu0 0
    %980 = vmatpush1.bf16.msra.mxu0 0
    %981 = vmatprep.subr.bf16.mxu0 0
    %982 = vmatpush1.bf16.msra.mxu0 0
    %983 = vmatprep.subr.bf16.mxu0 0
    %984 = vmatpush1.bf16.msra.mxu0 0
    %985 = vmatprep.subr.bf16.mxu0 0
    %986 = vmatpush1.bf16.msra.mxu0 0
    %987 = vmatprep.subr.bf16.mxu0 0
    %988 = vmatpush1.bf16.msra.mxu0 0
    %989 = vmatprep.subr.bf16.mxu0 0
    %990 = vmatpush1.bf16.msra.mxu0 0
    %991 = vmatprep.subr.bf16.mxu0 0
    %992 = vmatpush1.bf16.msra.mxu0 0
    %993 = vmatprep.subr.bf16.mxu0 0
    %994 = vmatpush1.bf16.msra.mxu0 0
    %995 = vmatprep.subr.bf16.mxu0 0
    %996 = vmatpush1.bf16.msra.mxu0 0
    %997 = vmatprep.subr.bf16.mxu0 0
    %998 = vmatpush1.bf16.msra.mxu0 0
    %999 = vmatprep.subr.bf16.mxu0 0
    %1000 = vmatpush1.bf16.msra.mxu0 0
    %1001 = vmatprep.subr.bf16.mxu0 0
    %1002 = vmatpush1.bf16.msra.mxu0 0
    %1003 = vmatprep.subr.bf16.mxu0 0
    %1004 = vmatpush1.bf16.msra.mxu0 0
    %1005 = vmatprep.subr.bf16.mxu0 0
    %1006 = vmatpush1.bf16.msra.mxu0 0
    %1007 = vmatprep.subr.bf16.mxu0 0
    %1008 = vmatpush1.bf16.msra.mxu0 0
    %1009 = vmatprep.mubr.bf16.mxu0 0
    %1010 = vmatmul.mubr.bf16.gmra.mrb[0].mxu0 %v972
    %v1011 = vpop.f32.mrb[0].mxu0
    %v1012 = vadd.f32 0.0, %v1011
    %v1013 = vpop.f32.mrb[0].mxu0
    %v1014 = vpop.f32.mrb[0].mxu0
    %v1015 = vpop.f32.mrb[0].mxu0
    %1016 = vdwg.mxu0
    %1017 = vrot.lane.b32.xlu0 %v130, 112
    %v1018 = vpop.permute.xlu0 %1017
    %1019 = vrot.lane.b32.xlu0 %v132, 80
    %v1020 = vpop.permute.xlu0 %1019
    %v1022 = vsel %vm137, %v1018, 0
    %v1025 = vsel %vm137, %v1020, 0
    %1027 = vmatprep.subr.bf16.mxu0 0
    %1028 = vmatpush1.bf16.xpose.msra.mxu0 %v1025
    %1029 = vmatprep.subr.bf16.mxu0 0
    %1030 = vmatpush1.bf16.xpose.msra.mxu0 0
    %1031 = vmatprep.subr.bf16.mxu0 0
    %1032 = vmatpush1.bf16.xpose.msra.mxu0 0
    %1033 = vmatprep.subr.bf16.mxu0 0
    %1034 = vmatpush1.bf16.xpose.msra.mxu0 0
    %1035 = vmatprep.subr.bf16.mxu0 0
    %1036 = vmatpush1.bf16.xpose.msra.mxu0 0
    %1037 = vmatprep.subr.bf16.mxu0 0
    %1038 = vmatpush1.bf16.xpose.msra.mxu0 0
    %1039 = vmatprep.subr.bf16.mxu0 0
    %1040 = vmatpush1.bf16.xpose.msra.mxu0 0
    %1041 = vmatprep.subr.bf16.mxu0 0
    %1042 = vmatpush1.bf16.xpose.msra.mxu0 0
    %1043 = vmatprep.subr.bf16.mxu0 0
    %1044 = vmatpush1.bf16.xpose.msra.mxu0 0
    %1045 = vmatprep.subr.bf16.mxu0 0
    %1046 = vmatpush1.bf16.xpose.msra.mxu0 0
    %1047 = vmatprep.subr.bf16.mxu0 0
    %1048 = vmatpush1.bf16.xpose.msra.mxu0 0
    %1049 = vmatprep.subr.bf16.mxu0 0
    %1050 = vmatpush1.bf16.xpose.msra.mxu0 0
    %1051 = vmatprep.subr.bf16.mxu0 0
    %1052 = vmatpush1.bf16.xpose.msra.mxu0 0
    %1053 = vmatprep.subr.bf16.mxu0 0
    %1054 = vmatpush1.bf16.xpose.msra.mxu0 0
    %1055 = vmatprep.subr.bf16.mxu0 0
    %1056 = vmatpush1.bf16.xpose.msra.mxu0 0
    %1057 = vmatprep.subr.bf16.mxu0 0
    %1058 = vmatpush1.bf16.xpose.msra.mxu0 0
    %1059 = vmatprep.mubr.bf16.mxu0 0
    %1060 = vmatmul.mubr.bf16.gmra.mrb[0].mxu0 %v1022
    %v1061 = vpop.f32.mrb[0].mxu0
    %v1062 = vadd.f32 0.0, %v1061
    %v1063 = vpop.f32.mrb[0].mxu0
    %v1064 = vpop.f32.mrb[0].mxu0
    %v1065 = vpop.f32.mrb[0].mxu0
    %1066 = vdwg.mxu0
    %1067 = vrot.lane.b32.xlu0 %v131, 112
    %v1068 = vpop.permute.xlu0 %1067
    %1069 = vrot.lane.b32.xlu0 %v133, 80
    %v1070 = vpop.permute.xlu0 %1069
    %v1072 = vsel %vm137, %v1068, 0
    %v1075 = vsel %vm137, %v1070, 0
    %1077 = vmatprep.subr.bf16.mxu0 0
    %1078 = vmatpush1.bf16.xpose.msra.mxu0 %v1075
    %1079 = vmatprep.subr.bf16.mxu0 0
    %1080 = vmatpush1.bf16.xpose.msra.mxu0 0
    %1081 = vmatprep.subr.bf16.mxu0 0
    %1082 = vmatpush1.bf16.xpose.msra.mxu0 0
    %1083 = vmatprep.subr.bf16.mxu0 0
    %1084 = vmatpush1.bf16.xpose.msra.mxu0 0
    %1085 = vmatprep.subr.bf16.mxu0 0
    %1086 = vmatpush1.bf16.xpose.msra.mxu0 0
    %1087 = vmatprep.subr.bf16.mxu0 0
    %1088 = vmatpush1.bf16.xpose.msra.mxu0 0
    %1089 = vmatprep.subr.bf16.mxu0 0
    %1090 = vmatpush1.bf16.xpose.msra.mxu0 0
    %1091 = vmatprep.subr.bf16.mxu0 0
    %1092 = vmatpush1.bf16.xpose.msra.mxu0 0
    %1093 = vmatprep.subr.bf16.mxu0 0
    %1094 = vmatpush1.bf16.xpose.msra.mxu0 0
    %1095 = vmatprep.subr.bf16.mxu0 0
    %1096 = vmatpush1.bf16.xpose.msra.mxu0 0
    %1097 = vmatprep.subr.bf16.mxu0 0
    %1098 = vmatpush1.bf16.xpose.msra.mxu0 0
    %1099 = vmatprep.subr.bf16.mxu0 0
    %1100 = vmatpush1.bf16.xpose.msra.mxu0 0
    %1101 = vmatprep.subr.bf16.mxu0 0
    %1102 = vmatpush1.bf16.xpose.msra.mxu0 0
    %1103 = vmatprep.subr.bf16.mxu0 0
    %1104 = vmatpush1.bf16.xpose.msra.mxu0 0
    %1105 = vmatprep.subr.bf16.mxu0 0
    %1106 = vmatpush1.bf16.xpose.msra.mxu0 0
    %1107 = vmatprep.subr.bf16.mxu0 0
    %1108 = vmatpush1.bf16.xpose.msra.mxu0 0
    %1109 = vmatprep.mubr.bf16.mxu0 0
    %1110 = vmatmul.mubr.bf16.gmra.mrb[0].mxu0 %v1072
    %v1111 = vpop.f32.mrb[0].mxu0
    %v1112 = vadd.f32 0.0, %v1111
    %v1113 = vpop.f32.mrb[0].mxu0
    %v1114 = vpop.f32.mrb[0].mxu0
    %v1115 = vpop.f32.mrb[0].mxu0
    %1116 = vdwg.mxu0
    %v1117 = vsel %vm233, %v1062, -inf
    %1118 = vmax.xlane.f32.xlu0 %v1117
    %v1119 = vpop.xlane.xlu0 %1118
    %v1120 = vsel %vm233, %v1112, -inf
    %1121 = vmax.xlane.f32.xlu0 %v1120
    %v1122 = vpop.xlane.xlu0 %1121
    %v1123 = vsub.f32 %v1062, %v1119
    %v1124 = vsub.f32 %v1112, %v1122
    %v1125 = vmul.f32 %v1123, 1.442695
    %v1126 = vpow.pop %v1125
    %v1127 = vmul.f32 %v1124, 1.442695
    %v1128 = vpow.pop %v1127
    %v1129 = vsel %vm233, %v1126, 0.0
    %1130 = vadd.xlane.f32.xlu0 %v1129
    %v1131 = vpop.xlane.xlu0 %1130
    %v1132 = vsel %vm233, %v1128, 0.0
    %1133 = vadd.xlane.f32.xlu0 %v1132
    %v1134 = vpop.xlane.xlu0 %1133
    %v1135 = vrcp.pop %v1131
    %v1136 = vrcp.pop %v1134
    %v1137 = vmul.f32 %v1126, %v1135
    %v1138 = vmul.f32 %v1128, %v1136
    %v1139 = vpack.c.bf16 %v1137, %v1137
    %v1140 = vpack.c.bf16 %v1138, %v1138
    %1141 = vrot.lane.b32.xlu0 %v132, 48
    %v1142 = vpop.permute.xlu0 %1141
    %v1144 = vsel %vm233, %v1139, 0
    %v1147 = vsel %vm263, %v1142, 0
    %1149 = vmatprep.subr.bf16.mxu0 0
    %1150 = vmatpush1.bf16.msra.mxu0 %v1147
    %1151 = vmatprep.subr.bf16.mxu0 0
    %1152 = vmatpush1.bf16.msra.mxu0 0
    %1153 = vmatprep.subr.bf16.mxu0 0
    %1154 = vmatpush1.bf16.msra.mxu0 0
    %1155 = vmatprep.subr.bf16.mxu0 0
    %1156 = vmatpush1.bf16.msra.mxu0 0
    %1157 = vmatprep.subr.bf16.mxu0 0
    %1158 = vmatpush1.bf16.msra.mxu0 0
    %1159 = vmatprep.subr.bf16.mxu0 0
    %1160 = vmatpush1.bf16.msra.mxu0 0
    %1161 = vmatprep.subr.bf16.mxu0 0
    %1162 = vmatpush1.bf16.msra.mxu0 0
    %1163 = vmatprep.subr.bf16.mxu0 0
    %1164 = vmatpush1.bf16.msra.mxu0 0
    %1165 = vmatprep.subr.bf16.mxu0 0
    %1166 = vmatpush1.bf16.msra.mxu0 0
    %1167 = vmatprep.subr.bf16.mxu0 0
    %1168 = vmatpush1.bf16.msra.mxu0 0
    %1169 = vmatprep.subr.bf16.mxu0 0
    %1170 = vmatpush1.bf16.msra.mxu0 0
    %1171 = vmatprep.subr.bf16.mxu0 0
    %1172 = vmatpush1.bf16.msra.mxu0 0
    %1173 = vmatprep.subr.bf16.mxu0 0
    %1174 = vmatpush1.bf16.msra.mxu0 0
    %1175 = vmatprep.subr.bf16.mxu0 0
    %1176 = vmatpush1.bf16.msra.mxu0 0
    %1177 = vmatprep.subr.bf16.mxu0 0
    %1178 = vmatpush1.bf16.msra.mxu0 0
    %1179 = vmatprep.subr.bf16.mxu0 0
    %1180 = vmatpush1.bf16.msra.mxu0 0
    %1181 = vmatprep.mubr.bf16.mxu0 0
    %1182 = vmatmul.mubr.bf16.gmra.mrb[0].mxu0 %v1144
    %v1183 = vpop.f32.mrb[0].mxu0
    %v1184 = vadd.f32 0.0, %v1183
    %v1185 = vpop.f32.mrb[0].mxu0
    %v1186 = vpop.f32.mrb[0].mxu0
    %v1187 = vpop.f32.mrb[0].mxu0
    %1188 = vdwg.mxu0
    %1189 = vrot.lane.b32.xlu0 %v133, 48
    %v1190 = vpop.permute.xlu0 %1189
    %v1192 = vsel %vm233, %v1140, 0
    %v1195 = vsel %vm263, %v1190, 0
    %1197 = vmatprep.subr.bf16.mxu0 0
    %1198 = vmatpush1.bf16.msra.mxu0 %v1195
    %1199 = vmatprep.subr.bf16.mxu0 0
    %1200 = vmatpush1.bf16.msra.mxu0 0
    %1201 = vmatprep.subr.bf16.mxu0 0
    %1202 = vmatpush1.bf16.msra.mxu0 0
    %1203 = vmatprep.subr.bf16.mxu0 0
    %1204 = vmatpush1.bf16.msra.mxu0 0
    %1205 = vmatprep.subr.bf16.mxu0 0
    %1206 = vmatpush1.bf16.msra.mxu0 0
    %1207 = vmatprep.subr.bf16.mxu0 0
    %1208 = vmatpush1.bf16.msra.mxu0 0
    %1209 = vmatprep.subr.bf16.mxu0 0
    %1210 = vmatpush1.bf16.msra.mxu0 0
    %1211 = vmatprep.subr.bf16.mxu0 0
    %1212 = vmatpush1.bf16.msra.mxu0 0
    %1213 = vmatprep.subr.bf16.mxu0 0
    %1214 = vmatpush1.bf16.msra.mxu0 0
    %1215 = vmatprep.subr.bf16.mxu0 0
    %1216 = vmatpush1.bf16.msra.mxu0 0
    %1217 = vmatprep.subr.bf16.mxu0 0
    %1218 = vmatpush1.bf16.msra.mxu0 0
    %1219 = vmatprep.subr.bf16.mxu0 0
    %1220 = vmatpush1.bf16.msra.mxu0 0
    %1221 = vmatprep.subr.bf16.mxu0 0
    %1222 = vmatpush1.bf16.msra.mxu0 0
    %1223 = vmatprep.subr.bf16.mxu0 0
    %1224 = vmatpush1.bf16.msra.mxu0 0
    %1225 = vmatprep.subr.bf16.mxu0 0
    %1226 = vmatpush1.bf16.msra.mxu0 0
    %1227 = vmatprep.subr.bf16.mxu0 0
    %1228 = vmatpush1.bf16.msra.mxu0 0
    %1229 = vmatprep.mubr.bf16.mxu0 0
    %1230 = vmatmul.mubr.bf16.gmra.mrb[0].mxu0 %v1192
    %v1231 = vpop.f32.mrb[0].mxu0
    %v1232 = vadd.f32 0.0, %v1231
    %v1233 = vpop.f32.mrb[0].mxu0
    %v1234 = vpop.f32.mrb[0].mxu0
    %v1235 = vpop.f32.mrb[0].mxu0
    %1236 = vdwg.mxu0
    %1237 = vrot.lane.b32.xlu0 %v130, 108
    %v1238 = vpop.permute.xlu0 %1237
    %1239 = vrot.lane.b32.xlu0 %v132, 76
    %v1240 = vpop.permute.xlu0 %1239
    %v1242 = vsel %vm137, %v1238, 0
    %v1245 = vsel %vm137, %v1240, 0
    %1247 = vmatprep.subr.bf16.mxu0 0
    %1248 = vmatpush1.bf16.xpose.msra.mxu0 %v1245
    %1249 = vmatprep.subr.bf16.mxu0 0
    %1250 = vmatpush1.bf16.xpose.msra.mxu0 0
    %1251 = vmatprep.subr.bf16.mxu0 0
    %1252 = vmatpush1.bf16.xpose.msra.mxu0 0
    %1253 = vmatprep.subr.bf16.mxu0 0
    %1254 = vmatpush1.bf16.xpose.msra.mxu0 0
    %1255 = vmatprep.subr.bf16.mxu0 0
    %1256 = vmatpush1.bf16.xpose.msra.mxu0 0
    %1257 = vmatprep.subr.bf16.mxu0 0
    %1258 = vmatpush1.bf16.xpose.msra.mxu0 0
    %1259 = vmatprep.subr.bf16.mxu0 0
    %1260 = vmatpush1.bf16.xpose.msra.mxu0 0
    %1261 = vmatprep.subr.bf16.mxu0 0
    %1262 = vmatpush1.bf16.xpose.msra.mxu0 0
    %1263 = vmatprep.subr.bf16.mxu0 0
    %1264 = vmatpush1.bf16.xpose.msra.mxu0 0
    %1265 = vmatprep.subr.bf16.mxu0 0
    %1266 = vmatpush1.bf16.xpose.msra.mxu0 0
    %1267 = vmatprep.subr.bf16.mxu0 0
    %1268 = vmatpush1.bf16.xpose.msra.mxu0 0
    %1269 = vmatprep.subr.bf16.mxu0 0
    %1270 = vmatpush1.bf16.xpose.msra.mxu0 0
    %1271 = vmatprep.subr.bf16.mxu0 0
    %1272 = vmatpush1.bf16.xpose.msra.mxu0 0
    %1273 = vmatprep.subr.bf16.mxu0 0
    %1274 = vmatpush1.bf16.xpose.msra.mxu0 0
    %1275 = vmatprep.subr.bf16.mxu0 0
    %1276 = vmatpush1.bf16.xpose.msra.mxu0 0
    %1277 = vmatprep.subr.bf16.mxu0 0
    %1278 = vmatpush1.bf16.xpose.msra.mxu0 0
    %1279 = vmatprep.mubr.bf16.mxu0 0
    %1280 = vmatmul.mubr.bf16.gmra.mrb[0].mxu0 %v1242
    %v1281 = vpop.f32.mrb[0].mxu0
    %v1282 = vadd.f32 0.0, %v1281
    %v1283 = vpop.f32.mrb[0].mxu0
    %v1284 = vpop.f32.mrb[0].mxu0
    %v1285 = vpop.f32.mrb[0].mxu0
    %1286 = vdwg.mxu0
    %1287 = vrot.lane.b32.xlu0 %v131, 108
    %v1288 = vpop.permute.xlu0 %1287
    %1289 = vrot.lane.b32.xlu0 %v133, 76
    %v1290 = vpop.permute.xlu0 %1289
    %v1292 = vsel %vm137, %v1288, 0
    %v1295 = vsel %vm137, %v1290, 0
    %1297 = vmatprep.subr.bf16.mxu0 0
    %1298 = vmatpush1.bf16.xpose.msra.mxu0 %v1295
    %1299 = vmatprep.subr.bf16.mxu0 0
    %1300 = vmatpush1.bf16.xpose.msra.mxu0 0
    %1301 = vmatprep.subr.bf16.mxu0 0
    %1302 = vmatpush1.bf16.xpose.msra.mxu0 0
    %1303 = vmatprep.subr.bf16.mxu0 0
    %1304 = vmatpush1.bf16.xpose.msra.mxu0 0
    %1305 = vmatprep.subr.bf16.mxu0 0
    %1306 = vmatpush1.bf16.xpose.msra.mxu0 0
    %1307 = vmatprep.subr.bf16.mxu0 0
    %1308 = vmatpush1.bf16.xpose.msra.mxu0 0
    %1309 = vmatprep.subr.bf16.mxu0 0
    %1310 = vmatpush1.bf16.xpose.msra.mxu0 0
    %1311 = vmatprep.subr.bf16.mxu0 0
    %1312 = vmatpush1.bf16.xpose.msra.mxu0 0
    %1313 = vmatprep.subr.bf16.mxu0 0
    %1314 = vmatpush1.bf16.xpose.msra.mxu0 0
    %1315 = vmatprep.subr.bf16.mxu0 0
    %1316 = vmatpush1.bf16.xpose.msra.mxu0 0
    %1317 = vmatprep.subr.bf16.mxu0 0
    %1318 = vmatpush1.bf16.xpose.msra.mxu0 0
    %1319 = vmatprep.subr.bf16.mxu0 0
    %1320 = vmatpush1.bf16.xpose.msra.mxu0 0
    %1321 = vmatprep.subr.bf16.mxu0 0
    %1322 = vmatpush1.bf16.xpose.msra.mxu0 0
    %1323 = vmatprep.subr.bf16.mxu0 0
    %1324 = vmatpush1.bf16.xpose.msra.mxu0 0
    %1325 = vmatprep.subr.bf16.mxu0 0
    %1326 = vmatpush1.bf16.xpose.msra.mxu0 0
    %1327 = vmatprep.subr.bf16.mxu0 0
    %1328 = vmatpush1.bf16.xpose.msra.mxu0 0
    %1329 = vmatprep.mubr.bf16.mxu0 0
    %1330 = vmatmul.mubr.bf16.gmra.mrb[0].mxu0 %v1292
    %v1331 = vpop.f32.mrb[0].mxu0
    %v1332 = vadd.f32 0.0, %v1331
    %v1333 = vpop.f32.mrb[0].mxu0
    %v1334 = vpop.f32.mrb[0].mxu0
    %v1335 = vpop.f32.mrb[0].mxu0
    %1336 = vdwg.mxu0
    %v1337 = vsel %vm233, %v1282, -inf
    %1338 = vmax.xlane.f32.xlu0 %v1337
    %v1339 = vpop.xlane.xlu0 %1338
    %v1340 = vsel %vm233, %v1332, -inf
    %1341 = vmax.xlane.f32.xlu0 %v1340
    %v1342 = vpop.xlane.xlu0 %1341
    %v1343 = vsub.f32 %v1282, %v1339
    %v1344 = vsub.f32 %v1332, %v1342
    %v1345 = vmul.f32 %v1343, 1.442695
    %v1346 = vpow.pop %v1345
    %v1347 = vmul.f32 %v1344, 1.442695
    %v1348 = vpow.pop %v1347
    %v1349 = vsel %vm233, %v1346, 0.0
    %1350 = vadd.xlane.f32.xlu0 %v1349
    %v1351 = vpop.xlane.xlu0 %1350
    %v1352 = vsel %vm233, %v1348, 0.0
    %1353 = vadd.xlane.f32.xlu0 %v1352
    %v1354 = vpop.xlane.xlu0 %1353
    %v1355 = vrcp.pop %v1351
    %v1356 = vrcp.pop %v1354
    %v1357 = vmul.f32 %v1346, %v1355
    %v1358 = vmul.f32 %v1348, %v1356
    %v1359 = vpack.c.bf16 %v1357, %v1357
    %v1360 = vpack.c.bf16 %v1358, %v1358
    %1361 = vrot.lane.b32.xlu0 %v132, 44
    %v1362 = vpop.permute.xlu0 %1361
    %v1364 = vsel %vm233, %v1359, 0
    %v1367 = vsel %vm263, %v1362, 0
    %1369 = vmatprep.subr.bf16.mxu0 0
    %1370 = vmatpush1.bf16.msra.mxu0 %v1367
    %1371 = vmatprep.subr.bf16.mxu0 0
    %1372 = vmatpush1.bf16.msra.mxu0 0
    %1373 = vmatprep.subr.bf16.mxu0 0
    %1374 = vmatpush1.bf16.msra.mxu0 0
    %1375 = vmatprep.subr.bf16.mxu0 0
    %1376 = vmatpush1.bf16.msra.mxu0 0
    %1377 = vmatprep.subr.bf16.mxu0 0
    %1378 = vmatpush1.bf16.msra.mxu0 0
    %1379 = vmatprep.subr.bf16.mxu0 0
    %1380 = vmatpush1.bf16.msra.mxu0 0
    %1381 = vmatprep.subr.bf16.mxu0 0
    %1382 = vmatpush1.bf16.msra.mxu0 0
    %1383 = vmatprep.subr.bf16.mxu0 0
    %1384 = vmatpush1.bf16.msra.mxu0 0
    %1385 = vmatprep.subr.bf16.mxu0 0
    %1386 = vmatpush1.bf16.msra.mxu0 0
    %1387 = vmatprep.subr.bf16.mxu0 0
    %1388 = vmatpush1.bf16.msra.mxu0 0
    %1389 = vmatprep.subr.bf16.mxu0 0
    %1390 = vmatpush1.bf16.msra.mxu0 0
    %1391 = vmatprep.subr.bf16.mxu0 0
    %1392 = vmatpush1.bf16.msra.mxu0 0
    %1393 = vmatprep.subr.bf16.mxu0 0
    %1394 = vmatpush1.bf16.msra.mxu0 0
    %1395 = vmatprep.subr.bf16.mxu0 0
    %1396 = vmatpush1.bf16.msra.mxu0 0
    %1397 = vmatprep.subr.bf16.mxu0 0
    %1398 = vmatpush1.bf16.msra.mxu0 0
    %1399 = vmatprep.subr.bf16.mxu0 0
    %1400 = vmatpush1.bf16.msra.mxu0 0
    %1401 = vmatprep.mubr.bf16.mxu0 0
    %1402 = vmatmul.mubr.bf16.gmra.mrb[0].mxu0 %v1364
    %v1403 = vpop.f32.mrb[0].mxu0
    %v1404 = vadd.f32 0.0, %v1403
    %v1405 = vpop.f32.mrb[0].mxu0
    %v1406 = vpop.f32.mrb[0].mxu0
    %v1407 = vpop.f32.mrb[0].mxu0
    %1408 = vdwg.mxu0
    %1409 = vrot.lane.b32.xlu0 %v133, 44
    %v1410 = vpop.permute.xlu0 %1409
    %v1412 = vsel %vm233, %v1360, 0
    %v1415 = vsel %vm263, %v1410, 0
    %1417 = vmatprep.subr.bf16.mxu0 0
    %1418 = vmatpush1.bf16.msra.mxu0 %v1415
    %1419 = vmatprep.subr.bf16.mxu0 0
    %1420 = vmatpush1.bf16.msra.mxu0 0
    %1421 = vmatprep.subr.bf16.mxu0 0
    %1422 = vmatpush1.bf16.msra.mxu0 0
    %1423 = vmatprep.subr.bf16.mxu0 0
    %1424 = vmatpush1.bf16.msra.mxu0 0
    %1425 = vmatprep.subr.bf16.mxu0 0
    %1426 = vmatpush1.bf16.msra.mxu0 0
    %1427 = vmatprep.subr.bf16.mxu0 0
    %1428 = vmatpush1.bf16.msra.mxu0 0
    %1429 = vmatprep.subr.bf16.mxu0 0
    %1430 = vmatpush1.bf16.msra.mxu0 0
    %1431 = vmatprep.subr.bf16.mxu0 0
    %1432 = vmatpush1.bf16.msra.mxu0 0
    %1433 = vmatprep.subr.bf16.mxu0 0
    %1434 = vmatpush1.bf16.msra.mxu0 0
    %1435 = vmatprep.subr.bf16.mxu0 0
    %1436 = vmatpush1.bf16.msra.mxu0 0
    %1437 = vmatprep.subr.bf16.mxu0 0
    %1438 = vmatpush1.bf16.msra.mxu0 0
    %1439 = vmatprep.subr.bf16.mxu0 0
    %1440 = vmatpush1.bf16.msra.mxu0 0
    %1441 = vmatprep.subr.bf16.mxu0 0
    %1442 = vmatpush1.bf16.msra.mxu0 0
    %1443 = vmatprep.subr.bf16.mxu0 0
    %1444 = vmatpush1.bf16.msra.mxu0 0
    %1445 = vmatprep.subr.bf16.mxu0 0
    %1446 = vmatpush1.bf16.msra.mxu0 0
    %1447 = vmatprep.subr.bf16.mxu0 0
    %1448 = vmatpush1.bf16.msra.mxu0 0
    %1449 = vmatprep.mubr.bf16.mxu0 0
    %1450 = vmatmul.mubr.bf16.gmra.mrb[0].mxu0 %v1412
    %v1451 = vpop.f32.mrb[0].mxu0
    %v1452 = vadd.f32 0.0, %v1451
    %v1453 = vpop.f32.mrb[0].mxu0
    %v1454 = vpop.f32.mrb[0].mxu0
    %v1455 = vpop.f32.mrb[0].mxu0
    %1456 = vdwg.mxu0
    %1457 = vrot.lane.b32.xlu0 %v130, 104
    %v1458 = vpop.permute.xlu0 %1457
    %1459 = vrot.lane.b32.xlu0 %v132, 72
    %v1460 = vpop.permute.xlu0 %1459
    %v1462 = vsel %vm137, %v1458, 0
    %v1465 = vsel %vm137, %v1460, 0
    %1467 = vmatprep.subr.bf16.mxu0 0
    %1468 = vmatpush1.bf16.xpose.msra.mxu0 %v1465
    %1469 = vmatprep.subr.bf16.mxu0 0
    %1470 = vmatpush1.bf16.xpose.msra.mxu0 0
    %1471 = vmatprep.subr.bf16.mxu0 0
    %1472 = vmatpush1.bf16.xpose.msra.mxu0 0
    %1473 = vmatprep.subr.bf16.mxu0 0
    %1474 = vmatpush1.bf16.xpose.msra.mxu0 0
    %1475 = vmatprep.subr.bf16.mxu0 0
    %1476 = vmatpush1.bf16.xpose.msra.mxu0 0
    %1477 = vmatprep.subr.bf16.mxu0 0
    %1478 = vmatpush1.bf16.xpose.msra.mxu0 0
    %1479 = vmatprep.subr.bf16.mxu0 0
    %1480 = vmatpush1.bf16.xpose.msra.mxu0 0
    %1481 = vmatprep.subr.bf16.mxu0 0
    %1482 = vmatpush1.bf16.xpose.msra.mxu0 0
    %1483 = vmatprep.subr.bf16.mxu0 0
    %1484 = vmatpush1.bf16.xpose.msra.mxu0 0
    %1485 = vmatprep.subr.bf16.mxu0 0
    %1486 = vmatpush1.bf16.xpose.msra.mxu0 0
    %1487 = vmatprep.subr.bf16.mxu0 0
    %1488 = vmatpush1.bf16.xpose.msra.mxu0 0
    %1489 = vmatprep.subr.bf16.mxu0 0
    %1490 = vmatpush1.bf16.xpose.msra.mxu0 0
    %1491 = vmatprep.subr.bf16.mxu0 0
    %1492 = vmatpush1.bf16.xpose.msra.mxu0 0
    %1493 = vmatprep.subr.bf16.mxu0 0
    %1494 = vmatpush1.bf16.xpose.msra.mxu0 0
    %1495 = vmatprep.subr.bf16.mxu0 0
    %1496 = vmatpush1.bf16.xpose.msra.mxu0 0
    %1497 = vmatprep.subr.bf16.mxu0 0
    %1498 = vmatpush1.bf16.xpose.msra.mxu0 0
    %1499 = vmatprep.mubr.bf16.mxu0 0
    %1500 = vmatmul.mubr.bf16.gmra.mrb[0].mxu0 %v1462
    %v1501 = vpop.f32.mrb[0].mxu0
    %v1502 = vadd.f32 0.0, %v1501
    %v1503 = vpop.f32.mrb[0].mxu0
    %v1504 = vpop.f32.mrb[0].mxu0
    %v1505 = vpop.f32.mrb[0].mxu0
    %1506 = vdwg.mxu0
    %1507 = vrot.lane.b32.xlu0 %v131, 104
    %v1508 = vpop.permute.xlu0 %1507
    %1509 = vrot.lane.b32.xlu0 %v133, 72
    %v1510 = vpop.permute.xlu0 %1509
    %v1512 = vsel %vm137, %v1508, 0
    %v1515 = vsel %vm137, %v1510, 0
    %1517 = vmatprep.subr.bf16.mxu0 0
    %1518 = vmatpush1.bf16.xpose.msra.mxu0 %v1515
    %1519 = vmatprep.subr.bf16.mxu0 0
    %1520 = vmatpush1.bf16.xpose.msra.mxu0 0
    %1521 = vmatprep.subr.bf16.mxu0 0
    %1522 = vmatpush1.bf16.xpose.msra.mxu0 0
    %1523 = vmatprep.subr.bf16.mxu0 0
    %1524 = vmatpush1.bf16.xpose.msra.mxu0 0
    %1525 = vmatprep.subr.bf16.mxu0 0
    %1526 = vmatpush1.bf16.xpose.msra.mxu0 0
    %1527 = vmatprep.subr.bf16.mxu0 0
    %1528 = vmatpush1.bf16.xpose.msra.mxu0 0
    %1529 = vmatprep.subr.bf16.mxu0 0
    %1530 = vmatpush1.bf16.xpose.msra.mxu0 0
    %1531 = vmatprep.subr.bf16.mxu0 0
    %1532 = vmatpush1.bf16.xpose.msra.mxu0 0
    %1533 = vmatprep.subr.bf16.mxu0 0
    %1534 = vmatpush1.bf16.xpose.msra.mxu0 0
    %1535 = vmatprep.subr.bf16.mxu0 0
    %1536 = vmatpush1.bf16.xpose.msra.mxu0 0
    %1537 = vmatprep.subr.bf16.mxu0 0
    %1538 = vmatpush1.bf16.xpose.msra.mxu0 0
    %1539 = vmatprep.subr.bf16.mxu0 0
    %1540 = vmatpush1.bf16.xpose.msra.mxu0 0
    %1541 = vmatprep.subr.bf16.mxu0 0
    %1542 = vmatpush1.bf16.xpose.msra.mxu0 0
    %1543 = vmatprep.subr.bf16.mxu0 0
    %1544 = vmatpush1.bf16.xpose.msra.mxu0 0
    %1545 = vmatprep.subr.bf16.mxu0 0
    %1546 = vmatpush1.bf16.xpose.msra.mxu0 0
    %1547 = vmatprep.subr.bf16.mxu0 0
    %1548 = vmatpush1.bf16.xpose.msra.mxu0 0
    %1549 = vmatprep.mubr.bf16.mxu0 0
    %1550 = vmatmul.mubr.bf16.gmra.mrb[0].mxu0 %v1512
    %v1551 = vpop.f32.mrb[0].mxu0
    %v1552 = vadd.f32 0.0, %v1551
    %v1553 = vpop.f32.mrb[0].mxu0
    %v1554 = vpop.f32.mrb[0].mxu0
    %v1555 = vpop.f32.mrb[0].mxu0
    %1556 = vdwg.mxu0
    %v1557 = vsel %vm233, %v1502, -inf
    %1558 = vmax.xlane.f32.xlu0 %v1557
    %v1559 = vpop.xlane.xlu0 %1558
    %v1560 = vsel %vm233, %v1552, -inf
    %1561 = vmax.xlane.f32.xlu0 %v1560
    %v1562 = vpop.xlane.xlu0 %1561
    %v1563 = vsub.f32 %v1502, %v1559
    %v1564 = vsub.f32 %v1552, %v1562
    %v1565 = vmul.f32 %v1563, 1.442695
    %v1566 = vpow.pop %v1565
    %v1567 = vmul.f32 %v1564, 1.442695
    %v1568 = vpow.pop %v1567
    %v1569 = vsel %vm233, %v1566, 0.0
    %1570 = vadd.xlane.f32.xlu0 %v1569
    %v1571 = vpop.xlane.xlu0 %1570
    %v1572 = vsel %vm233, %v1568, 0.0
    %1573 = vadd.xlane.f32.xlu0 %v1572
    %v1574 = vpop.xlane.xlu0 %1573
    %v1575 = vrcp.pop %v1571
    %v1576 = vrcp.pop %v1574
    %v1577 = vmul.f32 %v1566, %v1575
    %v1578 = vmul.f32 %v1568, %v1576
    %v1579 = vpack.c.bf16 %v1577, %v1577
    %v1580 = vpack.c.bf16 %v1578, %v1578
    %1581 = vrot.lane.b32.xlu0 %v132, 40
    %v1582 = vpop.permute.xlu0 %1581
    %v1584 = vsel %vm233, %v1579, 0
    %v1587 = vsel %vm263, %v1582, 0
    %1589 = vmatprep.subr.bf16.mxu0 0
    %1590 = vmatpush1.bf16.msra.mxu0 %v1587
    %1591 = vmatprep.subr.bf16.mxu0 0
    %1592 = vmatpush1.bf16.msra.mxu0 0
    %1593 = vmatprep.subr.bf16.mxu0 0
    %1594 = vmatpush1.bf16.msra.mxu0 0
    %1595 = vmatprep.subr.bf16.mxu0 0
    %1596 = vmatpush1.bf16.msra.mxu0 0
    %1597 = vmatprep.subr.bf16.mxu0 0
    %1598 = vmatpush1.bf16.msra.mxu0 0
    %1599 = vmatprep.subr.bf16.mxu0 0
    %1600 = vmatpush1.bf16.msra.mxu0 0
    %1601 = vmatprep.subr.bf16.mxu0 0
    %1602 = vmatpush1.bf16.msra.mxu0 0
    %1603 = vmatprep.subr.bf16.mxu0 0
    %1604 = vmatpush1.bf16.msra.mxu0 0
    %1605 = vmatprep.subr.bf16.mxu0 0
    %1606 = vmatpush1.bf16.msra.mxu0 0
    %1607 = vmatprep.subr.bf16.mxu0 0
    %1608 = vmatpush1.bf16.msra.mxu0 0
    %1609 = vmatprep.subr.bf16.mxu0 0
    %1610 = vmatpush1.bf16.msra.mxu0 0
    %1611 = vmatprep.subr.bf16.mxu0 0
    %1612 = vmatpush1.bf16.msra.mxu0 0
    %1613 = vmatprep.subr.bf16.mxu0 0
    %1614 = vmatpush1.bf16.msra.mxu0 0
    %1615 = vmatprep.subr.bf16.mxu0 0
    %1616 = vmatpush1.bf16.msra.mxu0 0
    %1617 = vmatprep.subr.bf16.mxu0 0
    %1618 = vmatpush1.bf16.msra.mxu0 0
    %1619 = vmatprep.subr.bf16.mxu0 0
    %1620 = vmatpush1.bf16.msra.mxu0 0
    %1621 = vmatprep.mubr.bf16.mxu0 0
    %1622 = vmatmul.mubr.bf16.gmra.mrb[0].mxu0 %v1584
    %v1623 = vpop.f32.mrb[0].mxu0
    %v1624 = vadd.f32 0.0, %v1623
    %v1625 = vpop.f32.mrb[0].mxu0
    %v1626 = vpop.f32.mrb[0].mxu0
    %v1627 = vpop.f32.mrb[0].mxu0
    %1628 = vdwg.mxu0
    %1629 = vrot.lane.b32.xlu0 %v133, 40
    %v1630 = vpop.permute.xlu0 %1629
    %v1632 = vsel %vm233, %v1580, 0
    %v1635 = vsel %vm263, %v1630, 0
    %1637 = vmatprep.subr.bf16.mxu0 0
    %1638 = vmatpush1.bf16.msra.mxu0 %v1635
    %1639 = vmatprep.subr.bf16.mxu0 0
    %1640 = vmatpush1.bf16.msra.mxu0 0
    %1641 = vmatprep.subr.bf16.mxu0 0
    %1642 = vmatpush1.bf16.msra.mxu0 0
    %1643 = vmatprep.subr.bf16.mxu0 0
    %1644 = vmatpush1.bf16.msra.mxu0 0
    %1645 = vmatprep.subr.bf16.mxu0 0
    %1646 = vmatpush1.bf16.msra.mxu0 0
    %1647 = vmatprep.subr.bf16.mxu0 0
    %1648 = vmatpush1.bf16.msra.mxu0 0
    %1649 = vmatprep.subr.bf16.mxu0 0
    %1650 = vmatpush1.bf16.msra.mxu0 0
    %1651 = vmatprep.subr.bf16.mxu0 0
    %1652 = vmatpush1.bf16.msra.mxu0 0
    %1653 = vmatprep.subr.bf16.mxu0 0
    %1654 = vmatpush1.bf16.msra.mxu0 0
    %1655 = vmatprep.subr.bf16.mxu0 0
    %1656 = vmatpush1.bf16.msra.mxu0 0
    %1657 = vmatprep.subr.bf16.mxu0 0
    %1658 = vmatpush1.bf16.msra.mxu0 0
    %1659 = vmatprep.subr.bf16.mxu0 0
    %1660 = vmatpush1.bf16.msra.mxu0 0
    %1661 = vmatprep.subr.bf16.mxu0 0
    %1662 = vmatpush1.bf16.msra.mxu0 0
    %1663 = vmatprep.subr.bf16.mxu0 0
    %1664 = vmatpush1.bf16.msra.mxu0 0
    %1665 = vmatprep.subr.bf16.mxu0 0
    %1666 = vmatpush1.bf16.msra.mxu0 0
    %1667 = vmatprep.subr.bf16.mxu0 0
    %1668 = vmatpush1.bf16.msra.mxu0 0
    %1669 = vmatprep.mubr.bf16.mxu0 0
    %1670 = vmatmul.mubr.bf16.gmra.mrb[0].mxu0 %v1632
    %v1671 = vpop.f32.mrb[0].mxu0
    %v1672 = vadd.f32 0.0, %v1671
    %v1673 = vpop.f32.mrb[0].mxu0
    %v1674 = vpop.f32.mrb[0].mxu0
    %v1675 = vpop.f32.mrb[0].mxu0
    %1676 = vdwg.mxu0
    %1677 = vrot.lane.b32.xlu0 %v130, 100
    %v1678 = vpop.permute.xlu0 %1677
    %1679 = vrot.lane.b32.xlu0 %v132, 68
    %v1680 = vpop.permute.xlu0 %1679
    %v1682 = vsel %vm137, %v1678, 0
    %v1685 = vsel %vm137, %v1680, 0
    %1687 = vmatprep.subr.bf16.mxu0 0
    %1688 = vmatpush1.bf16.xpose.msra.mxu0 %v1685
    %1689 = vmatprep.subr.bf16.mxu0 0
    %1690 = vmatpush1.bf16.xpose.msra.mxu0 0
    %1691 = vmatprep.subr.bf16.mxu0 0
    %1692 = vmatpush1.bf16.xpose.msra.mxu0 0
    %1693 = vmatprep.subr.bf16.mxu0 0
    %1694 = vmatpush1.bf16.xpose.msra.mxu0 0
    %1695 = vmatprep.subr.bf16.mxu0 0
    %1696 = vmatpush1.bf16.xpose.msra.mxu0 0
    %1697 = vmatprep.subr.bf16.mxu0 0
    %1698 = vmatpush1.bf16.xpose.msra.mxu0 0
    %1699 = vmatprep.subr.bf16.mxu0 0
    %1700 = vmatpush1.bf16.xpose.msra.mxu0 0
    %1701 = vmatprep.subr.bf16.mxu0 0
    %1702 = vmatpush1.bf16.xpose.msra.mxu0 0
    %1703 = vmatprep.subr.bf16.mxu0 0
    %1704 = vmatpush1.bf16.xpose.msra.mxu0 0
    %1705 = vmatprep.subr.bf16.mxu0 0
    %1706 = vmatpush1.bf16.xpose.msra.mxu0 0
    %1707 = vmatprep.subr.bf16.mxu0 0
    %1708 = vmatpush1.bf16.xpose.msra.mxu0 0
    %1709 = vmatprep.subr.bf16.mxu0 0
    %1710 = vmatpush1.bf16.xpose.msra.mxu0 0
    %1711 = vmatprep.subr.bf16.mxu0 0
    %1712 = vmatpush1.bf16.xpose.msra.mxu0 0
    %1713 = vmatprep.subr.bf16.mxu0 0
    %1714 = vmatpush1.bf16.xpose.msra.mxu0 0
    %1715 = vmatprep.subr.bf16.mxu0 0
    %1716 = vmatpush1.bf16.xpose.msra.mxu0 0
    %1717 = vmatprep.subr.bf16.mxu0 0
    %1718 = vmatpush1.bf16.xpose.msra.mxu0 0
    %1719 = vmatprep.mubr.bf16.mxu0 0
    %1720 = vmatmul.mubr.bf16.gmra.mrb[0].mxu0 %v1682
    %v1721 = vpop.f32.mrb[0].mxu0
    %v1722 = vadd.f32 0.0, %v1721
    %v1723 = vpop.f32.mrb[0].mxu0
    %v1724 = vpop.f32.mrb[0].mxu0
    %v1725 = vpop.f32.mrb[0].mxu0
    %1726 = vdwg.mxu0
    %1727 = vrot.lane.b32.xlu0 %v131, 100
    %v1728 = vpop.permute.xlu0 %1727
    %1729 = vrot.lane.b32.xlu0 %v133, 68
    %v1730 = vpop.permute.xlu0 %1729
    %v1732 = vsel %vm137, %v1728, 0
    %v1735 = vsel %vm137, %v1730, 0
    %1737 = vmatprep.subr.bf16.mxu0 0
    %1738 = vmatpush1.bf16.xpose.msra.mxu0 %v1735
    %1739 = vmatprep.subr.bf16.mxu0 0
    %1740 = vmatpush1.bf16.xpose.msra.mxu0 0
    %1741 = vmatprep.subr.bf16.mxu0 0
    %1742 = vmatpush1.bf16.xpose.msra.mxu0 0
    %1743 = vmatprep.subr.bf16.mxu0 0
    %1744 = vmatpush1.bf16.xpose.msra.mxu0 0
    %1745 = vmatprep.subr.bf16.mxu0 0
    %1746 = vmatpush1.bf16.xpose.msra.mxu0 0
    %1747 = vmatprep.subr.bf16.mxu0 0
    %1748 = vmatpush1.bf16.xpose.msra.mxu0 0
    %1749 = vmatprep.subr.bf16.mxu0 0
    %1750 = vmatpush1.bf16.xpose.msra.mxu0 0
    %1751 = vmatprep.subr.bf16.mxu0 0
    %1752 = vmatpush1.bf16.xpose.msra.mxu0 0
    %1753 = vmatprep.subr.bf16.mxu0 0
    %1754 = vmatpush1.bf16.xpose.msra.mxu0 0
    %1755 = vmatprep.subr.bf16.mxu0 0
    %1756 = vmatpush1.bf16.xpose.msra.mxu0 0
    %1757 = vmatprep.subr.bf16.mxu0 0
    %1758 = vmatpush1.bf16.xpose.msra.mxu0 0
    %1759 = vmatprep.subr.bf16.mxu0 0
    %1760 = vmatpush1.bf16.xpose.msra.mxu0 0
    %1761 = vmatprep.subr.bf16.mxu0 0
    %1762 = vmatpush1.bf16.xpose.msra.mxu0 0
    %1763 = vmatprep.subr.bf16.mxu0 0
    %1764 = vmatpush1.bf16.xpose.msra.mxu0 0
    %1765 = vmatprep.subr.bf16.mxu0 0
    %1766 = vmatpush1.bf16.xpose.msra.mxu0 0
    %1767 = vmatprep.subr.bf16.mxu0 0
    %1768 = vmatpush1.bf16.xpose.msra.mxu0 0
    %1769 = vmatprep.mubr.bf16.mxu0 0
    %1770 = vmatmul.mubr.bf16.gmra.mrb[0].mxu0 %v1732
    %v1771 = vpop.f32.mrb[0].mxu0
    %v1772 = vadd.f32 0.0, %v1771
    %v1773 = vpop.f32.mrb[0].mxu0
    %v1774 = vpop.f32.mrb[0].mxu0
    %v1775 = vpop.f32.mrb[0].mxu0
    %1776 = vdwg.mxu0
    %v1777 = vsel %vm233, %v1722, -inf
    %1778 = vmax.xlane.f32.xlu0 %v1777
    %v1779 = vpop.xlane.xlu0 %1778
    %v1780 = vsel %vm233, %v1772, -inf
    %1781 = vmax.xlane.f32.xlu0 %v1780
    %v1782 = vpop.xlane.xlu0 %1781
    %v1783 = vsub.f32 %v1722, %v1779
    %v1784 = vsub.f32 %v1772, %v1782
    %v1785 = vmul.f32 %v1783, 1.442695
    %v1786 = vpow.pop %v1785
    %v1787 = vmul.f32 %v1784, 1.442695
    %v1788 = vpow.pop %v1787
    %v1789 = vsel %vm233, %v1786, 0.0
    %1790 = vadd.xlane.f32.xlu0 %v1789
    %v1791 = vpop.xlane.xlu0 %1790
    %v1792 = vsel %vm233, %v1788, 0.0
    %1793 = vadd.xlane.f32.xlu0 %v1792
    %v1794 = vpop.xlane.xlu0 %1793
    %v1795 = vrcp.pop %v1791
    %v1796 = vrcp.pop %v1794
    %v1797 = vmul.f32 %v1786, %v1795
    %v1798 = vmul.f32 %v1788, %v1796
    %v1799 = vpack.c.bf16 %v1797, %v1797
    %v1800 = vpack.c.bf16 %v1798, %v1798
    %1801 = vrot.lane.b32.xlu0 %v132, 36
    %v1802 = vpop.permute.xlu0 %1801
    %v1804 = vsel %vm233, %v1799, 0
    %v1807 = vsel %vm263, %v1802, 0
    %1809 = vmatprep.subr.bf16.mxu0 0
    %1810 = vmatpush1.bf16.msra.mxu0 %v1807
    %1811 = vmatprep.subr.bf16.mxu0 0
    %1812 = vmatpush1.bf16.msra.mxu0 0
    %1813 = vmatprep.subr.bf16.mxu0 0
    %1814 = vmatpush1.bf16.msra.mxu0 0
    %1815 = vmatprep.subr.bf16.mxu0 0
    %1816 = vmatpush1.bf16.msra.mxu0 0
    %1817 = vmatprep.subr.bf16.mxu0 0
    %1818 = vmatpush1.bf16.msra.mxu0 0
    %1819 = vmatprep.subr.bf16.mxu0 0
    %1820 = vmatpush1.bf16.msra.mxu0 0
    %1821 = vmatprep.subr.bf16.mxu0 0
    %1822 = vmatpush1.bf16.msra.mxu0 0
    %1823 = vmatprep.subr.bf16.mxu0 0
    %1824 = vmatpush1.bf16.msra.mxu0 0
    %1825 = vmatprep.subr.bf16.mxu0 0
    %1826 = vmatpush1.bf16.msra.mxu0 0
    %1827 = vmatprep.subr.bf16.mxu0 0
    %1828 = vmatpush1.bf16.msra.mxu0 0
    %1829 = vmatprep.subr.bf16.mxu0 0
    %1830 = vmatpush1.bf16.msra.mxu0 0
    %1831 = vmatprep.subr.bf16.mxu0 0
    %1832 = vmatpush1.bf16.msra.mxu0 0
    %1833 = vmatprep.subr.bf16.mxu0 0
    %1834 = vmatpush1.bf16.msra.mxu0 0
    %1835 = vmatprep.subr.bf16.mxu0 0
    %1836 = vmatpush1.bf16.msra.mxu0 0
    %1837 = vmatprep.subr.bf16.mxu0 0
    %1838 = vmatpush1.bf16.msra.mxu0 0
    %1839 = vmatprep.subr.bf16.mxu0 0
    %1840 = vmatpush1.bf16.msra.mxu0 0
    %1841 = vmatprep.mubr.bf16.mxu0 0
    %1842 = vmatmul.mubr.bf16.gmra.mrb[0].mxu0 %v1804
    %v1843 = vpop.f32.mrb[0].mxu0
    %v1844 = vadd.f32 0.0, %v1843
    %v1845 = vpop.f32.mrb[0].mxu0
    %v1846 = vpop.f32.mrb[0].mxu0
    %v1847 = vpop.f32.mrb[0].mxu0
    %1848 = vdwg.mxu0
    %1849 = vrot.lane.b32.xlu0 %v133, 36
    %v1850 = vpop.permute.xlu0 %1849
    %v1852 = vsel %vm233, %v1800, 0
    %v1855 = vsel %vm263, %v1850, 0
    %1857 = vmatprep.subr.bf16.mxu0 0
    %1858 = vmatpush1.bf16.msra.mxu0 %v1855
    %1859 = vmatprep.subr.bf16.mxu0 0
    %1860 = vmatpush1.bf16.msra.mxu0 0
    %1861 = vmatprep.subr.bf16.mxu0 0
    %1862 = vmatpush1.bf16.msra.mxu0 0
    %1863 = vmatprep.subr.bf16.mxu0 0
    %1864 = vmatpush1.bf16.msra.mxu0 0
    %1865 = vmatprep.subr.bf16.mxu0 0
    %1866 = vmatpush1.bf16.msra.mxu0 0
    %1867 = vmatprep.subr.bf16.mxu0 0
    %1868 = vmatpush1.bf16.msra.mxu0 0
    %1869 = vmatprep.subr.bf16.mxu0 0
    %1870 = vmatpush1.bf16.msra.mxu0 0
    %1871 = vmatprep.subr.bf16.mxu0 0
    %1872 = vmatpush1.bf16.msra.mxu0 0
    %1873 = vmatprep.subr.bf16.mxu0 0
    %1874 = vmatpush1.bf16.msra.mxu0 0
    %1875 = vmatprep.subr.bf16.mxu0 0
    %1876 = vmatpush1.bf16.msra.mxu0 0
    %1877 = vmatprep.subr.bf16.mxu0 0
    %1878 = vmatpush1.bf16.msra.mxu0 0
    %1879 = vmatprep.subr.bf16.mxu0 0
    %1880 = vmatpush1.bf16.msra.mxu0 0
    %1881 = vmatprep.subr.bf16.mxu0 0
    %1882 = vmatpush1.bf16.msra.mxu0 0
    %1883 = vmatprep.subr.bf16.mxu0 0
    %1884 = vmatpush1.bf16.msra.mxu0 0
    %1885 = vmatprep.subr.bf16.mxu0 0
    %1886 = vmatpush1.bf16.msra.mxu0 0
    %1887 = vmatprep.subr.bf16.mxu0 0
    %1888 = vmatpush1.bf16.msra.mxu0 0
    %1889 = vmatprep.mubr.bf16.mxu0 0
    %1890 = vmatmul.mubr.bf16.gmra.mrb[0].mxu0 %v1852
    %v1891 = vpop.f32.mrb[0].mxu0
    %v1892 = vadd.f32 0.0, %v1891
    %v1893 = vpop.f32.mrb[0].mxu0
    %v1894 = vpop.f32.mrb[0].mxu0
    %v1895 = vpop.f32.mrb[0].mxu0
    %1896 = vdwg.mxu0
    %1899 = vrot.lane.b32.xlu0 %v524, 4
    %v1900 = vpop.permute.xlu0 %1899
    %1901 = vrot.lane.b32.xlu0 %v572, 4
    %v1902 = vpop.permute.xlu0 %1901
    %1907 = vrot.lane.b32.xlu0 %v744, 8
    %v1908 = vpop.permute.xlu0 %1907
    %1909 = vrot.lane.b32.xlu0 %v792, 8
    %v1910 = vpop.permute.xlu0 %1909
    %1915 = vrot.lane.b32.xlu0 %v964, 12
    %v1916 = vpop.permute.xlu0 %1915
    %1917 = vrot.lane.b32.xlu0 %v1012, 12
    %v1918 = vpop.permute.xlu0 %1917
    %1923 = vrot.lane.b32.xlu0 %v1184, 16
    %v1924 = vpop.permute.xlu0 %1923
    %1925 = vrot.lane.b32.xlu0 %v1232, 16
    %v1926 = vpop.permute.xlu0 %1925
    %1931 = vrot.lane.b32.xlu0 %v1404, 20
    %v1932 = vpop.permute.xlu0 %1931
    %1933 = vrot.lane.b32.xlu0 %v1452, 20
    %v1934 = vpop.permute.xlu0 %1933
    %1939 = vrot.lane.b32.xlu0 %v1624, 24
    %v1940 = vpop.permute.xlu0 %1939
    %1941 = vrot.lane.b32.xlu0 %v1672, 24
    %v1942 = vpop.permute.xlu0 %1941
    %1947 = vrot.lane.b32.xlu0 %v1844, 28
    %v1948 = vpop.permute.xlu0 %1947
    %1949 = vrot.lane.b32.xlu0 %v1892, 28
    %v1950 = vpop.permute.xlu0 %1949
    %v1953 = vsel %vm137, %v302, %v1900
    %v1954 = vsel %vm137, %v350, %v1902
    %v1955 = vsel %vm233, %v1953, %v1908
    %v1956 = vsel %vm233, %v1954, %v1910
    %vm1957 = vcmask 97280
    %v1958 = vsel %vm1957, %v1955, %v1916
    %v1959 = vsel %vm1957, %v1956, %v1918
    %vm1960 = vcmask 130048
    %v1961 = vsel %vm1960, %v1958, %v1924
    %v1962 = vsel %vm1960, %v1959, %v1926
    %vm1963 = vcmask 162816
    %v1964 = vsel %vm1963, %v1961, %v1932
    %v1965 = vsel %vm1963, %v1962, %v1934
    %vm1966 = vcmask 195584
    %v1967 = vsel %vm1966, %v1964, %v1940
    %v1968 = vsel %vm1966, %v1965, %v1942
    %vm1969 = vcmask 228352
    %v1970 = vsel %vm1969, %v1967, %v1948
    %v1971 = vsel %vm1969, %v1968, %v1950
    %v1972 = vpack.c.bf16 %v1971, %v1970
    %v1973 = vld [vmem:[#allocation7] sm:$0xf]
    %v1974 = vld [vmem:[#allocation7 + $0x4] sm:$0xf]
    %v1975 = vld [vmem:[#allocation7 + $0x8] sm:$0xf]
    %v1976 = vld [vmem:[#allocation7 + $0xc] sm:$0xf]
    %v1977 = vld [vmem:[%s3] sm:$0x1]
    %v1979 = vlaneseq
    %v1980 = vshrl.u32 %v1979, 7
    %v1981 = vsub.s32 0, %v1980
    %v1982 = vrot.slane %v1977, %v1981
    %v1988 = vunpack.c.l.b16 %v1973
    %v1989 = vunpack.c.l.b16 %v1974
    %v1990 = vunpack.c.l.b16 %v1975
    %v1991 = vunpack.c.l.b16 %v1976
    %v1992 = vpack.c.b16 %v1989, %v1988
    %v1993 = vpack.c.b16 %v1991, %v1990
    %v1997 = vsel %vm83, %v1972, 0
    %1999 = vmatprep.subr.bf16.mxu0 0
    %2000 = vmatpush1.bf16.msra.mxu0 %v1992
    %2001 = vmatprep.subr.bf16.mxu0 0
    %2002 = vmatpush1.bf16.msra.mxu0 %v1993
    %2003 = vmatprep.subr.bf16.mxu0 0
    %2004 = vmatpush1.bf16.msra.mxu0 0
    %2005 = vmatprep.subr.bf16.mxu0 0
    %2006 = vmatpush1.bf16.msra.mxu0 0
    %2007 = vmatprep.subr.bf16.mxu0 0
    %2008 = vmatpush1.bf16.msra.mxu0 0
    %2009 = vmatprep.subr.bf16.mxu0 0
    %2010 = vmatpush1.bf16.msra.mxu0 0
    %2011 = vmatprep.subr.bf16.mxu0 0
    %2012 = vmatpush1.bf16.msra.mxu0 0
    %2013 = vmatprep.subr.bf16.mxu0 0
    %2014 = vmatpush1.bf16.msra.mxu0 0
    %2015 = vmatprep.subr.bf16.mxu0 0
    %2016 = vmatpush1.bf16.msra.mxu0 0
    %2017 = vmatprep.subr.bf16.mxu0 0
    %2018 = vmatpush1.bf16.msra.mxu0 0
    %2019 = vmatprep.subr.bf16.mxu0 0
    %2020 = vmatpush1.bf16.msra.mxu0 0
    %2021 = vmatprep.subr.bf16.mxu0 0
    %2022 = vmatpush1.bf16.msra.mxu0 0
    %2023 = vmatprep.subr.bf16.mxu0 0
    %2024 = vmatpush1.bf16.msra.mxu0 0
    %2025 = vmatprep.subr.bf16.mxu0 0
    %2026 = vmatpush1.bf16.msra.mxu0 0
    %2027 = vmatprep.subr.bf16.mxu0 0
    %2028 = vmatpush1.bf16.msra.mxu0 0
    %2029 = vmatprep.subr.bf16.mxu0 0
    %2030 = vmatpush1.bf16.msra.mxu0 0
    %2031 = vmatprep.mubr.bf16.mxu0 0
    %2032 = vmatmul.mubr.bf16.gmra.mrb[0].mxu0 %v1997
    %v2033 = vpop.f32.mrb[0].mxu0
    %v2034 = vadd.f32 %v1982, %v2033
    %v2035 = vpop.f32.mrb[0].mxu0
    %v2036 = vpop.f32.mrb[0].mxu0
    %v2037 = vadd.f32 %v1982, %v2036
    %v2038 = vpop.f32.mrb[0].mxu0
    %2039 = vdwg.mxu0
    %2040 = vst.msk [vmem:[#allocation8] sm:$0xff] %vm83, %v2034
    %2041 = vst.msk [vmem:[#allocation8 + $0x8] sm:$0xff] %vm83, %v2037
    // Predicated region
    $region30: #{tpu_custom_call.1} parent=1 // pred_check
      _
    $region31: #{tpu_custom_call.1} parent=1 // pred_check_branch
      %2043 = sbr.rel (0) target = $region33
    $region32: #{tpu_custom_call.1} parent=1 // pred_region
      %s2045 = ssub.s32 256, 256
      %2046 = vsyncadd [#allocation4], %s2045
      %s2047 = sshll.u32 [#allocation8], 4
      %s2048 = int_to_ptr.vmem [resolvable:$true] %s2047
      %2053 = dma.vmem_to_hbm [thread:$0]  %s2048, 256, %s4, [#allocation4], 128, 128, 8
    $region33: #{tpu_custom_call.1} parent=1 // pred_fallthru
      _
    // Predicated region
    $region34: #{tpu_custom_call.1} parent=1 // pred_check
      _
    $region35: #{tpu_custom_call.1} parent=1 // pred_check_branch
      %2055 = sbr.rel (0) target = $region37
    $region36: #{tpu_custom_call.1} parent=1 // pred_region
      %2056 = dma.done [#allocation4], 256
    $region37: #{tpu_custom_call.1} parent=1 // pred_fallthru
      _
    %2057 = vsyncpa [#allocation3], 1
    %2058 = vsyncpa [#allocation6], 1
    %2059 = vsyncpa [#allocation4], 1

// kernel: tpu_custom_call.1
$region0: #{tpu_custom_call.1}
  #allocation0 [shape = 'u32[]', space=smem, size = 0x4, offset = 0x4, fixed_abs, tag = 'smem constant byte address 0x4 - core index']
  #allocation1 [shape = 'u32[144,128]{1,0:T(1,128)}', space=vmem, size = 0x12000, scoped, tag = 'internal scratch']
  %s0 = inlined_call_operand.hbm [shape: bf16[16,32], index: 0, kind: input, shape index: {}]
  %s1 = inlined_call_operand.hbm [shape: bf16[32,96], index: 1, kind: input, shape index: {}]
  %s2 = inlined_call_operand.hbm [shape: bf16[32,32], index: 2, kind: input, shape index: {}]
  %s3 = inlined_call_operand.vmem [shape: f32[1,32], index: 3, kind: input, shape index: {}]
  %s4 = inlined_call_operand.hbm [shape: f32[16,32], index: 4, kind: output, shape index: {}]
  %s5 = sld [smem:[#allocation0]]
  $region38: #{tpu_custom_call.1} parent=0
    _
  %s7 = ssub.s32 1, %s5
  %s8 = scalar_select 0, %s7, %s5
  $region1: #{tpu_custom_call.1} parent=0
    #allocation2 [shape = 'u8[4096]{0}', space=vmem, size = 0x1000, scoped, tag = 'input window, operand 0, single buffered']
    #allocation3 [shape = 's32[1]{0}', space=sflag, size = 0x4, scoped, tag = 'scoped memory for tpu_custom_call.1']
    #allocation4 [shape = 's32[1]{0}', space=sflag, size = 0x4, scoped, tag = 'scoped memory for tpu_custom_call.1']
    #allocation5 [shape = 'u8[8192]{0}', space=vmem, size = 0x2000, scoped, tag = 'input window, operand 1, single buffered']
    #allocation6 [shape = 's32[1]{0}', space=sflag, size = 0x4, scoped, tag = 'scoped memory for tpu_custom_call.1']
    #allocation7 [shape = 'u8[8192]{0}', space=vmem, size = 0x2000, scoped, tag = 'input window, operand 2, single buffered']
    #allocation8 [shape = 'u8[8192]{0}', space=vmem, size = 0x2000, scoped, tag = 'output window, operand 0, single buffered']
    %9 = vsyncpa [#allocation3], 0
    %10 = vsyncpa [#allocation6], 0
    %11 = vsyncpa [#allocation4], 0
    // Predicated region
    $region2: #{tpu_custom_call.1} parent=1 // pred_check
      _
    $region3: #{tpu_custom_call.1} parent=1 // pred_check_branch
      %13 = sbr.rel (0) target = $region5
    $region4: #{tpu_custom_call.1} parent=1 // pred_region
      %s15 = ssub.s32 128, 128
      %16 = vsyncadd [#allocation3], %s15
      %s17 = sshll.u32 [#allocation2], 4
      %s18 = int_to_ptr.vmem [resolvable:$true] %s17
      %23 = dma.hbm_to_vmem [thread:$0]  %s0, 128, %s18, [#allocation3], 64, 64, 4
    $region5: #{tpu_custom_call.1} parent=1 // pred_fallthru
      _
    // Predicated region
    $region6: #{tpu_custom_call.1} parent=1 // pred_check
      _
    $region7: #{tpu_custom_call.1} parent=1 // pred_check_branch
      %25 = sbr.rel (0) target = $region9
    $region8: #{tpu_custom_call.1} parent=1 // pred_region
      %s27 = ssub.s32 256, 256
      %28 = vsyncadd [#allocation6], %s27
      %s29 = sshll.u32 [#allocation5], 4
      %s30 = int_to_ptr.vmem [resolvable:$true] %s29
      %35 = dma.hbm_to_vmem [thread:$0]  %s1, 256, %s30, [#allocation6], 64, 64, 4
    $region9: #{tpu_custom_call.1} parent=1 // pred_fallthru
      _
    // Predicated region
    $region10: #{tpu_custom_call.1} parent=1 // pred_check
      _
    $region11: #{tpu_custom_call.1} parent=1 // pred_check_branch
      %37 = sbr.rel (0) target = $region13
    $region12: #{tpu_custom_call.1} parent=1 // pred_region
      %s39 = ssub.s32 256, 256
      %40 = vsyncadd [#allocation6], %s39
      %s41 = sshll.u32 [#allocation7], 4
      %s42 = int_to_ptr.vmem [resolvable:$true] %s41
      %47 = dma.hbm_to_vmem [thread:$0]  %s2, 256, %s42, [#allocation6], 64, 64, 4
    $region13: #{tpu_custom_call.1} parent=1 // pred_fallthru
      _
    // Predicated region
    $region14: #{tpu_custom_call.1} parent=1 // pred_check
      _
    $region15: #{tpu_custom_call.1} parent=1 // pred_check_branch
      %49 = sbr.rel (0) target = $region17
    $region16: #{tpu_custom_call.1} parent=1 // pred_region
      _
    $region17: #{tpu_custom_call.1} parent=1 // pred_fallthru
      _
    // Predicated region
    $region18: #{tpu_custom_call.1} parent=1 // pred_check
      _
    $region19: #{tpu_custom_call.1} parent=1 // pred_check_branch
      %51 = sbr.rel (0) target = $region21
    $region20: #{tpu_custom_call.1} parent=1 // pred_region
      %52 = dma.done [#allocation3], 128
    $region21: #{tpu_custom_call.1} parent=1 // pred_fallthru
      _
    // Predicated region
    $region22: #{tpu_custom_call.1} parent=1 // pred_check
      _
    $region23: #{tpu_custom_call.1} parent=1 // pred_check_branch
      %54 = sbr.rel (0) target = $region25
    $region24: #{tpu_custom_call.1} parent=1 // pred_region
      %55 = dma.done [#allocation6], 256
    $region25: #{tpu_custom_call.1} parent=1 // pred_fallthru
      _
    // Predicated region
    $region26: #{tpu_custom_call.1} parent=1 // pred_check
      _
    $region27: #{tpu_custom_call.1} parent=1 // pred_check_branch
      %57 = sbr.rel (0) target = $region29
    $region28: #{tpu_custom_call.1} parent=1 // pred_region
      %58 = dma.done [#allocation6], 256
    $region29: #{tpu_custom_call.1} parent=1 // pred_fallthru
      _
    %v60 = vld [vmem:[#allocation2] sm:$0xf]
    %v61 = vld [vmem:[#allocation2 + $0x4] sm:$0xf]
    %v62 = vld [vmem:[#allocation5] sm:$0xf]
    %v63 = vld [vmem:[#allocation5 + $0x4] sm:$0xf]
    %v64 = vld [vmem:[#allocation5 + $0x8] sm:$0xf]
    %v65 = vld [vmem:[#allocation5 + $0xc] sm:$0xf]
    %v68 = vunpack.c.l.b16 %v60
    %v69 = vunpack.c.l.b16 %v61
    %v70 = vpack.c.b16 %v69, %v68
    %v75 = vunpack.c.l.b16 %v62
    %v76 = vunpack.c.l.b16 %v63
    %v77 = vunpack.c.l.b16 %v64
    %v78 = vunpack.c.l.b16 %v65
    %v79 = vpack.c.b16 %v76, %v75
    %v80 = vpack.c.b16 %v78, %v77
    %vm83 = vcmask 261120
    %v85 = vsel %vm83, %v70, 0
    %87 = vmatprep.subr.bf16.mxu0 0
    %88 = vmatpush1.bf16.msra.mxu0 %v79
    %89 = vmatprep.subr.bf16.mxu0 0
    %90 = vmatpush1.bf16.msra.mxu0 %v80
    %91 = vmatprep.subr.bf16.mxu0 0
    %92 = vmatpush1.bf16.msra.mxu0 0
    %93 = vmatprep.subr.bf16.mxu0 0
    %94 = vmatpush1.bf16.msra.mxu0 0
    %95 = vmatprep.subr.bf16.mxu0 0
    %96 = vmatpush1.bf16.msra.mxu0 0
    %97 = vmatprep.subr.bf16.mxu0 0
    %98 = vmatpush1.bf16.msra.mxu0 0
    %99 = vmatprep.subr.bf16.mxu0 0
    %100 = vmatpush1.bf16.msra.mxu0 0
    %101 = vmatprep.subr.bf16.mxu0 0
    %102 = vmatpush1.bf16.msra.mxu0 0
    %103 = vmatprep.subr.bf16.mxu0 0
    %104 = vmatpush1.bf16.msra.mxu0 0
    %105 = vmatprep.subr.bf16.mxu0 0
    %106 = vmatpush1.bf16.msra.mxu0 0
    %107 = vmatprep.subr.bf16.mxu0 0
    %108 = vmatpush1.bf16.msra.mxu0 0
    %109 = vmatprep.subr.bf16.mxu0 0
    %110 = vmatpush1.bf16.msra.mxu0 0
    %111 = vmatprep.subr.bf16.mxu0 0
    %112 = vmatpush1.bf16.msra.mxu0 0
    %113 = vmatprep.subr.bf16.mxu0 0
    %114 = vmatpush1.bf16.msra.mxu0 0
    %115 = vmatprep.subr.bf16.mxu0 0
    %116 = vmatpush1.bf16.msra.mxu0 0
    %117 = vmatprep.subr.bf16.mxu0 0
    %118 = vmatpush1.bf16.msra.mxu0 0
    %119 = vmatprep.mubr.bf16.mxu0 0
    %120 = vmatmul.mubr.bf16.gmra.mrb[0].mxu0 %v85
    %v121 = vpop.f32.mrb[0].mxu0
    %v122 = vadd.f32 0.0, %v121
    %v123 = vpop.f32.mrb[0].mxu0
    %v124 = vpop.f32.mrb[0].mxu0
    %v125 = vadd.f32 0.0, %v124
    %v126 = vpop.f32.mrb[0].mxu0
    %127 = vdwg.mxu0
    %v128 = vmul.f32 %v122, 0.5
    %v129 = vmul.f32 %v125, 0.5
    %v130 = vpack.c.bf16 %v128, %v128
    %v131 = vpack.c.bf16 %v129, %v129
    %v132 = vpack.c.bf16 %v122, %v122
    %v133 = vpack.c.bf16 %v125, %v125
    %135 = vrot.lane.b32.xlu0 %v132, 96
    %v136 = vpop.permute.xlu0 %135
    %vm137 = vcmask 31744
    %v139 = vsel %vm137, %v130, 0
    %v142 = vsel %vm137, %v136, 0
    %144 = vmatprep.subr.bf16.mxu0 0
    %145 = vmatpush1.bf16.xpose.msra.mxu0 %v142
    %146 = vmatprep.subr.bf16.mxu0 0
    %147 = vmatpush1.bf16.xpose.msra.mxu0 0
    %148 = vmatprep.subr.bf16.mxu0 0
    %149 = vmatpush1.bf16.xpose.msra.mxu0 0
    %150 = vmatprep.subr.bf16.mxu0 0
    %151 = vmatpush1.bf16.xpose.msra.mxu0 0
    %152 = vmatprep.subr.bf16.mxu0 0
    %153 = vmatpush1.bf16.xpose.msra.mxu0 0
    %154 = vmatprep.subr.bf16.mxu0 0
    %155 = vmatpush1.bf16.xpose.msra.mxu0 0
    %156 = vmatprep.subr.bf16.mxu0 0
    %157 = vmatpush1.bf16.xpose.msra.mxu0 0
    %158 = vmatprep.subr.bf16.mxu0 0
    %159 = vmatpush1.bf16.xpose.msra.mxu0 0
    %160 = vmatprep.subr.bf16.mxu0 0
    %161 = vmatpush1.bf16.xpose.msra.mxu0 0
    %162 = vmatprep.subr.bf16.mxu0 0
    %163 = vmatpush1.bf16.xpose.msra.mxu0 0
    %164 = vmatprep.subr.bf16.mxu0 0
    %165 = vmatpush1.bf16.xpose.msra.mxu0 0
    %166 = vmatprep.subr.bf16.mxu0 0
    %167 = vmatpush1.bf16.xpose.msra.mxu0 0
    %168 = vmatprep.subr.bf16.mxu0 0
    %169 = vmatpush1.bf16.xpose.msra.mxu0 0
    %170 = vmatprep.subr.bf16.mxu0 0
    %171 = vmatpush1.bf16.xpose.msra.mxu0 0
    %172 = vmatprep.subr.bf16.mxu0 0
    %173 = vmatpush1.bf16.xpose.msra.mxu0 0
    %174 = vmatprep.subr.bf16.mxu0 0
    %175 = vmatpush1.bf16.xpose.msra.mxu0 0
    %176 = vmatprep.mubr.bf16.mxu0 0
    %177 = vmatmul.mubr.bf16.gmra.mrb[0].mxu0 %v139
    %v178 = vpop.f32.mrb[0].mxu0
    %v179 = vadd.f32 0.0, %v178
    %v180 = vpop.f32.mrb[0].mxu0
    %v181 = vpop.f32.mrb[0].mxu0
    %v182 = vpop.f32.mrb[0].mxu0
    %183 = vdwg.mxu0
    %185 = vrot.lane.b32.xlu0 %v133, 96
    %v186 = vpop.permute.xlu0 %185
    %v188 = vsel %vm137, %v131, 0
    %v191 = vsel %vm137, %v186, 0
    %193 = vmatprep.subr.bf16.mxu0 0
    %194 = vmatpush1.bf16.xpose.msra.mxu0 %v191
    %195 = vmatprep.subr.bf16.mxu0 0
    %196 = vmatpush1.bf16.xpose.msra.mxu0 0
    %197 = vmatprep.subr.bf16.mxu0 0
    %198 = vmatpush1.bf16.xpose.msra.mxu0 0
    %199 = vmatprep.subr.bf16.mxu0 0
    %200 = vmatpush1.bf16.xpose.msra.mxu0 0
    %201 = vmatprep.subr.bf16.mxu0 0
    %202 = vmatpush1.bf16.xpose.msra.mxu0 0
    %203 = vmatprep.subr.bf16.mxu0 0
    %204 = vmatpush1.bf16.xpose.msra.mxu0 0
    %205 = vmatprep.subr.bf16.mxu0 0
    %206 = vmatpush1.bf16.xpose.msra.mxu0 0
    %207 = vmatprep.subr.bf16.mxu0 0
    %208 = vmatpush1.bf16.xpose.msra.mxu0 0
    %209 = vmatprep.subr.bf16.mxu0 0
    %210 = vmatpush1.bf16.xpose.msra.mxu0 0
    %211 = vmatprep.subr.bf16.mxu0 0
    %212 = vmatpush1.bf16.xpose.msra.mxu0 0
    %213 = vmatprep.subr.bf16.mxu0 0
    %214 = vmatpush1.bf16.xpose.msra.mxu0 0
    %215 = vmatprep.subr.bf16.mxu0 0
    %216 = vmatpush1.bf16.xpose.msra.mxu0 0
    %217 = vmatprep.subr.bf16.mxu0 0
    %218 = vmatpush1.bf16.xpose.msra.mxu0 0
    %219 = vmatprep.subr.bf16.mxu0 0
    %220 = vmatpush1.bf16.xpose.msra.mxu0 0
    %221 = vmatprep.subr.bf16.mxu0 0
    %222 = vmatpush1.bf16.xpose.msra.mxu0 0
    %223 = vmatprep.subr.bf16.mxu0 0
    %224 = vmatpush1.bf16.xpose.msra.mxu0 0
    %225 = vmatprep.mubr.bf16.mxu0 0
    %226 = vmatmul.mubr.bf16.gmra.mrb[0].mxu0 %v188
    %v227 = vpop.f32.mrb[0].mxu0
    %v228 = vadd.f32 0.0, %v227
    %v229 = vpop.f32.mrb[0].mxu0
    %v230 = vpop.f32.mrb[0].mxu0
    %v231 = vpop.f32.mrb[0].mxu0
    %232 = vdwg.mxu0
    %vm233 = vcmask 64512
    %v234 = vsel %vm233, %v179, -inf
    %235 = vmax.xlane.f32.xlu0 %v234
    %v236 = vpop.xlane.xlu0 %235
    %v237 = vsel %vm233, %v228, -inf
    %238 = vmax.xlane.f32.xlu0 %v237
    %v239 = vpop.xlane.xlu0 %238
    %v240 = vsub.f32 %v179, %v236
    %v241 = vsub.f32 %v228, %v239
    %v242 = vmul.f32 %v240, 1.442695
    %v243 = vpow.pop %v242
    %v244 = vmul.f32 %v241, 1.442695
    %v245 = vpow.pop %v244
    %v246 = vsel %vm233, %v243, 0.0
    %247 = vadd.xlane.f32.xlu0 %v246
    %v248 = vpop.xlane.xlu0 %247
    %v249 = vsel %vm233, %v245, 0.0
    %250 = vadd.xlane.f32.xlu0 %v249
    %v251 = vpop.xlane.xlu0 %250
    %v252 = vrcp.pop %v248
    %v253 = vrcp.pop %v251
    %v254 = vmul.f32 %v243, %v252
    %v255 = vmul.f32 %v245, %v253
    %v256 = vpack.c.bf16 %v254, %v254
    %v257 = vpack.c.bf16 %v255, %v255
    %258 = vrot.lane.b32.xlu0 %v132, 64
    %v259 = vpop.permute.xlu0 %258
    %v261 = vsel %vm233, %v256, 0
    %vm263 = vcmask 1043456
    %v265 = vsel %vm263, %v259, 0
    %267 = vmatprep.subr.bf16.mxu0 0
    %268 = vmatpush1.bf16.msra.mxu0 %v265
    %269 = vmatprep.subr.bf16.mxu0 0
    %270 = vmatpush1.bf16.msra.mxu0 0
    %271 = vmatprep.subr.bf16.mxu0 0
    %272 = vmatpush1.bf16.msra.mxu0 0
    %273 = vmatprep.subr.bf16.mxu0 0
    %274 = vmatpush1.bf16.msra.mxu0 0
    %275 = vmatprep.subr.bf16.mxu0 0
    %276 = vmatpush1.bf16.msra.mxu0 0
    %277 = vmatprep.subr.bf16.mxu0 0
    %278 = vmatpush1.bf16.msra.mxu0 0
    %279 = vmatprep.subr.bf16.mxu0 0
    %280 = vmatpush1.bf16.msra.mxu0 0
    %281 = vmatprep.subr.bf16.mxu0 0
    %282 = vmatpush1.bf16.msra.mxu0 0
    %283 = vmatprep.subr.bf16.mxu0 0
    %284 = vmatpush1.bf16.msra.mxu0 0
    %285 = vmatprep.subr.bf16.mxu0 0
    %286 = vmatpush1.bf16.msra.mxu0 0
    %287 = vmatprep.subr.bf16.mxu0 0
    %288 = vmatpush1.bf16.msra.mxu0 0
    %289 = vmatprep.subr.bf16.mxu0 0
    %290 = vmatpush1.bf16.msra.mxu0 0
    %291 = vmatprep.subr.bf16.mxu0 0
    %292 = vmatpush1.bf16.msra.mxu0 0
    %293 = vmatprep.subr.bf16.mxu0 0
    %294 = vmatpush1.bf16.msra.mxu0 0
    %295 = vmatprep.subr.bf16.mxu0 0
    %296 = vmatpush1.bf16.msra.mxu0 0
    %297 = vmatprep.subr.bf16.mxu0 0
    %298 = vmatpush1.bf16.msra.mxu0 0
    %299 = vmatprep.mubr.bf16.mxu0 0
    %300 = vmatmul.mubr.bf16.gmra.mrb[0].mxu0 %v261
    %v301 = vpop.f32.mrb[0].mxu0
    %v302 = vadd.f32 0.0, %v301
    %v303 = vpop.f32.mrb[0].mxu0
    %v304 = vpop.f32.mrb[0].mxu0
    %v305 = vpop.f32.mrb[0].mxu0
    %306 = vdwg.mxu0
    %307 = vrot.lane.b32.xlu0 %v133, 64
    %v308 = vpop.permute.xlu0 %307
    %v310 = vsel %vm233, %v257, 0
    %v313 = vsel %vm263, %v308, 0
    %315 = vmatprep.subr.bf16.mxu0 0
    %316 = vmatpush1.bf16.msra.mxu0 %v313
    %317 = vmatprep.subr.bf16.mxu0 0
    %318 = vmatpush1.bf16.msra.mxu0 0
    %319 = vmatprep.subr.bf16.mxu0 0
    %320 = vmatpush1.bf16.msra.mxu0 0
    %321 = vmatprep.subr.bf16.mxu0 0
    %322 = vmatpush1.bf16.msra.mxu0 0
    %323 = vmatprep.subr.bf16.mxu0 0
    %324 = vmatpush1.bf16.msra.mxu0 0
    %325 = vmatprep.subr.bf16.mxu0 0
    %326 = vmatpush1.bf16.msra.mxu0 0
    %327 = vmatprep.subr.bf16.mxu0 0
    %328 = vmatpush1.bf16.msra.mxu0 0
    %329 = vmatprep.subr.bf16.mxu0 0
    %330 = vmatpush1.bf16.msra.mxu0 0
    %331 = vmatprep.subr.bf16.mxu0 0
    %332 = vmatpush1.bf16.msra.mxu0 0
    %333 = vmatprep.subr.bf16.mxu0 0
    %334 = vmatpush1.bf16.msra.mxu0 0
    %335 = vmatprep.subr.bf16.mxu0 0
    %336 = vmatpush1.bf16.msra.mxu0 0
    %337 = vmatprep.subr.bf16.mxu0 0
    %338 = vmatpush1.bf16.msra.mxu0 0
    %339 = vmatprep.subr.bf16.mxu0 0
    %340 = vmatpush1.bf16.msra.mxu0 0
    %341 = vmatprep.subr.bf16.mxu0 0
    %342 = vmatpush1.bf16.msra.mxu0 0
    %343 = vmatprep.subr.bf16.mxu0 0
    %344 = vmatpush1.bf16.msra.mxu0 0
    %345 = vmatprep.subr.bf16.mxu0 0
    %346 = vmatpush1.bf16.msra.mxu0 0
    %347 = vmatprep.mubr.bf16.mxu0 0
    %348 = vmatmul.mubr.bf16.gmra.mrb[0].mxu0 %v310
    %v349 = vpop.f32.mrb[0].mxu0
    %v350 = vadd.f32 0.0, %v349
    %v351 = vpop.f32.mrb[0].mxu0
    %v352 = vpop.f32.mrb[0].mxu0
    %v353 = vpop.f32.mrb[0].mxu0
    %354 = vdwg.mxu0
    %356 = vrot.lane.b32.xlu0 %v130, 124
    %v357 = vpop.permute.xlu0 %356
    %358 = vrot.lane.b32.xlu0 %v132, 92
    %v359 = vpop.permute.xlu0 %358
    %v361 = vsel %vm137, %v357, 0
    %v364 = vsel %vm137, %v359, 0
    %366 = vmatprep.subr.bf16.mxu0 0
    %367 = vmatpush1.bf16.xpose.msra.mxu0 %v364
    %368 = vmatprep.subr.bf16.mxu0 0
    %369 = vmatpush1.bf16.xpose.msra.mxu0 0
    %370 = vmatprep.subr.bf16.mxu0 0
    %371 = vmatpush1.bf16.xpose.msra.mxu0 0
    %372 = vmatprep.subr.bf16.mxu0 0
    %373 = vmatpush1.bf16.xpose.msra.mxu0 0
    %374 = vmatprep.subr.bf16.mxu0 0
    %375 = vmatpush1.bf16.xpose.msra.mxu0 0
    %376 = vmatprep.subr.bf16.mxu0 0
    %377 = vmatpush1.bf16.xpose.msra.mxu0 0
    %378 = vmatprep.subr.bf16.mxu0 0
    %379 = vmatpush1.bf16.xpose.msra.mxu0 0
    %380 = vmatprep.subr.bf16.mxu0 0
    %381 = vmatpush1.bf16.xpose.msra.mxu0 0
    %382 = vmatprep.subr.bf16.mxu0 0
    %383 = vmatpush1.bf16.xpose.msra.mxu0 0
    %384 = vmatprep.subr.bf16.mxu0 0
    %385 = vmatpush1.bf16.xpose.msra.mxu0 0
    %386 = vmatprep.subr.bf16.mxu0 0
    %387 = vmatpush1.bf16.xpose.msra.mxu0 0
    %388 = vmatprep.subr.bf16.mxu0 0
    %389 = vmatpush1.bf16.xpose.msra.mxu0 0
    %390 = vmatprep.subr.bf16.mxu0 0
    %391 = vmatpush1.bf16.xpose.msra.mxu0 0
    %392 = vmatprep.subr.bf16.mxu0 0
    %393 = vmatpush1.bf16.xpose.msra.mxu0 0
    %394 = vmatprep.subr.bf16.mxu0 0
    %395 = vmatpush1.bf16.xpose.msra.mxu0 0
    %396 = vmatprep.subr.bf16.mxu0 0
    %397 = vmatpush1.bf16.xpose.msra.mxu0 0
    %398 = vmatprep.mubr.bf16.mxu0 0
    %399 = vmatmul.mubr.bf16.gmra.mrb[0].mxu0 %v361
    %v400 = vpop.f32.mrb[0].mxu0
    %v401 = vadd.f32 0.0, %v400
    %v402 = vpop.f32.mrb[0].mxu0
    %v403 = vpop.f32.mrb[0].mxu0
    %v404 = vpop.f32.mrb[0].mxu0
    %405 = vdwg.mxu0
    %407 = vrot.lane.b32.xlu0 %v131, 124
    %v408 = vpop.permute.xlu0 %407
    %409 = vrot.lane.b32.xlu0 %v133, 92
    %v410 = vpop.permute.xlu0 %409
    %v412 = vsel %vm137, %v408, 0
    %v415 = vsel %vm137, %v410, 0
    %417 = vmatprep.subr.bf16.mxu0 0
    %418 = vmatpush1.bf16.xpose.msra.mxu0 %v415
    %419 = vmatprep.subr.bf16.mxu0 0
    %420 = vmatpush1.bf16.xpose.msra.mxu0 0
    %421 = vmatprep.subr.bf16.mxu0 0
    %422 = vmatpush1.bf16.xpose.msra.mxu0 0
    %423 = vmatprep.subr.bf16.mxu0 0
    %424 = vmatpush1.bf16.xpose.msra.mxu0 0
    %425 = vmatprep.subr.bf16.mxu0 0
    %426 = vmatpush1.bf16.xpose.msra.mxu0 0
    %427 = vmatprep.subr.bf16.mxu0 0
    %428 = vmatpush1.bf16.xpose.msra.mxu0 0
    %429 = vmatprep.subr.bf16.mxu0 0
    %430 = vmatpush1.bf16.xpose.msra.mxu0 0
    %431 = vmatprep.subr.bf16.mxu0 0
    %432 = vmatpush1.bf16.xpose.msra.mxu0 0
    %433 = vmatprep.subr.bf16.mxu0 0
    %434 = vmatpush1.bf16.xpose.msra.mxu0 0
    %435 = vmatprep.subr.bf16.mxu0 0
    %436 = vmatpush1.bf16.xpose.msra.mxu0 0
    %437 = vmatprep.subr.bf16.mxu0 0
    %438 = vmatpush1.bf16.xpose.msra.mxu0 0
    %439 = vmatprep.subr.bf16.mxu0 0
    %440 = vmatpush1.bf16.xpose.msra.mxu0 0
    %441 = vmatprep.subr.bf16.mxu0 0
    %442 = vmatpush1.bf16.xpose.msra.mxu0 0
    %443 = vmatprep.subr.bf16.mxu0 0
    %444 = vmatpush1.bf16.xpose.msra.mxu0 0
    %445 = vmatprep.subr.bf16.mxu0 0
    %446 = vmatpush1.bf16.xpose.msra.mxu0 0
    %447 = vmatprep.subr.bf16.mxu0 0
    %448 = vmatpush1.bf16.xpose.msra.mxu0 0
    %449 = vmatprep.mubr.bf16.mxu0 0
    %450 = vmatmul.mubr.bf16.gmra.mrb[0].mxu0 %v412
    %v451 = vpop.f32.mrb[0].mxu0
    %v452 = vadd.f32 0.0, %v451
    %v453 = vpop.f32.mrb[0].mxu0
    %v454 = vpop.f32.mrb[0].mxu0
    %v455 = vpop.f32.mrb[0].mxu0
    %456 = vdwg.mxu0
    %v457 = vsel %vm233, %v401, -inf
    %458 = vmax.xlane.f32.xlu0 %v457
    %v459 = vpop.xlane.xlu0 %458
    %v460 = vsel %vm233, %v452, -inf
    %461 = vmax.xlane.f32.xlu0 %v460
    %v462 = vpop.xlane.xlu0 %461
    %v463 = vsub.f32 %v401, %v459
    %v464 = vsub.f32 %v452, %v462
    %v465 = vmul.f32 %v463, 1.442695
    %v466 = vpow.pop %v465
    %v467 = vmul.f32 %v464, 1.442695
    %v468 = vpow.pop %v467
    %v469 = vsel %vm233, %v466, 0.0
    %470 = vadd.xlane.f32.xlu0 %v469
    %v471 = vpop.xlane.xlu0 %470
    %v472 = vsel %vm233, %v468, 0.0
    %473 = vadd.xlane.f32.xlu0 %v472
    %v474 = vpop.xlane.xlu0 %473
    %v475 = vrcp.pop %v471
    %v476 = vrcp.pop %v474
    %v477 = vmul.f32 %v466, %v475
    %v478 = vmul.f32 %v468, %v476
    %v479 = vpack.c.bf16 %v477, %v477
    %v480 = vpack.c.bf16 %v478, %v478
    %481 = vrot.lane.b32.xlu0 %v132, 60
    %v482 = vpop.permute.xlu0 %481
    %v484 = vsel %vm233, %v479, 0
    %v487 = vsel %vm263, %v482, 0
    %489 = vmatprep.subr.bf16.mxu0 0
    %490 = vmatpush1.bf16.msra.mxu0 %v487
    %491 = vmatprep.subr.bf16.mxu0 0
    %492 = vmatpush1.bf16.msra.mxu0 0
    %493 = vmatprep.subr.bf16.mxu0 0
    %494 = vmatpush1.bf16.msra.mxu0 0
    %495 = vmatprep.subr.bf16.mxu0 0
    %496 = vmatpush1.bf16.msra.mxu0 0
    %497 = vmatprep.subr.bf16.mxu0 0
    %498 = vmatpush1.bf16.msra.mxu0 0
    %499 = vmatprep.subr.bf16.mxu0 0
    %500 = vmatpush1.bf16.msra.mxu0 0
    %501 = vmatprep.subr.bf16.mxu0 0
    %502 = vmatpush1.bf16.msra.mxu0 0
    %503 = vmatprep.subr.bf16.mxu0 0
    %504 = vmatpush1.bf16.msra.mxu0 0
    %505 = vmatprep.subr.bf16.mxu0 0
    %506 = vmatpush1.bf16.msra.mxu0 0
    %507 = vmatprep.subr.bf16.mxu0 0
    %508 = vmatpush1.bf16.msra.mxu0 0
    %509 = vmatprep.subr.bf16.mxu0 0
    %510 = vmatpush1.bf16.msra.mxu0 0
    %511 = vmatprep.subr.bf16.mxu0 0
    %512 = vmatpush1.bf16.msra.mxu0 0
    %513 = vmatprep.subr.bf16.mxu0 0
    %514 = vmatpush1.bf16.msra.mxu0 0
    %515 = vmatprep.subr.bf16.mxu0 0
    %516 = vmatpush1.bf16.msra.mxu0 0
    %517 = vmatprep.subr.bf16.mxu0 0
    %518 = vmatpush1.bf16.msra.mxu0 0
    %519 = vmatprep.subr.bf16.mxu0 0
    %520 = vmatpush1.bf16.msra.mxu0 0
    %521 = vmatprep.mubr.bf16.mxu0 0
    %522 = vmatmul.mubr.bf16.gmra.mrb[0].mxu0 %v484
    %v523 = vpop.f32.mrb[0].mxu0
    %v524 = vadd.f32 0.0, %v523
    %v525 = vpop.f32.mrb[0].mxu0
    %v526 = vpop.f32.mrb[0].mxu0
    %v527 = vpop.f32.mrb[0].mxu0
    %528 = vdwg.mxu0
    %529 = vrot.lane.b32.xlu0 %v133, 60
    %v530 = vpop.permute.xlu0 %529
    %v532 = vsel %vm233, %v480, 0
    %v535 = vsel %vm263, %v530, 0
    %537 = vmatprep.subr.bf16.mxu0 0
    %538 = vmatpush1.bf16.msra.mxu0 %v535
    %539 = vmatprep.subr.bf16.mxu0 0
    %540 = vmatpush1.bf16.msra.mxu0 0
    %541 = vmatprep.subr.bf16.mxu0 0
    %542 = vmatpush1.bf16.msra.mxu0 0
    %543 = vmatprep.subr.bf16.mxu0 0
    %544 = vmatpush1.bf16.msra.mxu0 0
    %545 = vmatprep.subr.bf16.mxu0 0
    %546 = vmatpush1.bf16.msra.mxu0 0
    %547 = vmatprep.subr.bf16.mxu0 0
    %548 = vmatpush1.bf16.msra.mxu0 0
    %549 = vmatprep.subr.bf16.mxu0 0
    %550 = vmatpush1.bf16.msra.mxu0 0
    %551 = vmatprep.subr.bf16.mxu0 0
    %552 = vmatpush1.bf16.msra.mxu0 0
    %553 = vmatprep.subr.bf16.mxu0 0
    %554 = vmatpush1.bf16.msra.mxu0 0
    %555 = vmatprep.subr.bf16.mxu0 0
    %556 = vmatpush1.bf16.msra.mxu0 0
    %557 = vmatprep.subr.bf16.mxu0 0
    %558 = vmatpush1.bf16.msra.mxu0 0
    %559 = vmatprep.subr.bf16.mxu0 0
    %560 = vmatpush1.bf16.msra.mxu0 0
    %561 = vmatprep.subr.bf16.mxu0 0
    %562 = vmatpush1.bf16.msra.mxu0 0
    %563 = vmatprep.subr.bf16.mxu0 0
    %564 = vmatpush1.bf16.msra.mxu0 0
    %565 = vmatprep.subr.bf16.mxu0 0
    %566 = vmatpush1.bf16.msra.mxu0 0
    %567 = vmatprep.subr.bf16.mxu0 0
    %568 = vmatpush1.bf16.msra.mxu0 0
    %569 = vmatprep.mubr.bf16.mxu0 0
    %570 = vmatmul.mubr.bf16.gmra.mrb[0].mxu0 %v532
    %v571 = vpop.f32.mrb[0].mxu0
    %v572 = vadd.f32 0.0, %v571
    %v573 = vpop.f32.mrb[0].mxu0
    %v574 = vpop.f32.mrb[0].mxu0
    %v575 = vpop.f32.mrb[0].mxu0
    %576 = vdwg.mxu0
    %577 = vrot.lane.b32.xlu0 %v130, 120
    %v578 = vpop.permute.xlu0 %577
    %579 = vrot.lane.b32.xlu0 %v132, 88
    %v580 = vpop.permute.xlu0 %579
    %v582 = vsel %vm137, %v578, 0
    %v585 = vsel %vm137, %v580, 0
    %587 = vmatprep.subr.bf16.mxu0 0
    %588 = vmatpush1.bf16.xpose.msra.mxu0 %v585
    %589 = vmatprep.subr.bf16.mxu0 0
    %590 = vmatpush1.bf16.xpose.msra.mxu0 0
    %591 = vmatprep.subr.bf16.mxu0 0
    %592 = vmatpush1.bf16.xpose.msra.mxu0 0
    %593 = vmatprep.subr.bf16.mxu0 0
    %594 = vmatpush1.bf16.xpose.msra.mxu0 0
    %595 = vmatprep.subr.bf16.mxu0 0
    %596 = vmatpush1.bf16.xpose.msra.mxu0 0
    %597 = vmatprep.subr.bf16.mxu0 0
    %598 = vmatpush1.bf16.xpose.msra.mxu0 0
    %599 = vmatprep.subr.bf16.mxu0 0
    %600 = vmatpush1.bf16.xpose.msra.mxu0 0
    %601 = vmatprep.subr.bf16.mxu0 0
    %602 = vmatpush1.bf16.xpose.msra.mxu0 0
    %603 = vmatprep.subr.bf16.mxu0 0
    %604 = vmatpush1.bf16.xpose.msra.mxu0 0
    %605 = vmatprep.subr.bf16.mxu0 0
    %606 = vmatpush1.bf16.xpose.msra.mxu0 0
    %607 = vmatprep.subr.bf16.mxu0 0
    %608 = vmatpush1.bf16.xpose.msra.mxu0 0
    %609 = vmatprep.subr.bf16.mxu0 0
    %610 = vmatpush1.bf16.xpose.msra.mxu0 0
    %611 = vmatprep.subr.bf16.mxu0 0
    %612 = vmatpush1.bf16.xpose.msra.mxu0 0
    %613 = vmatprep.subr.bf16.mxu0 0
    %614 = vmatpush1.bf16.xpose.msra.mxu0 0
    %615 = vmatprep.subr.bf16.mxu0 0
    %616 = vmatpush1.bf16.xpose.msra.mxu0 0
    %617 = vmatprep.subr.bf16.mxu0 0
    %618 = vmatpush1.bf16.xpose.msra.mxu0 0
    %619 = vmatprep.mubr.bf16.mxu0 0
    %620 = vmatmul.mubr.bf16.gmra.mrb[0].mxu0 %v582
    %v621 = vpop.f32.mrb[0].mxu0
    %v622 = vadd.f32 0.0, %v621
    %v623 = vpop.f32.mrb[0].mxu0
    %v624 = vpop.f32.mrb[0].mxu0
    %v625 = vpop.f32.mrb[0].mxu0
    %626 = vdwg.mxu0
    %627 = vrot.lane.b32.xlu0 %v131, 120
    %v628 = vpop.permute.xlu0 %627
    %629 = vrot.lane.b32.xlu0 %v133, 88
    %v630 = vpop.permute.xlu0 %629
    %v632 = vsel %vm137, %v628, 0
    %v635 = vsel %vm137, %v630, 0
    %637 = vmatprep.subr.bf16.mxu0 0
    %638 = vmatpush1.bf16.xpose.msra.mxu0 %v635
    %639 = vmatprep.subr.bf16.mxu0 0
    %640 = vmatpush1.bf16.xpose.msra.mxu0 0
    %641 = vmatprep.subr.bf16.mxu0 0
    %642 = vmatpush1.bf16.xpose.msra.mxu0 0
    %643 = vmatprep.subr.bf16.mxu0 0
    %644 = vmatpush1.bf16.xpose.msra.mxu0 0
    %645 = vmatprep.subr.bf16.mxu0 0
    %646 = vmatpush1.bf16.xpose.msra.mxu0 0
    %647 = vmatprep.subr.bf16.mxu0 0
    %648 = vmatpush1.bf16.xpose.msra.mxu0 0
    %649 = vmatprep.subr.bf16.mxu0 0
    %650 = vmatpush1.bf16.xpose.msra.mxu0 0
    %651 = vmatprep.subr.bf16.mxu0 0
    %652 = vmatpush1.bf16.xpose.msra.mxu0 0
    %653 = vmatprep.subr.bf16.mxu0 0
    %654 = vmatpush1.bf16.xpose.msra.mxu0 0
    %655 = vmatprep.subr.bf16.mxu0 0
    %656 = vmatpush1.bf16.xpose.msra.mxu0 0
    %657 = vmatprep.subr.bf16.mxu0 0
    %658 = vmatpush1.bf16.xpose.msra.mxu0 0
    %659 = vmatprep.subr.bf16.mxu0 0
    %660 = vmatpush1.bf16.xpose.msra.mxu0 0
    %661 = vmatprep.subr.bf16.mxu0 0
    %662 = vmatpush1.bf16.xpose.msra.mxu0 0
    %663 = vmatprep.subr.bf16.mxu0 0
    %664 = vmatpush1.bf16.xpose.msra.mxu0 0
    %665 = vmatprep.subr.bf16.mxu0 0
    %666 = vmatpush1.bf16.xpose.msra.mxu0 0
    %667 = vmatprep.subr.bf16.mxu0 0
    %668 = vmatpush1.bf16.xpose.msra.mxu0 0
    %669 = vmatprep.mubr.bf16.mxu0 0
    %670 = vmatmul.mubr.bf16.gmra.mrb[0].mxu0 %v632
    %v671 = vpop.f32.mrb[0].mxu0
    %v672 = vadd.f32 0.0, %v671
    %v673 = vpop.f32.mrb[0].mxu0
    %v674 = vpop.f32.mrb[0].mxu0
    %v675 = vpop.f32.mrb[0].mxu0
    %676 = vdwg.mxu0
    %v677 = vsel %vm233, %v622, -inf
    %678 = vmax.xlane.f32.xlu0 %v677
    %v679 = vpop.xlane.xlu0 %678
    %v680 = vsel %vm233, %v672, -inf
    %681 = vmax.xlane.f32.xlu0 %v680
    %v682 = vpop.xlane.xlu0 %681
    %v683 = vsub.f32 %v622, %v679
    %v684 = vsub.f32 %v672, %v682
    %v685 = vmul.f32 %v683, 1.442695
    %v686 = vpow.pop %v685
    %v687 = vmul.f32 %v684, 1.442695
    %v688 = vpow.pop %v687
    %v689 = vsel %vm233, %v686, 0.0
    %690 = vadd.xlane.f32.xlu0 %v689
    %v691 = vpop.xlane.xlu0 %690
    %v692 = vsel %vm233, %v688, 0.0
    %693 = vadd.xlane.f32.xlu0 %v692
    %v694 = vpop.xlane.xlu0 %693
    %v695 = vrcp.pop %v691
    %v696 = vrcp.pop %v694
    %v697 = vmul.f32 %v686, %v695
    %v698 = vmul.f32 %v688, %v696
    %v699 = vpack.c.bf16 %v697, %v697
    %v700 = vpack.c.bf16 %v698, %v698
    %701 = vrot.lane.b32.xlu0 %v132, 56
    %v702 = vpop.permute.xlu0 %701
    %v704 = vsel %vm233, %v699, 0
    %v707 = vsel %vm263, %v702, 0
    %709 = vmatprep.subr.bf16.mxu0 0
    %710 = vmatpush1.bf16.msra.mxu0 %v707
    %711 = vmatprep.subr.bf16.mxu0 0
    %712 = vmatpush1.bf16.msra.mxu0 0
    %713 = vmatprep.subr.bf16.mxu0 0
    %714 = vmatpush1.bf16.msra.mxu0 0
    %715 = vmatprep.subr.bf16.mxu0 0
    %716 = vmatpush1.bf16.msra.mxu0 0
    %717 = vmatprep.subr.bf16.mxu0 0
    %718 = vmatpush1.bf16.msra.mxu0 0
    %719 = vmatprep.subr.bf16.mxu0 0
    %720 = vmatpush1.bf16.msra.mxu0 0
    %721 = vmatprep.subr.bf16.mxu0 0
    %722 = vmatpush1.bf16.msra.mxu0 0
    %723 = vmatprep.subr.bf16.mxu0 0
    %724 = vmatpush1.bf16.msra.mxu0 0
    %725 = vmatprep.subr.bf16.mxu0 0
    %726 = vmatpush1.bf16.msra.mxu0 0
    %727 = vmatprep.subr.bf16.mxu0 0
    %728 = vmatpush1.bf16.msra.mxu0 0
    %729 = vmatprep.subr.bf16.mxu0 0
    %730 = vmatpush1.bf16.msra.mxu0 0
    %731 = vmatprep.subr.bf16.mxu0 0
    %732 = vmatpush1.bf16.msra.mxu0 0
    %733 = vmatprep.subr.bf16.mxu0 0
    %734 = vmatpush1.bf16.msra.mxu0 0
    %735 = vmatprep.subr.bf16.mxu0 0
    %736 = vmatpush1.bf16.msra.mxu0 0
    %737 = vmatprep.subr.bf16.mxu0 0
    %738 = vmatpush1.bf16.msra.mxu0 0
    %739 = vmatprep.subr.bf16.mxu0 0
    %740 = vmatpush1.bf16.msra.mxu0 0
    %741 = vmatprep.mubr.bf16.mxu0 0
    %742 = vmatmul.mubr.bf16.gmra.mrb[0].mxu0 %v704
    %v743 = vpop.f32.mrb[0].mxu0
    %v744 = vadd.f32 0.0, %v743
    %v745 = vpop.f32.mrb[0].mxu0
    %v746 = vpop.f32.mrb[0].mxu0
    %v747 = vpop.f32.mrb[0].mxu0
    %748 = vdwg.mxu0
    %749 = vrot.lane.b32.xlu0 %v133, 56
    %v750 = vpop.permute.xlu0 %749
    %v752 = vsel %vm233, %v700, 0
    %v755 = vsel %vm263, %v750, 0
    %757 = vmatprep.subr.bf16.mxu0 0
    %758 = vmatpush1.bf16.msra.mxu0 %v755
    %759 = vmatprep.subr.bf16.mxu0 0
    %760 = vmatpush1.bf16.msra.mxu0 0
    %761 = vmatprep.subr.bf16.mxu0 0
    %762 = vmatpush1.bf16.msra.mxu0 0
    %763 = vmatprep.subr.bf16.mxu0 0
    %764 = vmatpush1.bf16.msra.mxu0 0
    %765 = vmatprep.subr.bf16.mxu0 0
    %766 = vmatpush1.bf16.msra.mxu0 0
    %767 = vmatprep.subr.bf16.mxu0 0
    %768 = vmatpush1.bf16.msra.mxu0 0
    %769 = vmatprep.subr.bf16.mxu0 0
    %770 = vmatpush1.bf16.msra.mxu0 0
    %771 = vmatprep.subr.bf16.mxu0 0
    %772 = vmatpush1.bf16.msra.mxu0 0
    %773 = vmatprep.subr.bf16.mxu0 0
    %774 = vmatpush1.bf16.msra.mxu0 0
    %775 = vmatprep.subr.bf16.mxu0 0
    %776 = vmatpush1.bf16.msra.mxu0 0
    %777 = vmatprep.subr.bf16.mxu0 0
    %778 = vmatpush1.bf16.msra.mxu0 0
    %779 = vmatprep.subr.bf16.mxu0 0
    %780 = vmatpush1.bf16.msra.mxu0 0
    %781 = vmatprep.subr.bf16.mxu0 0
    %782 = vmatpush1.bf16.msra.mxu0 0
    %783 = vmatprep.subr.bf16.mxu0 0
    %784 = vmatpush1.bf16.msra.mxu0 0
    %785 = vmatprep.subr.bf16.mxu0 0
    %786 = vmatpush1.bf16.msra.mxu0 0
    %787 = vmatprep.subr.bf16.mxu0 0
    %788 = vmatpush1.bf16.msra.mxu0 0
    %789 = vmatprep.mubr.bf16.mxu0 0
    %790 = vmatmul.mubr.bf16.gmra.mrb[0].mxu0 %v752
    %v791 = vpop.f32.mrb[0].mxu0
    %v792 = vadd.f32 0.0, %v791
    %v793 = vpop.f32.mrb[0].mxu0
    %v794 = vpop.f32.mrb[0].mxu0
    %v795 = vpop.f32.mrb[0].mxu0
    %796 = vdwg.mxu0
    %797 = vrot.lane.b32.xlu0 %v130, 116
    %v798 = vpop.permute.xlu0 %797
    %799 = vrot.lane.b32.xlu0 %v132, 84
    %v800 = vpop.permute.xlu0 %799
    %v802 = vsel %vm137, %v798, 0
    %v805 = vsel %vm137, %v800, 0
    %807 = vmatprep.subr.bf16.mxu0 0
    %808 = vmatpush1.bf16.xpose.msra.mxu0 %v805
    %809 = vmatprep.subr.bf16.mxu0 0
    %810 = vmatpush1.bf16.xpose.msra.mxu0 0
    %811 = vmatprep.subr.bf16.mxu0 0
    %812 = vmatpush1.bf16.xpose.msra.mxu0 0
    %813 = vmatprep.subr.bf16.mxu0 0
    %814 = vmatpush1.bf16.xpose.msra.mxu0 0
    %815 = vmatprep.subr.bf16.mxu0 0
    %816 = vmatpush1.bf16.xpose.msra.mxu0 0
    %817 = vmatprep.subr.bf16.mxu0 0
    %818 = vmatpush1.bf16.xpose.msra.mxu0 0
    %819 = vmatprep.subr.bf16.mxu0 0
    %820 = vmatpush1.bf16.xpose.msra.mxu0 0
    %821 = vmatprep.subr.bf16.mxu0 0
    %822 = vmatpush1.bf16.xpose.msra.mxu0 0
    %823 = vmatprep.subr.bf16.mxu0 0
    %824 = vmatpush1.bf16.xpose.msra.mxu0 0
    %825 = vmatprep.subr.bf16.mxu0 0
    %826 = vmatpush1.bf16.xpose.msra.mxu0 0
    %827 = vmatprep.subr.bf16.mxu0 0
    %828 = vmatpush1.bf16.xpose.msra.mxu0 0
    %829 = vmatprep.subr.bf16.mxu0 0
    %830 = vmatpush1.bf16.xpose.msra.mxu0 0
    %831 = vmatprep.subr.bf16.mxu0 0
    %832 = vmatpush1.bf16.xpose.msra.mxu0 0
    %833 = vmatprep.subr.bf16.mxu0 0
    %834 = vmatpush1.bf16.xpose.msra.mxu0 0
    %835 = vmatprep.subr.bf16.mxu0 0
    %836 = vmatpush1.bf16.xpose.msra.mxu0 0
    %837 = vmatprep.subr.bf16.mxu0 0
    %838 = vmatpush1.bf16.xpose.msra.mxu0 0
    %839 = vmatprep.mubr.bf16.mxu0 0
    %840 = vmatmul.mubr.bf16.gmra.mrb[0].mxu0 %v802
    %v841 = vpop.f32.mrb[0].mxu0
    %v842 = vadd.f32 0.0, %v841
    %v843 = vpop.f32.mrb[0].mxu0
    %v844 = vpop.f32.mrb[0].mxu0
    %v845 = vpop.f32.mrb[0].mxu0
    %846 = vdwg.mxu0
    %847 = vrot.lane.b32.xlu0 %v131, 116
    %v848 = vpop.permute.xlu0 %847
    %849 = vrot.lane.b32.xlu0 %v133, 84
    %v850 = vpop.permute.xlu0 %849
    %v852 = vsel %vm137, %v848, 0
    %v855 = vsel %vm137, %v850, 0
    %857 = vmatprep.subr.bf16.mxu0 0
    %858 = vmatpush1.bf16.xpose.msra.mxu0 %v855
    %859 = vmatprep.subr.bf16.mxu0 0
    %860 = vmatpush1.bf16.xpose.msra.mxu0 0
    %861 = vmatprep.subr.bf16.mxu0 0
    %862 = vmatpush1.bf16.xpose.msra.mxu0 0
    %863 = vmatprep.subr.bf16.mxu0 0
    %864 = vmatpush1.bf16.xpose.msra.mxu0 0
    %865 = vmatprep.subr.bf16.mxu0 0
    %866 = vmatpush1.bf16.xpose.msra.mxu0 0
    %867 = vmatprep.subr.bf16.mxu0 0
    %868 = vmatpush1.bf16.xpose.msra.mxu0 0
    %869 = vmatprep.subr.bf16.mxu0 0
    %870 = vmatpush1.bf16.xpose.msra.mxu0 0
    %871 = vmatprep.subr.bf16.mxu0 0
    %872 = vmatpush1.bf16.xpose.msra.mxu0 0
    %873 = vmatprep.subr.bf16.mxu0 0
    %874 = vmatpush1.bf16.xpose.msra.mxu0 0
    %875 = vmatprep.subr.bf16.mxu0 0
    %876 = vmatpush1.bf16.xpose.msra.mxu0 0
    %877 = vmatprep.subr.bf16.mxu0 0
    %878 = vmatpush1.bf16.xpose.msra.mxu0 0
    %879 = vmatprep.subr.bf16.mxu0 0
    %880 = vmatpush1.bf16.xpose.msra.mxu0 0
    %881 = vmatprep.subr.bf16.mxu0 0
    %882 = vmatpush1.bf16.xpose.msra.mxu0 0
    %883 = vmatprep.subr.bf16.mxu0 0
    %884 = vmatpush1.bf16.xpose.msra.mxu0 0
    %885 = vmatprep.subr.bf16.mxu0 0
    %886 = vmatpush1.bf16.xpose.msra.mxu0 0
    %887 = vmatprep.subr.bf16.mxu0 0
    %888 = vmatpush1.bf16.xpose.msra.mxu0 0
    %889 = vmatprep.mubr.bf16.mxu0 0
    %890 = vmatmul.mubr.bf16.gmra.mrb[0].mxu0 %v852
    %v891 = vpop.f32.mrb[0].mxu0
    %v892 = vadd.f32 0.0, %v891
    %v893 = vpop.f32.mrb[0].mxu0
    %v894 = vpop.f32.mrb[0].mxu0
    %v895 = vpop.f32.mrb[0].mxu0
    %896 = vdwg.mxu0
    %v897 = vsel %vm233, %v842, -inf
    %898 = vmax.xlane.f32.xlu0 %v897
    %v899 = vpop.xlane.xlu0 %898
    %v900 = vsel %vm233, %v892, -inf
    %901 = vmax.xlane.f32.xlu0 %v900
    %v902 = vpop.xlane.xlu0 %901
    %v903 = vsub.f32 %v842, %v899
    %v904 = vsub.f32 %v892, %v902
    %v905 = vmul.f32 %v903, 1.442695
    %v906 = vpow.pop %v905
    %v907 = vmul.f32 %v904, 1.442695
    %v908 = vpow.pop %v907
    %v909 = vsel %vm233, %v906, 0.0
    %910 = vadd.xlane.f32.xlu0 %v909
    %v911 = vpop.xlane.xlu0 %910
    %v912 = vsel %vm233, %v908, 0.0
    %913 = vadd.xlane.f32.xlu0 %v912
    %v914 = vpop.xlane.xlu0 %913
    %v915 = vrcp.pop %v911
    %v916 = vrcp.pop %v914
    %v917 = vmul.f32 %v906, %v915
    %v918 = vmul.f32 %v908, %v916
    %v919 = vpack.c.bf16 %v917, %v917
    %v920 = vpack.c.bf16 %v918, %v918
    %921 = vrot.lane.b32.xlu0 %v132, 52
    %v922 = vpop.permute.xlu0 %921
    %v924 = vsel %vm233, %v919, 0
    %v927 = vsel %vm263, %v922, 0
    %929 = vmatprep.subr.bf16.mxu0 0
    %930 = vmatpush1.bf16.msra.mxu0 %v927
    %931 = vmatprep.subr.bf16.mxu0 0
    %932 = vmatpush1.bf16.msra.mxu0 0
    %933 = vmatprep.subr.bf16.mxu0 0
    %934 = vmatpush1.bf16.msra.mxu0 0
    %935 = vmatprep.subr.bf16.mxu0 0
    %936 = vmatpush1.bf16.msra.mxu0 0
    %937 = vmatprep.subr.bf16.mxu0 0
    %938 = vmatpush1.bf16.msra.mxu0 0
    %939 = vmatprep.subr.bf16.mxu0 0
    %940 = vmatpush1.bf16.msra.mxu0 0
    %941 = vmatprep.subr.bf16.mxu0 0
    %942 = vmatpush1.bf16.msra.mxu0 0
    %943 = vmatprep.subr.bf16.mxu0 0
    %944 = vmatpush1.bf16.msra.mxu0 0
    %945 = vmatprep.subr.bf16.mxu0 0
    %946 = vmatpush1.bf16.msra.mxu0 0
    %947 = vmatprep.subr.bf16.mxu0 0
    %948 = vmatpush1.bf16.msra.mxu0 0
    %949 = vmatprep.subr.bf16.mxu0 0
    %950 = vmatpush1.bf16.msra.mxu0 0
    %951 = vmatprep.subr.bf16.mxu0 0
    %952 = vmatpush1.bf16.msra.mxu0 0
    %953 = vmatprep.subr.bf16.mxu0 0
    %954 = vmatpush1.bf16.msra.mxu0 0
    %955 = vmatprep.subr.bf16.mxu0 0
    %956 = vmatpush1.bf16.msra.mxu0 0
    %957 = vmatprep.subr.bf16.mxu0 0
    %958 = vmatpush1.bf16.msra.mxu0 0
    %959 = vmatprep.subr.bf16.mxu0 0
    %960 = vmatpush1.bf16.msra.mxu0 0
    %961 = vmatprep.mubr.bf16.mxu0 0
    %962 = vmatmul.mubr.bf16.gmra.mrb[0].mxu0 %v924
    %v963 = vpop.f32.mrb[0].mxu0
    %v964 = vadd.f32 0.0, %v963
    %v965 = vpop.f32.mrb[0].mxu0
    %v966 = vpop.f32.mrb[0].mxu0
    %v967 = vpop.f32.mrb[0].mxu0
    %968 = vdwg.mxu0
    %969 = vrot.lane.b32.xlu0 %v133, 52
    %v970 = vpop.permute.xlu0 %969
    %v972 = vsel %vm233, %v920, 0
    %v975 = vsel %vm263, %v970, 0
    %977 = vmatprep.subr.bf16.mxu0 0
    %978 = vmatpush1.bf16.msra.mxu0 %v975
    %979 = vmatprep.subr.bf16.mxu0 0
    %980 = vmatpush1.bf16.msra.mxu0 0
    %981 = vmatprep.subr.bf16.mxu0 0
    %982 = vmatpush1.bf16.msra.mxu0 0
    %983 = vmatprep.subr.bf16.mxu0 0
    %984 = vmatpush1.bf16.msra.mxu0 0
    %985 = vmatprep.subr.bf16.mxu0 0
    %986 = vmatpush1.bf16.msra.mxu0 0
    %987 = vmatprep.subr.bf16.mxu0 0
    %988 = vmatpush1.bf16.msra.mxu0 0
    %989 = vmatprep.subr.bf16.mxu0 0
    %990 = vmatpush1.bf16.msra.mxu0 0
    %991 = vmatprep.subr.bf16.mxu0 0
    %992 = vmatpush1.bf16.msra.mxu0 0
    %993 = vmatprep.subr.bf16.mxu0 0
    %994 = vmatpush1.bf16.msra.mxu0 0
    %995 = vmatprep.subr.bf16.mxu0 0
    %996 = vmatpush1.bf16.msra.mxu0 0
    %997 = vmatprep.subr.bf16.mxu0 0
    %998 = vmatpush1.bf16.msra.mxu0 0
    %999 = vmatprep.subr.bf16.mxu0 0
    %1000 = vmatpush1.bf16.msra.mxu0 0
    %1001 = vmatprep.subr.bf16.mxu0 0
    %1002 = vmatpush1.bf16.msra.mxu0 0
    %1003 = vmatprep.subr.bf16.mxu0 0
    %1004 = vmatpush1.bf16.msra.mxu0 0
    %1005 = vmatprep.subr.bf16.mxu0 0
    %1006 = vmatpush1.bf16.msra.mxu0 0
    %1007 = vmatprep.subr.bf16.mxu0 0
    %1008 = vmatpush1.bf16.msra.mxu0 0
    %1009 = vmatprep.mubr.bf16.mxu0 0
    %1010 = vmatmul.mubr.bf16.gmra.mrb[0].mxu0 %v972
    %v1011 = vpop.f32.mrb[0].mxu0
    %v1012 = vadd.f32 0.0, %v1011
    %v1013 = vpop.f32.mrb[0].mxu0
    %v1014 = vpop.f32.mrb[0].mxu0
    %v1015 = vpop.f32.mrb[0].mxu0
    %1016 = vdwg.mxu0
    %1017 = vrot.lane.b32.xlu0 %v130, 112
    %v1018 = vpop.permute.xlu0 %1017
    %1019 = vrot.lane.b32.xlu0 %v132, 80
    %v1020 = vpop.permute.xlu0 %1019
    %v1022 = vsel %vm137, %v1018, 0
    %v1025 = vsel %vm137, %v1020, 0
    %1027 = vmatprep.subr.bf16.mxu0 0
    %1028 = vmatpush1.bf16.xpose.msra.mxu0 %v1025
    %1029 = vmatprep.subr.bf16.mxu0 0
    %1030 = vmatpush1.bf16.xpose.msra.mxu0 0
    %1031 = vmatprep.subr.bf16.mxu0 0
    %1032 = vmatpush1.bf16.xpose.msra.mxu0 0
    %1033 = vmatprep.subr.bf16.mxu0 0
    %1034 = vmatpush1.bf16.xpose.msra.mxu0 0
    %1035 = vmatprep.subr.bf16.mxu0 0
    %1036 = vmatpush1.bf16.xpose.msra.mxu0 0
    %1037 = vmatprep.subr.bf16.mxu0 0
    %1038 = vmatpush1.bf16.xpose.msra.mxu0 0
    %1039 = vmatprep.subr.bf16.mxu0 0
    %1040 = vmatpush1.bf16.xpose.msra.mxu0 0
    %1041 = vmatprep.subr.bf16.mxu0 0
    %1042 = vmatpush1.bf16.xpose.msra.mxu0 0
    %1043 = vmatprep.subr.bf16.mxu0 0
    %1044 = vmatpush1.bf16.xpose.msra.mxu0 0
    %1045 = vmatprep.subr.bf16.mxu0 0
    %1046 = vmatpush1.bf16.xpose.msra.mxu0 0
    %1047 = vmatprep.subr.bf16.mxu0 0
    %1048 = vmatpush1.bf16.xpose.msra.mxu0 0
    %1049 = vmatprep.subr.bf16.mxu0 0
    %1050 = vmatpush1.bf16.xpose.msra.mxu0 0
    %1051 = vmatprep.subr.bf16.mxu0 0
    %1052 = vmatpush1.bf16.xpose.msra.mxu0 0
    %1053 = vmatprep.subr.bf16.mxu0 0
    %1054 = vmatpush1.bf16.xpose.msra.mxu0 0
    %1055 = vmatprep.subr.bf16.mxu0 0
    %1056 = vmatpush1.bf16.xpose.msra.mxu0 0
    %1057 = vmatprep.subr.bf16.mxu0 0
    %1058 = vmatpush1.bf16.xpose.msra.mxu0 0
    %1059 = vmatprep.mubr.bf16.mxu0 0
    %1060 = vmatmul.mubr.bf16.gmra.mrb[0].mxu0 %v1022
    %v1061 = vpop.f32.mrb[0].mxu0
    %v1062 = vadd.f32 0.0, %v1061
    %v1063 = vpop.f32.mrb[0].mxu0
    %v1064 = vpop.f32.mrb[0].mxu0
    %v1065 = vpop.f32.mrb[0].mxu0
    %1066 = vdwg.mxu0
    %1067 = vrot.lane.b32.xlu0 %v131, 112
    %v1068 = vpop.permute.xlu0 %1067
    %1069 = vrot.lane.b32.xlu0 %v133, 80
    %v1070 = vpop.permute.xlu0 %1069
    %v1072 = vsel %vm137, %v1068, 0
    %v1075 = vsel %vm137, %v1070, 0
    %1077 = vmatprep.subr.bf16.mxu0 0
    %1078 = vmatpush1.bf16.xpose.msra.mxu0 %v1075
    %1079 = vmatprep.subr.bf16.mxu0 0
    %1080 = vmatpush1.bf16.xpose.msra.mxu0 0
    %1081 = vmatprep.subr.bf16.mxu0 0
    %1082 = vmatpush1.bf16.xpose.msra.mxu0 0
    %1083 = vmatprep.subr.bf16.mxu0 0
    %1084 = vmatpush1.bf16.xpose.msra.mxu0 0
    %1085 = vmatprep.subr.bf16.mxu0 0
    %1086 = vmatpush1.bf16.xpose.msra.mxu0 0
    %1087 = vmatprep.subr.bf16.mxu0 0
    %1088 = vmatpush1.bf16.xpose.msra.mxu0 0
    %1089 = vmatprep.subr.bf16.mxu0 0
    %1090 = vmatpush1.bf16.xpose.msra.mxu0 0
    %1091 = vmatprep.subr.bf16.mxu0 0
    %1092 = vmatpush1.bf16.xpose.msra.mxu0 0
    %1093 = vmatprep.subr.bf16.mxu0 0
    %1094 = vmatpush1.bf16.xpose.msra.mxu0 0
    %1095 = vmatprep.subr.bf16.mxu0 0
    %1096 = vmatpush1.bf16.xpose.msra.mxu0 0
    %1097 = vmatprep.subr.bf16.mxu0 0
    %1098 = vmatpush1.bf16.xpose.msra.mxu0 0
    %1099 = vmatprep.subr.bf16.mxu0 0
    %1100 = vmatpush1.bf16.xpose.msra.mxu0 0
    %1101 = vmatprep.subr.bf16.mxu0 0
    %1102 = vmatpush1.bf16.xpose.msra.mxu0 0
    %1103 = vmatprep.subr.bf16.mxu0 0
    %1104 = vmatpush1.bf16.xpose.msra.mxu0 0
    %1105 = vmatprep.subr.bf16.mxu0 0
    %1106 = vmatpush1.bf16.xpose.msra.mxu0 0
    %1107 = vmatprep.subr.bf16.mxu0 0
    %1108 = vmatpush1.bf16.xpose.msra.mxu0 0
    %1109 = vmatprep.mubr.bf16.mxu0 0
    %1110 = vmatmul.mubr.bf16.gmra.mrb[0].mxu0 %v1072
    %v1111 = vpop.f32.mrb[0].mxu0
    %v1112 = vadd.f32 0.0, %v1111
    %v1113 = vpop.f32.mrb[0].mxu0
    %v1114 = vpop.f32.mrb[0].mxu0
    %v1115 = vpop.f32.mrb[0].mxu0
    %1116 = vdwg.mxu0
    %v1117 = vsel %vm233, %v1062, -inf
    %1118 = vmax.xlane.f32.xlu0 %v1117
    %v1119 = vpop.xlane.xlu0 %1118
    %v1120 = vsel %vm233, %v1112, -inf
    %1121 = vmax.xlane.f32.xlu0 %v1120
    %v1122 = vpop.xlane.xlu0 %1121
    %v1123 = vsub.f32 %v1062, %v1119
    %v1124 = vsub.f32 %v1112, %v1122
    %v1125 = vmul.f32 %v1123, 1.442695
    %v1126 = vpow.pop %v1125
    %v1127 = vmul.f32 %v1124, 1.442695
    %v1128 = vpow.pop %v1127
    %v1129 = vsel %vm233, %v1126, 0.0
    %1130 = vadd.xlane.f32.xlu0 %v1129
    %v1131 = vpop.xlane.xlu0 %1130
    %v1132 = vsel %vm233, %v1128, 0.0
    %1133 = vadd.xlane.f32.xlu0 %v1132
    %v1134 = vpop.xlane.xlu0 %1133
    %v1135 = vrcp.pop %v1131
    %v1136 = vrcp.pop %v1134
    %v1137 = vmul.f32 %v1126, %v1135
    %v1138 = vmul.f32 %v1128, %v1136
    %v1139 = vpack.c.bf16 %v1137, %v1137
    %v1140 = vpack.c.bf16 %v1138, %v1138
    %1141 = vrot.lane.b32.xlu0 %v132, 48
    %v1142 = vpop.permute.xlu0 %1141
    %v1144 = vsel %vm233, %v1139, 0
    %v1147 = vsel %vm263, %v1142, 0
    %1149 = vmatprep.subr.bf16.mxu0 0
    %1150 = vmatpush1.bf16.msra.mxu0 %v1147
    %1151 = vmatprep.subr.bf16.mxu0 0
    %1152 = vmatpush1.bf16.msra.mxu0 0
    %1153 = vmatprep.subr.bf16.mxu0 0
    %1154 = vmatpush1.bf16.msra.mxu0 0
    %1155 = vmatprep.subr.bf16.mxu0 0
    %1156 = vmatpush1.bf16.msra.mxu0 0
    %1157 = vmatprep.subr.bf16.mxu0 0
    %1158 = vmatpush1.bf16.msra.mxu0 0
    %1159 = vmatprep.subr.bf16.mxu0 0
    %1160 = vmatpush1.bf16.msra.mxu0 0
    %1161 = vmatprep.subr.bf16.mxu0 0
    %1162 = vmatpush1.bf16.msra.mxu0 0
    %1163 = vmatprep.subr.bf16.mxu0 0
    %1164 = vmatpush1.bf16.msra.mxu0 0
    %1165 = vmatprep.subr.bf16.mxu0 0
    %1166 = vmatpush1.bf16.msra.mxu0 0
    %1167 = vmatprep.subr.bf16.mxu0 0
    %1168 = vmatpush1.bf16.msra.mxu0 0
    %1169 = vmatprep.subr.bf16.mxu0 0
    %1170 = vmatpush1.bf16.msra.mxu0 0
    %1171 = vmatprep.subr.bf16.mxu0 0
    %1172 = vmatpush1.bf16.msra.mxu0 0
    %1173 = vmatprep.subr.bf16.mxu0 0
    %1174 = vmatpush1.bf16.msra.mxu0 0
    %1175 = vmatprep.subr.bf16.mxu0 0
    %1176 = vmatpush1.bf16.msra.mxu0 0
    %1177 = vmatprep.subr.bf16.mxu0 0
    %1178 = vmatpush1.bf16.msra.mxu0 0
    %1179 = vmatprep.subr.bf16.mxu0 0
    %1180 = vmatpush1.bf16.msra.mxu0 0
    %1181 = vmatprep.mubr.bf16.mxu0 0
    %1182 = vmatmul.mubr.bf16.gmra.mrb[0].mxu0 %v1144
    %v1183 = vpop.f32.mrb[0].mxu0
    %v1184 = vadd.f32 0.0, %v1183
    %v1185 = vpop.f32.mrb[0].mxu0
    %v1186 = vpop.f32.mrb[0].mxu0
    %v1187 = vpop.f32.mrb[0].mxu0
    %1188 = vdwg.mxu0
    %1189 = vrot.lane.b32.xlu0 %v133, 48
    %v1190 = vpop.permute.xlu0 %1189
    %v1192 = vsel %vm233, %v1140, 0
    %v1195 = vsel %vm263, %v1190, 0
    %1197 = vmatprep.subr.bf16.mxu0 0
    %1198 = vmatpush1.bf16.msra.mxu0 %v1195
    %1199 = vmatprep.subr.bf16.mxu0 0
    %1200 = vmatpush1.bf16.msra.mxu0 0
    %1201 = vmatprep.subr.bf16.mxu0 0
    %1202 = vmatpush1.bf16.msra.mxu0 0
    %1203 = vmatprep.subr.bf16.mxu0 0
    %1204 = vmatpush1.bf16.msra.mxu0 0
    %1205 = vmatprep.subr.bf16.mxu0 0
    %1206 = vmatpush1.bf16.msra.mxu0 0
    %1207 = vmatprep.subr.bf16.mxu0 0
    %1208 = vmatpush1.bf16.msra.mxu0 0
    %1209 = vmatprep.subr.bf16.mxu0 0
    %1210 = vmatpush1.bf16.msra.mxu0 0
    %1211 = vmatprep.subr.bf16.mxu0 0
    %1212 = vmatpush1.bf16.msra.mxu0 0
    %1213 = vmatprep.subr.bf16.mxu0 0
    %1214 = vmatpush1.bf16.msra.mxu0 0
    %1215 = vmatprep.subr.bf16.mxu0 0
    %1216 = vmatpush1.bf16.msra.mxu0 0
    %1217 = vmatprep.subr.bf16.mxu0 0
    %1218 = vmatpush1.bf16.msra.mxu0 0
    %1219 = vmatprep.subr.bf16.mxu0 0
    %1220 = vmatpush1.bf16.msra.mxu0 0
    %1221 = vmatprep.subr.bf16.mxu0 0
    %1222 = vmatpush1.bf16.msra.mxu0 0
    %1223 = vmatprep.subr.bf16.mxu0 0
    %1224 = vmatpush1.bf16.msra.mxu0 0
    %1225 = vmatprep.subr.bf16.mxu0 0
    %1226 = vmatpush1.bf16.msra.mxu0 0
    %1227 = vmatprep.subr.bf16.mxu0 0
    %1228 = vmatpush1.bf16.msra.mxu0 0
    %1229 = vmatprep.mubr.bf16.mxu0 0
    %1230 = vmatmul.mubr.bf16.gmra.mrb[0].mxu0 %v1192
    %v1231 = vpop.f32.mrb[0].mxu0
    %v1232 = vadd.f32 0.0, %v1231
    %v1233 = vpop.f32.mrb[0].mxu0
    %v1234 = vpop.f32.mrb[0].mxu0
    %v1235 = vpop.f32.mrb[0].mxu0
    %1236 = vdwg.mxu0
    %1237 = vrot.lane.b32.xlu0 %v130, 108
    %v1238 = vpop.permute.xlu0 %1237
    %1239 = vrot.lane.b32.xlu0 %v132, 76
    %v1240 = vpop.permute.xlu0 %1239
    %v1242 = vsel %vm137, %v1238, 0
    %v1245 = vsel %vm137, %v1240, 0
    %1247 = vmatprep.subr.bf16.mxu0 0
    %1248 = vmatpush1.bf16.xpose.msra.mxu0 %v1245
    %1249 = vmatprep.subr.bf16.mxu0 0
    %1250 = vmatpush1.bf16.xpose.msra.mxu0 0
    %1251 = vmatprep.subr.bf16.mxu0 0
    %1252 = vmatpush1.bf16.xpose.msra.mxu0 0
    %1253 = vmatprep.subr.bf16.mxu0 0
    %1254 = vmatpush1.bf16.xpose.msra.mxu0 0
    %1255 = vmatprep.subr.bf16.mxu0 0
    %1256 = vmatpush1.bf16.xpose.msra.mxu0 0
    %1257 = vmatprep.subr.bf16.mxu0 0
    %1258 = vmatpush1.bf16.xpose.msra.mxu0 0
    %1259 = vmatprep.subr.bf16.mxu0 0
    %1260 = vmatpush1.bf16.xpose.msra.mxu0 0
    %1261 = vmatprep.subr.bf16.mxu0 0
    %1262 = vmatpush1.bf16.xpose.msra.mxu0 0
    %1263 = vmatprep.subr.bf16.mxu0 0
    %1264 = vmatpush1.bf16.xpose.msra.mxu0 0
    %1265 = vmatprep.subr.bf16.mxu0 0
    %1266 = vmatpush1.bf16.xpose.msra.mxu0 0
    %1267 = vmatprep.subr.bf16.mxu0 0
    %1268 = vmatpush1.bf16.xpose.msra.mxu0 0
    %1269 = vmatprep.subr.bf16.mxu0 0
    %1270 = vmatpush1.bf16.xpose.msra.mxu0 0
    %1271 = vmatprep.subr.bf16.mxu0 0
    %1272 = vmatpush1.bf16.xpose.msra.mxu0 0
    %1273 = vmatprep.subr.bf16.mxu0 0
    %1274 = vmatpush1.bf16.xpose.msra.mxu0 0
    %1275 = vmatprep.subr.bf16.mxu0 0
    %1276 = vmatpush1.bf16.xpose.msra.mxu0 0
    %1277 = vmatprep.subr.bf16.mxu0 0
    %1278 = vmatpush1.bf16.xpose.msra.mxu0 0
    %1279 = vmatprep.mubr.bf16.mxu0 0
    %1280 = vmatmul.mubr.bf16.gmra.mrb[0].mxu0 %v1242
    %v1281 = vpop.f32.mrb[0].mxu0
    %v1282 = vadd.f32 0.0, %v1281
    %v1283 = vpop.f32.mrb[0].mxu0
    %v1284 = vpop.f32.mrb[0].mxu0
    %v1285 = vpop.f32.mrb[0].mxu0
    %1286 = vdwg.mxu0
    %1287 = vrot.lane.b32.xlu0 %v131, 108
    %v1288 = vpop.permute.xlu0 %1287
    %1289 = vrot.lane.b32.xlu0 %v133, 76
    %v1290 = vpop.permute.xlu0 %1289
    %v1292 = vsel %vm137, %v1288, 0
    %v1295 = vsel %vm137, %v1290, 0
    %1297 = vmatprep.subr.bf16.mxu0 0
    %1298 = vmatpush1.bf16.xpose.msra.mxu0 %v1295
    %1299 = vmatprep.subr.bf16.mxu0 0
    %1300 = vmatpush1.bf16.xpose.msra.mxu0 0
    %1301 = vmatprep.subr.bf16.mxu0 0
    %1302 = vmatpush1.bf16.xpose.msra.mxu0 0
    %1303 = vmatprep.subr.bf16.mxu0 0
    %1304 = vmatpush1.bf16.xpose.msra.mxu0 0
    %1305 = vmatprep.subr.bf16.mxu0 0
    %1306 = vmatpush1.bf16.xpose.msra.mxu0 0
    %1307 = vmatprep.subr.bf16.mxu0 0
    %1308 = vmatpush1.bf16.xpose.msra.mxu0 0
    %1309 = vmatprep.subr.bf16.mxu0 0
    %1310 = vmatpush1.bf16.xpose.msra.mxu0 0
    %1311 = vmatprep.subr.bf16.mxu0 0
    %1312 = vmatpush1.bf16.xpose.msra.mxu0 0
    %1313 = vmatprep.subr.bf16.mxu0 0
    %1314 = vmatpush1.bf16.xpose.msra.mxu0 0
    %1315 = vmatprep.subr.bf16.mxu0 0
    %1316 = vmatpush1.bf16.xpose.msra.mxu0 0
    %1317 = vmatprep.subr.bf16.mxu0 0
    %1318 = vmatpush1.bf16.xpose.msra.mxu0 0
    %1319 = vmatprep.subr.bf16.mxu0 0
    %1320 = vmatpush1.bf16.xpose.msra.mxu0 0
    %1321 = vmatprep.subr.bf16.mxu0 0
    %1322 = vmatpush1.bf16.xpose.msra.mxu0 0
    %1323 = vmatprep.subr.bf16.mxu0 0
    %1324 = vmatpush1.bf16.xpose.msra.mxu0 0
    %1325 = vmatprep.subr.bf16.mxu0 0
    %1326 = vmatpush1.bf16.xpose.msra.mxu0 0
    %1327 = vmatprep.subr.bf16.mxu0 0
    %1328 = vmatpush1.bf16.xpose.msra.mxu0 0
    %1329 = vmatprep.mubr.bf16.mxu0 0
    %1330 = vmatmul.mubr.bf16.gmra.mrb[0].mxu0 %v1292
    %v1331 = vpop.f32.mrb[0].mxu0
    %v1332 = vadd.f32 0.0, %v1331
    %v1333 = vpop.f32.mrb[0].mxu0
    %v1334 = vpop.f32.mrb[0].mxu0
    %v1335 = vpop.f32.mrb[0].mxu0
    %1336 = vdwg.mxu0
    %v1337 = vsel %vm233, %v1282, -inf
    %1338 = vmax.xlane.f32.xlu0 %v1337
    %v1339 = vpop.xlane.xlu0 %1338
    %v1340 = vsel %vm233, %v1332, -inf
    %1341 = vmax.xlane.f32.xlu0 %v1340
    %v1342 = vpop.xlane.xlu0 %1341
    %v1343 = vsub.f32 %v1282, %v1339
    %v1344 = vsub.f32 %v1332, %v1342
    %v1345 = vmul.f32 %v1343, 1.442695
    %v1346 = vpow.pop %v1345
    %v1347 = vmul.f32 %v1344, 1.442695
    %v1348 = vpow.pop %v1347
    %v1349 = vsel %vm233, %v1346, 0.0
    %1350 = vadd.xlane.f32.xlu0 %v1349
    %v1351 = vpop.xlane.xlu0 %1350
    %v1352 = vsel %vm233, %v1348, 0.0
    %1353 = vadd.xlane.f32.xlu0 %v1352
    %v1354 = vpop.xlane.xlu0 %1353
    %v1355 = vrcp.pop %v1351
    %v1356 = vrcp.pop %v1354
    %v1357 = vmul.f32 %v1346, %v1355
    %v1358 = vmul.f32 %v1348, %v1356
    %v1359 = vpack.c.bf16 %v1357, %v1357
    %v1360 = vpack.c.bf16 %v1358, %v1358
    %1361 = vrot.lane.b32.xlu0 %v132, 44
    %v1362 = vpop.permute.xlu0 %1361
    %v1364 = vsel %vm233, %v1359, 0
    %v1367 = vsel %vm263, %v1362, 0
    %1369 = vmatprep.subr.bf16.mxu0 0
    %1370 = vmatpush1.bf16.msra.mxu0 %v1367
    %1371 = vmatprep.subr.bf16.mxu0 0
    %1372 = vmatpush1.bf16.msra.mxu0 0
    %1373 = vmatprep.subr.bf16.mxu0 0
    %1374 = vmatpush1.bf16.msra.mxu0 0
    %1375 = vmatprep.subr.bf16.mxu0 0
    %1376 = vmatpush1.bf16.msra.mxu0 0
    %1377 = vmatprep.subr.bf16.mxu0 0
    %1378 = vmatpush1.bf16.msra.mxu0 0
    %1379 = vmatprep.subr.bf16.mxu0 0
    %1380 = vmatpush1.bf16.msra.mxu0 0
    %1381 = vmatprep.subr.bf16.mxu0 0
    %1382 = vmatpush1.bf16.msra.mxu0 0
    %1383 = vmatprep.subr.bf16.mxu0 0
    %1384 = vmatpush1.bf16.msra.mxu0 0
    %1385 = vmatprep.subr.bf16.mxu0 0
    %1386 = vmatpush1.bf16.msra.mxu0 0
    %1387 = vmatprep.subr.bf16.mxu0 0
    %1388 = vmatpush1.bf16.msra.mxu0 0
    %1389 = vmatprep.subr.bf16.mxu0 0
    %1390 = vmatpush1.bf16.msra.mxu0 0
    %1391 = vmatprep.subr.bf16.mxu0 0
    %1392 = vmatpush1.bf16.msra.mxu0 0
    %1393 = vmatprep.subr.bf16.mxu0 0
    %1394 = vmatpush1.bf16.msra.mxu0 0
    %1395 = vmatprep.subr.bf16.mxu0 0
    %1396 = vmatpush1.bf16.msra.mxu0 0
    %1397 = vmatprep.subr.bf16.mxu0 0
    %1398 = vmatpush1.bf16.msra.mxu0 0
    %1399 = vmatprep.subr.bf16.mxu0 0
    %1400 = vmatpush1.bf16.msra.mxu0 0
    %1401 = vmatprep.mubr.bf16.mxu0 0
    %1402 = vmatmul.mubr.bf16.gmra.mrb[0].mxu0 %v1364
    %v1403 = vpop.f32.mrb[0].mxu0
    %v1404 = vadd.f32 0.0, %v1403
    %v1405 = vpop.f32.mrb[0].mxu0
    %v1406 = vpop.f32.mrb[0].mxu0
    %v1407 = vpop.f32.mrb[0].mxu0
    %1408 = vdwg.mxu0
    %1409 = vrot.lane.b32.xlu0 %v133, 44
    %v1410 = vpop.permute.xlu0 %1409
    %v1412 = vsel %vm233, %v1360, 0
    %v1415 = vsel %vm263, %v1410, 0
    %1417 = vmatprep.subr.bf16.mxu0 0
    %1418 = vmatpush1.bf16.msra.mxu0 %v1415
    %1419 = vmatprep.subr.bf16.mxu0 0
    %1420 = vmatpush1.bf16.msra.mxu0 0
    %1421 = vmatprep.subr.bf16.mxu0 0
    %1422 = vmatpush1.bf16.msra.mxu0 0
    %1423 = vmatprep.subr.bf16.mxu0 0
    %1424 = vmatpush1.bf16.msra.mxu0 0
    %1425 = vmatprep.subr.bf16.mxu0 0
    %1426 = vmatpush1.bf16.msra.mxu0 0
    %1427 = vmatprep.subr.bf16.mxu0 0
    %1428 = vmatpush1.bf16.msra.mxu0 0
    %1429 = vmatprep.subr.bf16.mxu0 0
    %1430 = vmatpush1.bf16.msra.mxu0 0
    %1431 = vmatprep.subr.bf16.mxu0 0
    %1432 = vmatpush1.bf16.msra.mxu0 0
    %1433 = vmatprep.subr.bf16.mxu0 0
    %1434 = vmatpush1.bf16.msra.mxu0 0
    %1435 = vmatprep.subr.bf16.mxu0 0
    %1436 = vmatpush1.bf16.msra.mxu0 0
    %1437 = vmatprep.subr.bf16.mxu0 0
    %1438 = vmatpush1.bf16.msra.mxu0 0
    %1439 = vmatprep.subr.bf16.mxu0 0
    %1440 = vmatpush1.bf16.msra.mxu0 0
    %1441 = vmatprep.subr.bf16.mxu0 0
    %1442 = vmatpush1.bf16.msra.mxu0 0
    %1443 = vmatprep.subr.bf16.mxu0 0
    %1444 = vmatpush1.bf16.msra.mxu0 0
    %1445 = vmatprep.subr.bf16.mxu0 0
    %1446 = vmatpush1.bf16.msra.mxu0 0
    %1447 = vmatprep.subr.bf16.mxu0 0
    %1448 = vmatpush1.bf16.msra.mxu0 0
    %1449 = vmatprep.mubr.bf16.mxu0 0
    %1450 = vmatmul.mubr.bf16.gmra.mrb[0].mxu0 %v1412
    %v1451 = vpop.f32.mrb[0].mxu0
    %v1452 = vadd.f32 0.0, %v1451
    %v1453 = vpop.f32.mrb[0].mxu0
    %v1454 = vpop.f32.mrb[0].mxu0
    %v1455 = vpop.f32.mrb[0].mxu0
    %1456 = vdwg.mxu0
    %1457 = vrot.lane.b32.xlu0 %v130, 104
    %v1458 = vpop.permute.xlu0 %1457
    %1459 = vrot.lane.b32.xlu0 %v132, 72
    %v1460 = vpop.permute.xlu0 %1459
    %v1462 = vsel %vm137, %v1458, 0
    %v1465 = vsel %vm137, %v1460, 0
    %1467 = vmatprep.subr.bf16.mxu0 0
    %1468 = vmatpush1.bf16.xpose.msra.mxu0 %v1465
    %1469 = vmatprep.subr.bf16.mxu0 0
    %1470 = vmatpush1.bf16.xpose.msra.mxu0 0
    %1471 = vmatprep.subr.bf16.mxu0 0
    %1472 = vmatpush1.bf16.xpose.msra.mxu0 0
    %1473 = vmatprep.subr.bf16.mxu0 0
    %1474 = vmatpush1.bf16.xpose.msra.mxu0 0
    %1475 = vmatprep.subr.bf16.mxu0 0
    %1476 = vmatpush1.bf16.xpose.msra.mxu0 0
    %1477 = vmatprep.subr.bf16.mxu0 0
    %1478 = vmatpush1.bf16.xpose.msra.mxu0 0
    %1479 = vmatprep.subr.bf16.mxu0 0
    %1480 = vmatpush1.bf16.xpose.msra.mxu0 0
    %1481 = vmatprep.subr.bf16.mxu0 0
    %1482 = vmatpush1.bf16.xpose.msra.mxu0 0
    %1483 = vmatprep.subr.bf16.mxu0 0
    %1484 = vmatpush1.bf16.xpose.msra.mxu0 0
    %1485 = vmatprep.subr.bf16.mxu0 0
    %1486 = vmatpush1.bf16.xpose.msra.mxu0 0
    %1487 = vmatprep.subr.bf16.mxu0 0
    %1488 = vmatpush1.bf16.xpose.msra.mxu0 0
    %1489 = vmatprep.subr.bf16.mxu0 0
    %1490 = vmatpush1.bf16.xpose.msra.mxu0 0
    %1491 = vmatprep.subr.bf16.mxu0 0
    %1492 = vmatpush1.bf16.xpose.msra.mxu0 0
    %1493 = vmatprep.subr.bf16.mxu0 0
    %1494 = vmatpush1.bf16.xpose.msra.mxu0 0
    %1495 = vmatprep.subr.bf16.mxu0 0
    %1496 = vmatpush1.bf16.xpose.msra.mxu0 0
    %1497 = vmatprep.subr.bf16.mxu0 0
    %1498 = vmatpush1.bf16.xpose.msra.mxu0 0
    %1499 = vmatprep.mubr.bf16.mxu0 0
    %1500 = vmatmul.mubr.bf16.gmra.mrb[0].mxu0 %v1462
    %v1501 = vpop.f32.mrb[0].mxu0
    %v1502 = vadd.f32 0.0, %v1501
    %v1503 = vpop.f32.mrb[0].mxu0
    %v1504 = vpop.f32.mrb[0].mxu0
    %v1505 = vpop.f32.mrb[0].mxu0
    %1506 = vdwg.mxu0
    %1507 = vrot.lane.b32.xlu0 %v131, 104
    %v1508 = vpop.permute.xlu0 %1507
    %1509 = vrot.lane.b32.xlu0 %v133, 72
    %v1510 = vpop.permute.xlu0 %1509
    %v1512 = vsel %vm137, %v1508, 0
    %v1515 = vsel %vm137, %v1510, 0
    %1517 = vmatprep.subr.bf16.mxu0 0
    %1518 = vmatpush1.bf16.xpose.msra.mxu0 %v1515
    %1519 = vmatprep.subr.bf16.mxu0 0
    %1520 = vmatpush1.bf16.xpose.msra.mxu0 0
    %1521 = vmatprep.subr.bf16.mxu0 0
    %1522 = vmatpush1.bf16.xpose.msra.mxu0 0
    %1523 = vmatprep.subr.bf16.mxu0 0
    %1524 = vmatpush1.bf16.xpose.msra.mxu0 0
    %1525 = vmatprep.subr.bf16.mxu0 0
    %1526 = vmatpush1.bf16.xpose.msra.mxu0 0
    %1527 = vmatprep.subr.bf16.mxu0 0
    %1528 = vmatpush1.bf16.xpose.msra.mxu0 0
    %1529 = vmatprep.subr.bf16.mxu0 0
    %1530 = vmatpush1.bf16.xpose.msra.mxu0 0
    %1531 = vmatprep.subr.bf16.mxu0 0
    %1532 = vmatpush1.bf16.xpose.msra.mxu0 0
    %1533 = vmatprep.subr.bf16.mxu0 0
    %1534 = vmatpush1.bf16.xpose.msra.mxu0 0
    %1535 = vmatprep.subr.bf16.mxu0 0
    %1536 = vmatpush1.bf16.xpose.msra.mxu0 0
    %1537 = vmatprep.subr.bf16.mxu0 0
    %1538 = vmatpush1.bf16.xpose.msra.mxu0 0
    %1539 = vmatprep.subr.bf16.mxu0 0
    %1540 = vmatpush1.bf16.xpose.msra.mxu0 0
    %1541 = vmatprep.subr.bf16.mxu0 0
    %1542 = vmatpush1.bf16.xpose.msra.mxu0 0
    %1543 = vmatprep.subr.bf16.mxu0 0
    %1544 = vmatpush1.bf16.xpose.msra.mxu0 0
    %1545 = vmatprep.subr.bf16.mxu0 0
    %1546 = vmatpush1.bf16.xpose.msra.mxu0 0
    %1547 = vmatprep.subr.bf16.mxu0 0
    %1548 = vmatpush1.bf16.xpose.msra.mxu0 0
    %1549 = vmatprep.mubr.bf16.mxu0 0
    %1550 = vmatmul.mubr.bf16.gmra.mrb[0].mxu0 %v1512
    %v1551 = vpop.f32.mrb[0].mxu0
    %v1552 = vadd.f32 0.0, %v1551
    %v1553 = vpop.f32.mrb[0].mxu0
    %v1554 = vpop.f32.mrb[0].mxu0
    %v1555 = vpop.f32.mrb[0].mxu0
    %1556 = vdwg.mxu0
    %v1557 = vsel %vm233, %v1502, -inf
    %1558 = vmax.xlane.f32.xlu0 %v1557
    %v1559 = vpop.xlane.xlu0 %1558
    %v1560 = vsel %vm233, %v1552, -inf
    %1561 = vmax.xlane.f32.xlu0 %v1560
    %v1562 = vpop.xlane.xlu0 %1561
    %v1563 = vsub.f32 %v1502, %v1559
    %v1564 = vsub.f32 %v1552, %v1562
    %v1565 = vmul.f32 %v1563, 1.442695
    %v1566 = vpow.pop %v1565
    %v1567 = vmul.f32 %v1564, 1.442695
    %v1568 = vpow.pop %v1567
    %v1569 = vsel %vm233, %v1566, 0.0
    %1570 = vadd.xlane.f32.xlu0 %v1569
    %v1571 = vpop.xlane.xlu0 %1570
    %v1572 = vsel %vm233, %v1568, 0.0
    %1573 = vadd.xlane.f32.xlu0 %v1572
    %v1574 = vpop.xlane.xlu0 %1573
    %v1575 = vrcp.pop %v1571
    %v1576 = vrcp.pop %v1574
    %v1577 = vmul.f32 %v1566, %v1575
    %v1578 = vmul.f32 %v1568, %v1576
    %v1579 = vpack.c.bf16 %v1577, %v1577
    %v1580 = vpack.c.bf16 %v1578, %v1578
    %1581 = vrot.lane.b32.xlu0 %v132, 40
    %v1582 = vpop.permute.xlu0 %1581
    %v1584 = vsel %vm233, %v1579, 0
    %v1587 = vsel %vm263, %v1582, 0
    %1589 = vmatprep.subr.bf16.mxu0 0
    %1590 = vmatpush1.bf16.msra.mxu0 %v1587
    %1591 = vmatprep.subr.bf16.mxu0 0
    %1592 = vmatpush1.bf16.msra.mxu0 0
    %1593 = vmatprep.subr.bf16.mxu0 0
    %1594 = vmatpush1.bf16.msra.mxu0 0
    %1595 = vmatprep.subr.bf16.mxu0 0
    %1596 = vmatpush1.bf16.msra.mxu0 0
    %1597 = vmatprep.subr.bf16.mxu0 0
    %1598 = vmatpush1.bf16.msra.mxu0 0
    %1599 = vmatprep.subr.bf16.mxu0 0
    %1600 = vmatpush1.bf16.msra.mxu0 0
    %1601 = vmatprep.subr.bf16.mxu0 0
    %1602 = vmatpush1.bf16.msra.mxu0 0
    %1603 = vmatprep.subr.bf16.mxu0 0
    %1604 = vmatpush1.bf16.msra.mxu0 0
    %1605 = vmatprep.subr.bf16.mxu0 0
    %1606 = vmatpush1.bf16.msra.mxu0 0
    %1607 = vmatprep.subr.bf16.mxu0 0
    %1608 = vmatpush1.bf16.msra.mxu0 0
    %1609 = vmatprep.subr.bf16.mxu0 0
    %1610 = vmatpush1.bf16.msra.mxu0 0
    %1611 = vmatprep.subr.bf16.mxu0 0
    %1612 = vmatpush1.bf16.msra.mxu0 0
    %1613 = vmatprep.subr.bf16.mxu0 0
    %1614 = vmatpush1.bf16.msra.mxu0 0
    %1615 = vmatprep.subr.bf16.mxu0 0
    %1616 = vmatpush1.bf16.msra.mxu0 0
    %1617 = vmatprep.subr.bf16.mxu0 0
    %1618 = vmatpush1.bf16.msra.mxu0 0
    %1619 = vmatprep.subr.bf16.mxu0 0
    %1620 = vmatpush1.bf16.msra.mxu0 0
    %1621 = vmatprep.mubr.bf16.mxu0 0
    %1622 = vmatmul.mubr.bf16.gmra.mrb[0].mxu0 %v1584
    %v1623 = vpop.f32.mrb[0].mxu0
    %v1624 = vadd.f32 0.0, %v1623
    %v1625 = vpop.f32.mrb[0].mxu0
    %v1626 = vpop.f32.mrb[0].mxu0
    %v1627 = vpop.f32.mrb[0].mxu0
    %1628 = vdwg.mxu0
    %1629 = vrot.lane.b32.xlu0 %v133, 40
    %v1630 = vpop.permute.xlu0 %1629
    %v1632 = vsel %vm233, %v1580, 0
    %v1635 = vsel %vm263, %v1630, 0
    %1637 = vmatprep.subr.bf16.mxu0 0
    %1638 = vmatpush1.bf16.msra.mxu0 %v1635
    %1639 = vmatprep.subr.bf16.mxu0 0
    %1640 = vmatpush1.bf16.msra.mxu0 0
    %1641 = vmatprep.subr.bf16.mxu0 0
    %1642 = vmatpush1.bf16.msra.mxu0 0
    %1643 = vmatprep.subr.bf16.mxu0 0
    %1644 = vmatpush1.bf16.msra.mxu0 0
    %1645 = vmatprep.subr.bf16.mxu0 0
    %1646 = vmatpush1.bf16.msra.mxu0 0
    %1647 = vmatprep.subr.bf16.mxu0 0
    %1648 = vmatpush1.bf16.msra.mxu0 0
    %1649 = vmatprep.subr.bf16.mxu0 0
    %1650 = vmatpush1.bf16.msra.mxu0 0
    %1651 = vmatprep.subr.bf16.mxu0 0
    %1652 = vmatpush1.bf16.msra.mxu0 0
    %1653 = vmatprep.subr.bf16.mxu0 0
    %1654 = vmatpush1.bf16.msra.mxu0 0
    %1655 = vmatprep.subr.bf16.mxu0 0
    %1656 = vmatpush1.bf16.msra.mxu0 0
    %1657 = vmatprep.subr.bf16.mxu0 0
    %1658 = vmatpush1.bf16.msra.mxu0 0
    %1659 = vmatprep.subr.bf16.mxu0 0
    %1660 = vmatpush1.bf16.msra.mxu0 0
    %1661 = vmatprep.subr.bf16.mxu0 0
    %1662 = vmatpush1.bf16.msra.mxu0 0
    %1663 = vmatprep.subr.bf16.mxu0 0
    %1664 = vmatpush1.bf16.msra.mxu0 0
    %1665 = vmatprep.subr.bf16.mxu0 0
    %1666 = vmatpush1.bf16.msra.mxu0 0
    %1667 = vmatprep.subr.bf16.mxu0 0
    %1668 = vmatpush1.bf16.msra.mxu0 0
    %1669 = vmatprep.mubr.bf16.mxu0 0
    %1670 = vmatmul.mubr.bf16.gmra.mrb[0].mxu0 %v1632
    %v1671 = vpop.f32.mrb[0].mxu0
    %v1672 = vadd.f32 0.0, %v1671
    %v1673 = vpop.f32.mrb[0].mxu0
    %v1674 = vpop.f32.mrb[0].mxu0
    %v1675 = vpop.f32.mrb[0].mxu0
    %1676 = vdwg.mxu0
    %1677 = vrot.lane.b32.xlu0 %v130, 100
    %v1678 = vpop.permute.xlu0 %1677
    %1679 = vrot.lane.b32.xlu0 %v132, 68
    %v1680 = vpop.permute.xlu0 %1679
    %v1682 = vsel %vm137, %v1678, 0
    %v1685 = vsel %vm137, %v1680, 0
    %1687 = vmatprep.subr.bf16.mxu0 0
    %1688 = vmatpush1.bf16.xpose.msra.mxu0 %v1685
    %1689 = vmatprep.subr.bf16.mxu0 0
    %1690 = vmatpush1.bf16.xpose.msra.mxu0 0
    %1691 = vmatprep.subr.bf16.mxu0 0
    %1692 = vmatpush1.bf16.xpose.msra.mxu0 0
    %1693 = vmatprep.subr.bf16.mxu0 0
    %1694 = vmatpush1.bf16.xpose.msra.mxu0 0
    %1695 = vmatprep.subr.bf16.mxu0 0
    %1696 = vmatpush1.bf16.xpose.msra.mxu0 0
    %1697 = vmatprep.subr.bf16.mxu0 0
    %1698 = vmatpush1.bf16.xpose.msra.mxu0 0
    %1699 = vmatprep.subr.bf16.mxu0 0
    %1700 = vmatpush1.bf16.xpose.msra.mxu0 0
    %1701 = vmatprep.subr.bf16.mxu0 0
    %1702 = vmatpush1.bf16.xpose.msra.mxu0 0
    %1703 = vmatprep.subr.bf16.mxu0 0
    %1704 = vmatpush1.bf16.xpose.msra.mxu0 0
    %1705 = vmatprep.subr.bf16.mxu0 0
    %1706 = vmatpush1.bf16.xpose.msra.mxu0 0
    %1707 = vmatprep.subr.bf16.mxu0 0
    %1708 = vmatpush1.bf16.xpose.msra.mxu0 0
    %1709 = vmatprep.subr.bf16.mxu0 0
    %1710 = vmatpush1.bf16.xpose.msra.mxu0 0
    %1711 = vmatprep.subr.bf16.mxu0 0
    %1712 = vmatpush1.bf16.xpose.msra.mxu0 0
    %1713 = vmatprep.subr.bf16.mxu0 0
    %1714 = vmatpush1.bf16.xpose.msra.mxu0 0
    %1715 = vmatprep.subr.bf16.mxu0 0
    %1716 = vmatpush1.bf16.xpose.msra.mxu0 0
    %1717 = vmatprep.subr.bf16.mxu0 0
    %1718 = vmatpush1.bf16.xpose.msra.mxu0 0
    %1719 = vmatprep.mubr.bf16.mxu0 0
    %1720 = vmatmul.mubr.bf16.gmra.mrb[0].mxu0 %v1682
    %v1721 = vpop.f32.mrb[0].mxu0
    %v1722 = vadd.f32 0.0, %v1721
    %v1723 = vpop.f32.mrb[0].mxu0
    %v1724 = vpop.f32.mrb[0].mxu0
    %v1725 = vpop.f32.mrb[0].mxu0
    %1726 = vdwg.mxu0
    %1727 = vrot.lane.b32.xlu0 %v131, 100
    %v1728 = vpop.permute.xlu0 %1727
    %1729 = vrot.lane.b32.xlu0 %v133, 68
    %v1730 = vpop.permute.xlu0 %1729
    %v1732 = vsel %vm137, %v1728, 0
    %v1735 = vsel %vm137, %v1730, 0
    %1737 = vmatprep.subr.bf16.mxu0 0
    %1738 = vmatpush1.bf16.xpose.msra.mxu0 %v1735
    %1739 = vmatprep.subr.bf16.mxu0 0
    %1740 = vmatpush1.bf16.xpose.msra.mxu0 0
    %1741 = vmatprep.subr.bf16.mxu0 0
    %1742 = vmatpush1.bf16.xpose.msra.mxu0 0
    %1743 = vmatprep.subr.bf16.mxu0 0
    %1744 = vmatpush1.bf16.xpose.msra.mxu0 0
    %1745 = vmatprep.subr.bf16.mxu0 0
    %1746 = vmatpush1.bf16.xpose.msra.mxu0 0
    %1747 = vmatprep.subr.bf16.mxu0 0
    %1748 = vmatpush1.bf16.xpose.msra.mxu0 0
    %1749 = vmatprep.subr.bf16.mxu0 0
    %1750 = vmatpush1.bf16.xpose.msra.mxu0 0
    %1751 = vmatprep.subr.bf16.mxu0 0
    %1752 = vmatpush1.bf16.xpose.msra.mxu0 0
    %1753 = vmatprep.subr.bf16.mxu0 0
    %1754 = vmatpush1.bf16.xpose.msra.mxu0 0
    %1755 = vmatprep.subr.bf16.mxu0 0
    %1756 = vmatpush1.bf16.xpose.msra.mxu0 0
    %1757 = vmatprep.subr.bf16.mxu0 0
    %1758 = vmatpush1.bf16.xpose.msra.mxu0 0
    %1759 = vmatprep.subr.bf16.mxu0 0
    %1760 = vmatpush1.bf16.xpose.msra.mxu0 0
    %1761 = vmatprep.subr.bf16.mxu0 0
    %1762 = vmatpush1.bf16.xpose.msra.mxu0 0
    %1763 = vmatprep.subr.bf16.mxu0 0
    %1764 = vmatpush1.bf16.xpose.msra.mxu0 0
    %1765 = vmatprep.subr.bf16.mxu0 0
    %1766 = vmatpush1.bf16.xpose.msra.mxu0 0
    %1767 = vmatprep.subr.bf16.mxu0 0
    %1768 = vmatpush1.bf16.xpose.msra.mxu0 0
    %1769 = vmatprep.mubr.bf16.mxu0 0
    %1770 = vmatmul.mubr.bf16.gmra.mrb[0].mxu0 %v1732
    %v1771 = vpop.f32.mrb[0].mxu0
    %v1772 = vadd.f32 0.0, %v1771
    %v1773 = vpop.f32.mrb[0].mxu0
    %v1774 = vpop.f32.mrb[0].mxu0
    %v1775 = vpop.f32.mrb[0].mxu0
    %1776 = vdwg.mxu0
    %v1777 = vsel %vm233, %v1722, -inf
    %1778 = vmax.xlane.f32.xlu0 %v1777
    %v1779 = vpop.xlane.xlu0 %1778
    %v1780 = vsel %vm233, %v1772, -inf
    %1781 = vmax.xlane.f32.xlu0 %v1780
    %v1782 = vpop.xlane.xlu0 %1781
    %v1783 = vsub.f32 %v1722, %v1779
    %v1784 = vsub.f32 %v1772, %v1782
    %v1785 = vmul.f32 %v1783, 1.442695
    %v1786 = vpow.pop %v1785
    %v1787 = vmul.f32 %v1784, 1.442695
    %v1788 = vpow.pop %v1787
    %v1789 = vsel %vm233, %v1786, 0.0
    %1790 = vadd.xlane.f32.xlu0 %v1789
    %v1791 = vpop.xlane.xlu0 %1790
    %v1792 = vsel %vm233, %v1788, 0.0
    %1793 = vadd.xlane.f32.xlu0 %v1792
    %v1794 = vpop.xlane.xlu0 %1793
    %v1795 = vrcp.pop %v1791
    %v1796 = vrcp.pop %v1794
    %v1797 = vmul.f32 %v1786, %v1795
    %v1798 = vmul.f32 %v1788, %v1796
    %v1799 = vpack.c.bf16 %v1797, %v1797
    %v1800 = vpack.c.bf16 %v1798, %v1798
    %1801 = vrot.lane.b32.xlu0 %v132, 36
    %v1802 = vpop.permute.xlu0 %1801
    %v1804 = vsel %vm233, %v1799, 0
    %v1807 = vsel %vm263, %v1802, 0
    %1809 = vmatprep.subr.bf16.mxu0 0
    %1810 = vmatpush1.bf16.msra.mxu0 %v1807
    %1811 = vmatprep.subr.bf16.mxu0 0
    %1812 = vmatpush1.bf16.msra.mxu0 0
    %1813 = vmatprep.subr.bf16.mxu0 0
    %1814 = vmatpush1.bf16.msra.mxu0 0
    %1815 = vmatprep.subr.bf16.mxu0 0
    %1816 = vmatpush1.bf16.msra.mxu0 0
    %1817 = vmatprep.subr.bf16.mxu0 0
    %1818 = vmatpush1.bf16.msra.mxu0 0
    %1819 = vmatprep.subr.bf16.mxu0 0
    %1820 = vmatpush1.bf16.msra.mxu0 0
    %1821 = vmatprep.subr.bf16.mxu0 0
    %1822 = vmatpush1.bf16.msra.mxu0 0
    %1823 = vmatprep.subr.bf16.mxu0 0
    %1824 = vmatpush1.bf16.msra.mxu0 0
    %1825 = vmatprep.subr.bf16.mxu0 0
    %1826 = vmatpush1.bf16.msra.mxu0 0
    %1827 = vmatprep.subr.bf16.mxu0 0
    %1828 = vmatpush1.bf16.msra.mxu0 0
    %1829 = vmatprep.subr.bf16.mxu0 0
    %1830 = vmatpush1.bf16.msra.mxu0 0
    %1831 = vmatprep.subr.bf16.mxu0 0
    %1832 = vmatpush1.bf16.msra.mxu0 0
    %1833 = vmatprep.subr.bf16.mxu0 0
    %1834 = vmatpush1.bf16.msra.mxu0 0
    %1835 = vmatprep.subr.bf16.mxu0 0
    %1836 = vmatpush1.bf16.msra.mxu0 0
    %1837 = vmatprep.subr.bf16.mxu0 0
    %1838 = vmatpush1.bf16.msra.mxu0 0
    %1839 = vmatprep.subr.bf16.mxu0 0
    %1840 = vmatpush1.bf16.msra.mxu0 0
    %1841 = vmatprep.mubr.bf16.mxu0 0
    %1842 = vmatmul.mubr.bf16.gmra.mrb[0].mxu0 %v1804
    %v1843 = vpop.f32.mrb[0].mxu0
    %v1844 = vadd.f32 0.0, %v1843
    %v1845 = vpop.f32.mrb[0].mxu0
    %v1846 = vpop.f32.mrb[0].mxu0
    %v1847 = vpop.f32.mrb[0].mxu0
    %1848 = vdwg.mxu0
    %1849 = vrot.lane.b32.xlu0 %v133, 36
    %v1850 = vpop.permute.xlu0 %1849
    %v1852 = vsel %vm233, %v1800, 0
    %v1855 = vsel %vm263, %v1850, 0
    %1857 = vmatprep.subr.bf16.mxu0 0
    %1858 = vmatpush1.bf16.msra.mxu0 %v1855
    %1859 = vmatprep.subr.bf16.mxu0 0
    %1860 = vmatpush1.bf16.msra.mxu0 0
    %1861 = vmatprep.subr.bf16.mxu0 0
    %1862 = vmatpush1.bf16.msra.mxu0 0
    %1863 = vmatprep.subr.bf16.mxu0 0
    %1864 = vmatpush1.bf16.msra.mxu0 0
    %1865 = vmatprep.subr.bf16.mxu0 0
    %1866 = vmatpush1.bf16.msra.mxu0 0
    %1867 = vmatprep.subr.bf16.mxu0 0
    %1868 = vmatpush1.bf16.msra.mxu0 0
    %1869 = vmatprep.subr.bf16.mxu0 0
    %1870 = vmatpush1.bf16.msra.mxu0 0
    %1871 = vmatprep.subr.bf16.mxu0 0
    %1872 = vmatpush1.bf16.msra.mxu0 0
    %1873 = vmatprep.subr.bf16.mxu0 0
    %1874 = vmatpush1.bf16.msra.mxu0 0
    %1875 = vmatprep.subr.bf16.mxu0 0
    %1876 = vmatpush1.bf16.msra.mxu0 0
    %1877 = vmatprep.subr.bf16.mxu0 0
    %1878 = vmatpush1.bf16.msra.mxu0 0
    %1879 = vmatprep.subr.bf16.mxu0 0
    %1880 = vmatpush1.bf16.msra.mxu0 0
    %1881 = vmatprep.subr.bf16.mxu0 0
    %1882 = vmatpush1.bf16.msra.mxu0 0
    %1883 = vmatprep.subr.bf16.mxu0 0
    %1884 = vmatpush1.bf16.msra.mxu0 0
    %1885 = vmatprep.subr.bf16.mxu0 0
    %1886 = vmatpush1.bf16.msra.mxu0 0
    %1887 = vmatprep.subr.bf16.mxu0 0
    %1888 = vmatpush1.bf16.msra.mxu0 0
    %1889 = vmatprep.mubr.bf16.mxu0 0
    %1890 = vmatmul.mubr.bf16.gmra.mrb[0].mxu0 %v1852
    %v1891 = vpop.f32.mrb[0].mxu0
    %v1892 = vadd.f32 0.0, %v1891
    %v1893 = vpop.f32.mrb[0].mxu0
    %v1894 = vpop.f32.mrb[0].mxu0
    %v1895 = vpop.f32.mrb[0].mxu0
    %1896 = vdwg.mxu0
    %1899 = vrot.lane.b32.xlu0 %v524, 4
    %v1900 = vpop.permute.xlu0 %1899
    %1901 = vrot.lane.b32.xlu0 %v572, 4
    %v1902 = vpop.permute.xlu0 %1901
    %1907 = vrot.lane.b32.xlu0 %v744, 8
    %v1908 = vpop.permute.xlu0 %1907
    %1909 = vrot.lane.b32.xlu0 %v792, 8
    %v1910 = vpop.permute.xlu0 %1909
    %1915 = vrot.lane.b32.xlu0 %v964, 12
    %v1916 = vpop.permute.xlu0 %1915
    %1917 = vrot.lane.b32.xlu0 %v1012, 12
    %v1918 = vpop.permute.xlu0 %1917
    %1923 = vrot.lane.b32.xlu0 %v1184, 16
    %v1924 = vpop.permute.xlu0 %1923
    %1925 = vrot.lane.b32.xlu0 %v1232, 16
    %v1926 = vpop.permute.xlu0 %1925
    %1931 = vrot.lane.b32.xlu0 %v1404, 20
    %v1932 = vpop.permute.xlu0 %1931
    %1933 = vrot.lane.b32.xlu0 %v1452, 20
    %v1934 = vpop.permute.xlu0 %1933
    %1939 = vrot.lane.b32.xlu0 %v1624, 24
    %v1940 = vpop.permute.xlu0 %1939
    %1941 = vrot.lane.b32.xlu0 %v1672, 24
    %v1942 = vpop.permute.xlu0 %1941
    %1947 = vrot.lane.b32.xlu0 %v1844, 28
    %v1948 = vpop.permute.xlu0 %1947
    %1949 = vrot.lane.b32.xlu0 %v1892, 28
    %v1950 = vpop.permute.xlu0 %1949
    %v1953 = vsel %vm137, %v302, %v1900
    %v1954 = vsel %vm137, %v350, %v1902
    %v1955 = vsel %vm233, %v1953, %v1908
    %v1956 = vsel %vm233, %v1954, %v1910
    %vm1957 = vcmask 97280
    %v1958 = vsel %vm1957, %v1955, %v1916
    %v1959 = vsel %vm1957, %v1956, %v1918
    %vm1960 = vcmask 130048
    %v1961 = vsel %vm1960, %v1958, %v1924
    %v1962 = vsel %vm1960, %v1959, %v1926
    %vm1963 = vcmask 162816
    %v1964 = vsel %vm1963, %v1961, %v1932
    %v1965 = vsel %vm1963, %v1962, %v1934
    %vm1966 = vcmask 195584
    %v1967 = vsel %vm1966, %v1964, %v1940
    %v1968 = vsel %vm1966, %v1965, %v1942
    %vm1969 = vcmask 228352
    %v1970 = vsel %vm1969, %v1967, %v1948
    %v1971 = vsel %vm1969, %v1968, %v1950
    %v1972 = vpack.c.bf16 %v1971, %v1970
    %v1973 = vld [vmem:[#allocation7] sm:$0xf]
    %v1974 = vld [vmem:[#allocation7 + $0x4] sm:$0xf]
    %v1975 = vld [vmem:[#allocation7 + $0x8] sm:$0xf]
    %v1976 = vld [vmem:[#allocation7 + $0xc] sm:$0xf]
    %v1977 = vld [vmem:[%s3] sm:$0x1]
    %v1979 = vlaneseq
    %v1980 = vshrl.u32 %v1979, 7
    %v1981 = vsub.s32 0, %v1980
    %v1982 = vrot.slane %v1977, %v1981
    %v1988 = vunpack.c.l.b16 %v1973
    %v1989 = vunpack.c.l.b16 %v1974
    %v1990 = vunpack.c.l.b16 %v1975
    %v1991 = vunpack.c.l.b16 %v1976
    %v1992 = vpack.c.b16 %v1989, %v1988
    %v1993 = vpack.c.b16 %v1991, %v1990
    %v1997 = vsel %vm83, %v1972, 0
    %1999 = vmatprep.subr.bf16.mxu0 0
    %2000 = vmatpush1.bf16.msra.mxu0 %v1992
    %2001 = vmatprep.subr.bf16.mxu0 0
    %2002 = vmatpush1.bf16.msra.mxu0 %v1993
    %2003 = vmatprep.subr.bf16.mxu0 0
    %2004 = vmatpush1.bf16.msra.mxu0 0
    %2005 = vmatprep.subr.bf16.mxu0 0
    %2006 = vmatpush1.bf16.msra.mxu0 0
    %2007 = vmatprep.subr.bf16.mxu0 0
    %2008 = vmatpush1.bf16.msra.mxu0 0
    %2009 = vmatprep.subr.bf16.mxu0 0
    %2010 = vmatpush1.bf16.msra.mxu0 0
    %2011 = vmatprep.subr.bf16.mxu0 0
    %2012 = vmatpush1.bf16.msra.mxu0 0
    %2013 = vmatprep.subr.bf16.mxu0 0
    %2014 = vmatpush1.bf16.msra.mxu0 0
    %2015 = vmatprep.subr.bf16.mxu0 0
    %2016 = vmatpush1.bf16.msra.mxu0 0
    %2017 = vmatprep.subr.bf16.mxu0 0
    %2018 = vmatpush1.bf16.msra.mxu0 0
    %2019 = vmatprep.subr.bf16.mxu0 0
    %2020 = vmatpush1.bf16.msra.mxu0 0
    %2021 = vmatprep.subr.bf16.mxu0 0
    %2022 = vmatpush1.bf16.msra.mxu0 0
    %2023 = vmatprep.subr.bf16.mxu0 0
    %2024 = vmatpush1.bf16.msra.mxu0 0
    %2025 = vmatprep.subr.bf16.mxu0 0
    %2026 = vmatpush1.bf16.msra.mxu0 0
    %2027 = vmatprep.subr.bf16.mxu0 0
    %2028 = vmatpush1.bf16.msra.mxu0 0
    %2029 = vmatprep.subr.bf16.mxu0 0
    %2030 = vmatpush1.bf16.msra.mxu0 0
    %2031 = vmatprep.mubr.bf16.mxu0 0
    %2032 = vmatmul.mubr.bf16.gmra.mrb[0].mxu0 %v1997
    %v2033 = vpop.f32.mrb[0].mxu0
    %v2034 = vadd.f32 %v1982, %v2033
    %v2035 = vpop.f32.mrb[0].mxu0
    %v2036 = vpop.f32.mrb[0].mxu0
    %v2037 = vadd.f32 %v1982, %v2036
    %v2038 = vpop.f32.mrb[0].mxu0
    %2039 = vdwg.mxu0
    %2040 = vst.msk [vmem:[#allocation8] sm:$0xff] %vm83, %v2034
    %2041 = vst.msk [vmem:[#allocation8 + $0x8] sm:$0xff] %vm83, %v2037
    // Predicated region
    $region30: #{tpu_custom_call.1} parent=1 // pred_check
      _
    $region31: #{tpu_custom_call.1} parent=1 // pred_check_branch
      %2043 = sbr.rel (0) target = $region33
    $region32: #{tpu_custom_call.1} parent=1 // pred_region
      %s2045 = ssub.s32 256, 256
      %2046 = vsyncadd [#allocation4], %s2045
      %s2047 = sshll.u32 [#allocation8], 4
      %s2048 = int_to_ptr.vmem [resolvable:$true] %s2047
      %2053 = dma.vmem_to_hbm [thread:$0]  %s2048, 256, %s4, [#allocation4], 128, 128, 8
    $region33: #{tpu_custom_call.1} parent=1 // pred_fallthru
      _
    // Predicated region
    $region34: #{tpu_custom_call.1} parent=1 // pred_check
      _
    $region35: #{tpu_custom_call.1} parent=1 // pred_check_branch
      %2055 = sbr.rel (0) target = $region37
    $region36: #{tpu_custom_call.1} parent=1 // pred_region
      %2056 = dma.done [#allocation4], 256
    $region37: #{tpu_custom_call.1} parent=1 // pred_fallthru
      _
    %2057 = vsyncpa [#allocation3], 1
    %2058 = vsyncpa [#allocation6], 1
    %2059 = vsyncpa [#allocation4], 1

</llo_original>
